<compile_context>
chip_gen: v6e
topology: v6e:2x2x1
jax: 0.10.0
libtpu: 0.0.40
codegen_flags: <defaults>
</compile_context>

<pallas_src>
import functools

import jax
import jax.numpy as jnp
from jax.experimental import pallas as pl
from jax.experimental.pallas import tpu as pltpu

BN_EPS = 1e-5
EXPANSION = 4


def _bottleneck_kernel(*refs, H, W, N, Cin, P, stride, has_proj, compute_dtype):
    """Fused Bottleneck forward. Activations live in VMEM for the whole block.

    In-kernel layout: activations are (H, W, N, C), matmuls flatten to (H*W*N, C).
    """
    if has_proj:
        (x_ref, w1_ref, g1_ref, b1_ref, w2_ref, g2_ref, b2_ref,
         w3_ref, g3_ref, b3_ref, ws_ref, gs_ref, bs_ref,
         out_ref, pre_ref) = refs
    else:
        (x_ref, w1_ref, g1_ref, b1_ref, w2_ref, g2_ref, b2_ref,
         w3_ref, g3_ref, b3_ref, out_ref, pre_ref) = refs

    f32 = jnp.float32
    C4 = EXPANSION * P
    Ho = (H - 1) // stride + 1          # conv2 output size (k=3, pad=1, stride)
    Wo = (W - 1) // stride + 1

    def bn(y, g_ref, b_ref):
        # Training-mode BatchNorm2d: stats over all rows (= N*H*W) per channel.
        # gamma * rsqrt(var + eps) folded into a single scale.
        mean = jnp.mean(y, axis=0, keepdims=True)
        c = y - mean
        var = jnp.mean(c * c, axis=0, keepdims=True)
        scale = g_ref[...] * jax.lax.rsqrt(var + BN_EPS)
        return c * scale + b_ref[...]

    def subsample(v, dy, dx, ho, wo):
        # v[dy::stride, dx::stride][:ho, :wo] without strided slices: contiguous
        # slice + reshape + static index, acting on major dims only.
        blk = v[dy:dy + stride * ho, dx:dx + stride * wo]
        if stride > 1:
            _, s1, n, c = blk.shape
            blk = blk.reshape(ho, stride, s1, n, c)[:, 0]
            blk = blk.reshape(ho, wo, stride, n, c)[:, :, 0]
        return blk                      # (ho, wo, N, C)

    x = x_ref[...].astype(f32)          # (H, W, N, Cin)
    xc = x.astype(compute_dtype)

    # ---- conv1: 1x1 (no bias) -> bn1 -> relu --------------------------------
    y1 = jnp.dot(xc.reshape(H * W * N, Cin), w1_ref[...],
                 preferred_element_type=f32)                   # (H*W*N, P)
    a1 = jnp.maximum(bn(y1, g1_ref, b1_ref), 0.0).reshape(H, W, N, P)

    # ---- conv2: 3x3, stride, pad=1 -> bn2 -> relu ---------------------------
    # Zero-pad spatially (top/left by 1; bottom/right so the per-tap contiguous
    # slice of stride*Ho rows / stride*Wo cols always fits).
    Hp = max(H + 2, stride * Ho + 2)
    Wp = max(W + 2, stride * Wo + 2)
    a1 = jnp.concatenate(
        [jnp.zeros((1, W, N, P), f32), a1,
         jnp.zeros((Hp - H - 1, W, N, P), f32)], axis=0)
    a1 = jnp.concatenate(
        [jnp.zeros((Hp, 1, N, P), f32), a1,
         jnp.zeros((Hp, Wp - W - 1, N, P), f32)], axis=1)
    a1 = a1.astype(compute_dtype)                              # (Hp, Wp, N, P)

    w2 = w2_ref[...]                                           # (9, P, P)
    y2 = jnp.zeros((Ho * Wo * N, P), f32)
    for t in range(9):                                         # 9 shifted matmuls
        dy, dx = divmod(t, 3)
        xt = subsample(a1, dy, dx, Ho, Wo).reshape(Ho * Wo * N, P)
        y2 = y2 + jnp.dot(xt, w2[t], preferred_element_type=f32)
    a2 = jnp.maximum(bn(y2, g2_ref, b2_ref), 0.0)              # (Ho*Wo*N, P)

    # ---- conv3: 1x1 (no bias) -> bn3 ----------------------------------------
    y3 = jnp.dot(a2.astype(compute_dtype), w3_ref[...],
                 preferred_element_type=f32)                   # (Ho*Wo*N, 4P)
    y3 = bn(y3, g3_ref, b3_ref)

    # ---- shortcut -----------------------------------------------------------
    if has_proj:
        xs = xc
        if stride * Ho > H:
            xs = jnp.concatenate(
                [xs, jnp.zeros((stride * Ho - H, W, N, Cin), compute_dtype)],
                axis=0)
        if stride * Wo > W:
            xs = jnp.concatenate(
                [xs, jnp.zeros((xs.shape[0], stride * Wo - W, N, Cin),
                               compute_dtype)], axis=1)
        xs = subsample(xs, 0, 0, Ho, Wo).reshape(Ho * Wo * N, Cin)
        sc = jnp.dot(xs, ws_ref[...], preferred_element_type=f32)
        sc = bn(sc, gs_ref, bs_ref)
    else:
        sc = x.reshape(H * W * N, C4)       # identity (Cin == 4P, stride == 1)

    pre = y3 + sc
    out = jnp.maximum(pre, 0.0)
    pre_ref[...] = pre.reshape(Ho, Wo, N, C4).astype(pre_ref.dtype)
    out_ref[...] = out.reshape(Ho, Wo, N, C4).astype(out_ref.dtype)


def _full_spec(shape):
    ndim = len(shape)
    return pl.BlockSpec(shape, lambda i, _nd=ndim: (0,) * _nd)


def bottleneck_forward(x_nchw, params, *, stride=1, is_last=False,
                       compute_dtype=jnp.bfloat16):
    """Bottleneck forward. x_nchw: (N, C, H, W), matching the PyTorch module."""
    N, Cin, H, W = x_nchw.shape
    P = params["w1"].shape[1]
    C4 = EXPANSION * P
    has_proj = "ws" in params
    assert has_proj == (stride != 1 or Cin != C4)
    Ho = (H - 1) // stride + 1
    Wo = (W - 1) // stride + 1

    # Channels-last, batch-in-sublane layout for the kernel: (H, W, N, C).
    x_hwnc = jnp.transpose(x_nchw, (2, 3, 0, 1))

    cd = compute_dtype
    args = [
        x_hwnc,
        params["w1"].astype(cd),
        params["g1"].reshape(1, P), params["b1"].reshape(1, P),
        params["w2"].reshape(9, P, P).astype(cd),
        params["g2"].reshape(1, P), params["b2"].reshape(1, P),
        params["w3"].astype(cd),
        params["g3"].reshape(1, C4), params["b3"].reshape(1, C4),
    ]
    if has_proj:
        args += [params["ws"].astype(cd),
                 params["gs"].reshape(1, C4), params["bs"].reshape(1, C4)]

    kernel = functools.partial(
        _bottleneck_kernel, H=H, W=W, N=N, Cin=Cin, P=P,
        stride=stride, has_proj=has_proj, compute_dtype=cd)

    out_struct = jax.ShapeDtypeStruct((Ho, Wo, N, C4), jnp.float32)
    out_hwnc, pre_hwnc = pl.pallas_call(
        kernel,
        out_shape=(out_struct, out_struct),
        grid=(1,),
        in_specs=[_full_spec(a.shape) for a in args],
        out_specs=(_full_spec(out_struct.shape), _full_spec(out_struct.shape)),
        compiler_params=pltpu.CompilerParams(
            dimension_semantics=("arbitrary",)),
    )(*args)

    out = jnp.transpose(out_hwnc, (2, 3, 0, 1))      # back to NCHW
    if is_last:
        return out, jnp.transpose(pre_hwnc, (2, 3, 0, 1))
    return out


def bottleneck_reference(x_nchw, params, *, stride=1):
    """Pure-JAX (XLA) reference: f32 NHWC convs + training-mode BN."""
    x = jnp.transpose(x_nchw, (0, 2, 3, 1)).astype(jnp.float32)   # NHWC
    Cin, P = params["w1"].shape
    C4 = EXPANSION * P

    def conv(v, w_hwio, s, pad):
        return jax.lax.conv_general_dilated(
            v, w_hwio, window_strides=(s, s), padding=pad,
            dimension_numbers=("NHWC", "HWIO", "NHWC"))

    def bn(v, g, b):
        m = jnp.mean(v, axis=(0, 1, 2), keepdims=True)
        c = v - m
        var = jnp.mean(c * c, axis=(0, 1, 2), keepdims=True)
        return c * jax.lax.rsqrt(var + BN_EPS) * g + b

    y = conv(x, params["w1"].reshape(1, 1, Cin, P), 1, "VALID")
    y = jax.nn.relu(bn(y, params["g1"], params["b1"]))
    y = conv(y, params["w2"], stride, ((1, 1), (1, 1)))
    y = jax.nn.relu(bn(y, params["g2"], params["b2"]))
    y = conv(y, params["w3"].reshape(1, 1, P, C4), 1, "VALID")
    y = bn(y, params["g3"], params["b3"])
    if "ws" in params:
        sc = conv(x, params["ws"].reshape(1, 1, Cin, C4), stride, "VALID")
        sc = bn(sc, params["gs"], params["bs"])
    else:
        sc = x
    pre = y + sc
    out = jax.nn.relu(pre)
    to_nchw = lambda v: jnp.transpose(v, (0, 3, 1, 2))
    return to_nchw(out), to_nchw(pre)


def init_bottleneck_params(key, in_planes, planes, *, stride=1):
    """Weights stored as (C_in, C_out) (= PyTorch (out,in,1,1) transposed) and
    conv2 as (3, 3, C_in, C_out) (= PyTorch (out,in,ky,kx) -> (ky,kx,in,out))."""
    C4 = EXPANSION * planes
    ks = jax.random.split(key, 12)

    def conv_w(k, shape, fan_in):
        bound = 1.0 / jnp.sqrt(jnp.float32(fan_in))
        return jax.random.uniform(k, shape, jnp.float32, -bound, bound)

    def bn_p(kg, kb, c):
        g = jax.random.uniform(kg, (c,), jnp.float32, 0.5, 1.5)
        b = jax.random.uniform(kb, (c,), jnp.float32, -0.2, 0.2)
        return g, b

    p = {}
    p["w1"] = conv_w(ks[0], (in_planes, planes), in_planes)
    p["g1"], p["b1"] = bn_p(ks[1], ks[2], planes)
    p["w2"] = conv_w(ks[3], (3, 3, planes, planes), 9 * planes)
    p["g2"], p["b2"] = bn_p(ks[4], ks[5], planes)
    p["w3"] = conv_w(ks[6], (planes, C4), planes)
    p["g3"], p["b3"] = bn_p(ks[7], ks[8], C4)
    if stride != 1 or in_planes != C4:
        p["ws"] = conv_w(ks[9], (in_planes, C4), in_planes)
        p["gs"], p["bs"] = bn_p(ks[10], ks[11], C4)
    return p


if __name__ == "__main__":
    key = jax.random.PRNGKey(0)
    kx1, kp1, kx2, kp2 = jax.random.split(key, 4)

    # --- Config A: projection shortcut + stride 2 (downsampling block) -------
    N, in_planes, planes, stride = 8, 64, 32, 2      # 4*planes = 128 (lane-dense)
    H = W = 8
    x = jax.random.normal(kx1, (N, in_planes, H, W), jnp.float32)
    params = init_bottleneck_params(kp1, in_planes, planes, stride=stride)

    out, preact = bottleneck_forward(x, params, stride=stride, is_last=True)
    out, preact = jax.block_until_ready((out, preact))
    ref_out, ref_pre = bottleneck_reference(x, params, stride=stride)

    assert out.shape == (N, 4 * planes, H // stride, W // stride), out.shape
    assert preact.shape == out.shape, preact.shape
    assert bool(jnp.all(jnp.isfinite(out))) and bool(jnp.all(jnp.isfinite(preact)))
    # bf16 MXU operands vs f32 XLA reference -> loose tolerance.
    assert bool(jnp.allclose(out, ref_out, rtol=1e-1, atol=1e-1))
    assert bool(jnp.allclose(preact, ref_pre, rtol=1e-1, atol=1e-1))

    # --- Config B: identity shortcut, stride 1, is_last=False ----------------
    in_planes_b = 4 * planes                          # 128 -> identity shortcut
    xb = jax.random.normal(kx2, (N, in_planes_b, H, W), jnp.float32)
    params_b = init_bottleneck_params(kp2, in_planes_b, planes, stride=1)

    out_b = bottleneck_forward(xb, params_b, stride=1, is_last=False)
    out_b = jax.block_until_ready(out_b)
    ref_b, _ = bottleneck_reference(xb, params_b, stride=1)

    assert out_b.shape == (N, 4 * planes, H, W), out_b.shape
    assert bool(jnp.all(jnp.isfinite(out_b)))
    assert bool(jnp.allclose(out_b, ref_b, rtol=1e-1, atol=1e-1))

    print("KERNEL_OK")
</pallas_src>

<mosaic_0001>
module attributes {stable_mosaic.version = 11 : i64} {
  func.func @_bottleneck_kernel(%arg0: i32, %arg1: memref<8x8x8x64xf32, #tpu.memory_space<vmem>>, %arg2: memref<64x32xbf16, #tpu.memory_space<vmem>>, %arg3: memref<1x32xf32, #tpu.memory_space<vmem>>, %arg4: memref<1x32xf32, #tpu.memory_space<vmem>>, %arg5: memref<9x32x32xbf16, #tpu.memory_space<vmem>>, %arg6: memref<1x32xf32, #tpu.memory_space<vmem>>, %arg7: memref<1x32xf32, #tpu.memory_space<vmem>>, %arg8: memref<32x128xbf16, #tpu.memory_space<vmem>>, %arg9: memref<1x128xf32, #tpu.memory_space<vmem>>, %arg10: memref<1x128xf32, #tpu.memory_space<vmem>>, %arg11: memref<64x128xbf16, #tpu.memory_space<vmem>>, %arg12: memref<1x128xf32, #tpu.memory_space<vmem>>, %arg13: memref<1x128xf32, #tpu.memory_space<vmem>>, %arg14: memref<4x4x8x128xf32, #tpu.memory_space<vmem>>, %arg15: memref<4x4x8x128xf32, #tpu.memory_space<vmem>>) attributes {dimension_semantics = [#tpu.dimension_semantics<arbitrary>], iteration_bounds = array<i64: 1>, scalar_prefetch = 0 : i64, scratch_operands = 0 : i64, tpu.core_type = #tpu.core_type<tc>, window_params = [{pipeline_mode = #tpu.pipeline_mode<synchronous>, transform_indices = @transform_0, window_bounds = array<i64: 8, 8, 8, 64>}, {pipeline_mode = #tpu.pipeline_mode<synchronous>, transform_indices = @transform_1, window_bounds = array<i64: 64, 32>}, {pipeline_mode = #tpu.pipeline_mode<synchronous>, transform_indices = @transform_2, window_bounds = array<i64: 1, 32>}, {pipeline_mode = #tpu.pipeline_mode<synchronous>, transform_indices = @transform_3, window_bounds = array<i64: 1, 32>}, {pipeline_mode = #tpu.pipeline_mode<synchronous>, transform_indices = @transform_4, window_bounds = array<i64: 9, 32, 32>}, {pipeline_mode = #tpu.pipeline_mode<synchronous>, transform_indices = @transform_5, window_bounds = array<i64: 1, 32>}, {pipeline_mode = #tpu.pipeline_mode<synchronous>, transform_indices = @transform_6, window_bounds = array<i64: 1, 32>}, {pipeline_mode = #tpu.pipeline_mode<synchronous>, transform_indices = @transform_7, window_bounds = array<i64: 32, 128>}, {pipeline_mode = #tpu.pipeline_mode<synchronous>, transform_indices = @transform_8, window_bounds = array<i64: 1, 128>}, {pipeline_mode = #tpu.pipeline_mode<synchronous>, transform_indices = @transform_9, window_bounds = array<i64: 1, 128>}, {pipeline_mode = #tpu.pipeline_mode<synchronous>, transform_indices = @transform_10, window_bounds = array<i64: 64, 128>}, {pipeline_mode = #tpu.pipeline_mode<synchronous>, transform_indices = @transform_11, window_bounds = array<i64: 1, 128>}, {pipeline_mode = #tpu.pipeline_mode<synchronous>, transform_indices = @transform_12, window_bounds = array<i64: 1, 128>}, {pipeline_mode = #tpu.pipeline_mode<synchronous>, transform_indices = @transform_13, window_bounds = array<i64: 4, 4, 8, 128>}, {pipeline_mode = #tpu.pipeline_mode<synchronous>, transform_indices = @transform_14, window_bounds = array<i64: 4, 4, 8, 128>}]} {
    %c0 = arith.constant 0 : index
    %c0_0 = arith.constant 0 : index
    %c0_1 = arith.constant 0 : index
    %c0_2 = arith.constant 0 : index
    %0 = vector.load %arg1[%c0, %c0_0, %c0_1, %c0_2] : memref<8x8x8x64xf32, #tpu.memory_space<vmem>>, vector<8x8x8x64xf32>
    %1 = arith.truncf %0 : vector<8x8x8x64xf32> to vector<8x8x8x64xbf16>
    %2 = vector.shape_cast %1 : vector<8x8x8x64xbf16> to vector<512x64xbf16>
    %c0_3 = arith.constant 0 : index
    %c0_4 = arith.constant 0 : index
    %3 = vector.load %arg2[%c0_3, %c0_4] : memref<64x32xbf16, #tpu.memory_space<vmem>>, vector<64x32xbf16>
    %cst = arith.constant dense<0.000000e+00> : vector<512x32xf32>
    %4 = tpu.matmul %2, %3, %cst {dimension_numbers = #tpu.dot_dimension_numbers<[1], [0], [0], [1], [0, 0, 1, 1], [], []>} : vector<512x64xbf16>, vector<64x32xbf16>, vector<512x32xf32> -> vector<512x32xf32>
    %cst_5 = arith.constant dense<0.000000e+00> : vector<32xf32>
    %5 = vector.multi_reduction <add>, %4, %cst_5 [0] : vector<512x32xf32> to vector<32xf32>
    %6 = vector.shape_cast %5 : vector<32xf32> to vector<1x32xf32>
    %cst_6 = arith.constant 5.120000e+02 : f32
    %7 = vector.broadcast %cst_6 : f32 to vector<1x32xf32>
    %8 = arith.divf %6, %7 : vector<1x32xf32>
    %9 = vector.broadcast %8 : vector<1x32xf32> to vector<512x32xf32>
    %10 = arith.subf %4, %9 : vector<512x32xf32>
    %11 = arith.mulf %10, %10 : vector<512x32xf32>
    %cst_7 = arith.constant dense<0.000000e+00> : vector<32xf32>
    %12 = vector.multi_reduction <add>, %11, %cst_7 [0] : vector<512x32xf32> to vector<32xf32>
    %13 = vector.shape_cast %12 : vector<32xf32> to vector<1x32xf32>
    %cst_8 = arith.constant 5.120000e+02 : f32
    %14 = vector.broadcast %cst_8 : f32 to vector<1x32xf32>
    %15 = arith.divf %13, %14 : vector<1x32xf32>
    %c0_9 = arith.constant 0 : index
    %c0_10 = arith.constant 0 : index
    %16 = vector.load %arg3[%c0_9, %c0_10] : memref<1x32xf32, #tpu.memory_space<vmem>>, vector<1x32xf32>
    %cst_11 = arith.constant 9.99999974E-6 : f32
    %17 = vector.broadcast %cst_11 : f32 to vector<1x32xf32>
    %18 = arith.addf %15, %17 : vector<1x32xf32>
    %19 = math.rsqrt %18 : vector<1x32xf32>
    %20 = arith.mulf %16, %19 : vector<1x32xf32>
    %21 = vector.broadcast %20 : vector<1x32xf32> to vector<512x32xf32>
    %22 = arith.mulf %10, %21 : vector<512x32xf32>
    %c0_12 = arith.constant 0 : index
    %c0_13 = arith.constant 0 : index
    %23 = vector.load %arg4[%c0_12, %c0_13] : memref<1x32xf32, #tpu.memory_space<vmem>>, vector<1x32xf32>
    %24 = vector.broadcast %23 : vector<1x32xf32> to vector<512x32xf32>
    %25 = arith.addf %22, %24 : vector<512x32xf32>
    %cst_14 = arith.constant 0.000000e+00 : f32
    %26 = vector.broadcast %cst_14 : f32 to vector<512x32xf32>
    %27 = arith.maximumf %25, %26 : vector<512x32xf32>
    %28 = vector.shape_cast %27 : vector<512x32xf32> to vector<8x8x8x32xf32>
    %cst_15 = arith.constant 0.000000e+00 : f32
    %29 = vector.broadcast %cst_15 : f32 to vector<1x8x8x32xf32>
    %cst_16 = arith.constant 0.000000e+00 : f32
    %30 = vector.broadcast %cst_16 : f32 to vector<1x8x8x32xf32>
    %31 = tpu.concatenate %29, %28, %30 in 0 : vector<1x8x8x32xf32>, vector<8x8x8x32xf32>, vector<1x8x8x32xf32> -> vector<10x8x8x32xf32>
    %cst_17 = arith.constant 0.000000e+00 : f32
    %32 = vector.broadcast %cst_17 : f32 to vector<10x1x8x32xf32>
    %cst_18 = arith.constant 0.000000e+00 : f32
    %33 = vector.broadcast %cst_18 : f32 to vector<10x1x8x32xf32>
    %34 = tpu.concatenate %32, %31, %33 in 1 : vector<10x1x8x32xf32>, vector<10x8x8x32xf32>, vector<10x1x8x32xf32> -> vector<10x10x8x32xf32>
    %35 = arith.truncf %34 : vector<10x10x8x32xf32> to vector<10x10x8x32xbf16>
    %c0_19 = arith.constant 0 : index
    %c0_20 = arith.constant 0 : index
    %c0_21 = arith.constant 0 : index
    %36 = vector.load %arg5[%c0_19, %c0_20, %c0_21] : memref<9x32x32xbf16, #tpu.memory_space<vmem>>, vector<9x32x32xbf16>
    %cst_22 = arith.constant 0.000000e+00 : f32
    %37 = vector.broadcast %cst_22 : f32 to vector<128x32xf32>
    %38 = vector.extract_strided_slice %35 {offsets = [0, 0, 0, 0], sizes = [8, 8, 8, 32], strides = [1, 1, 1, 1]} : vector<10x10x8x32xbf16> to vector<8x8x8x32xbf16>
    %39 = vector.shape_cast %38 : vector<8x8x8x32xbf16> to vector<4x2x8x8x32xbf16>
    %40 = vector.extract_strided_slice %39 {offsets = [0, 0, 0, 0, 0], sizes = [4, 1, 8, 8, 32], strides = [1, 1, 1, 1, 1]} : vector<4x2x8x8x32xbf16> to vector<4x1x8x8x32xbf16>
    %41 = vector.shape_cast %40 : vector<4x1x8x8x32xbf16> to vector<4x8x8x32xbf16>
    %42 = vector.shape_cast %41 : vector<4x8x8x32xbf16> to vector<4x4x2x8x32xbf16>
    %43 = vector.extract_strided_slice %42 {offsets = [0, 0, 0, 0, 0], sizes = [4, 4, 1, 8, 32], strides = [1, 1, 1, 1, 1]} : vector<4x4x2x8x32xbf16> to vector<4x4x1x8x32xbf16>
    %44 = vector.shape_cast %43 : vector<4x4x1x8x32xbf16> to vector<4x4x8x32xbf16>
    %45 = vector.shape_cast %44 : vector<4x4x8x32xbf16> to vector<128x32xbf16>
    %46 = vector.extract_strided_slice %36 {offsets = [0, 0, 0], sizes = [1, 32, 32], strides = [1, 1, 1]} : vector<9x32x32xbf16> to vector<1x32x32xbf16>
    %47 = vector.shape_cast %46 : vector<1x32x32xbf16> to vector<32x32xbf16>
    %cst_23 = arith.constant dense<0.000000e+00> : vector<128x32xf32>
    %48 = tpu.matmul %45, %47, %cst_23 {dimension_numbers = #tpu.dot_dimension_numbers<[1], [0], [0], [1], [0, 0, 1, 1], [], []>} : vector<128x32xbf16>, vector<32x32xbf16>, vector<128x32xf32> -> vector<128x32xf32>
    %49 = arith.addf %37, %48 : vector<128x32xf32>
    %50 = vector.extract_strided_slice %35 {offsets = [0, 1, 0, 0], sizes = [8, 8, 8, 32], strides = [1, 1, 1, 1]} : vector<10x10x8x32xbf16> to vector<8x8x8x32xbf16>
    %51 = vector.shape_cast %50 : vector<8x8x8x32xbf16> to vector<4x2x8x8x32xbf16>
    %52 = vector.extract_strided_slice %51 {offsets = [0, 0, 0, 0, 0], sizes = [4, 1, 8, 8, 32], strides = [1, 1, 1, 1, 1]} : vector<4x2x8x8x32xbf16> to vector<4x1x8x8x32xbf16>
    %53 = vector.shape_cast %52 : vector<4x1x8x8x32xbf16> to vector<4x8x8x32xbf16>
    %54 = vector.shape_cast %53 : vector<4x8x8x32xbf16> to vector<4x4x2x8x32xbf16>
    %55 = vector.extract_strided_slice %54 {offsets = [0, 0, 0, 0, 0], sizes = [4, 4, 1, 8, 32], strides = [1, 1, 1, 1, 1]} : vector<4x4x2x8x32xbf16> to vector<4x4x1x8x32xbf16>
    %56 = vector.shape_cast %55 : vector<4x4x1x8x32xbf16> to vector<4x4x8x32xbf16>
    %57 = vector.shape_cast %56 : vector<4x4x8x32xbf16> to vector<128x32xbf16>
    %58 = vector.extract_strided_slice %36 {offsets = [1, 0, 0], sizes = [1, 32, 32], strides = [1, 1, 1]} : vector<9x32x32xbf16> to vector<1x32x32xbf16>
    %59 = vector.shape_cast %58 : vector<1x32x32xbf16> to vector<32x32xbf16>
    %cst_24 = arith.constant dense<0.000000e+00> : vector<128x32xf32>
    %60 = tpu.matmul %57, %59, %cst_24 {dimension_numbers = #tpu.dot_dimension_numbers<[1], [0], [0], [1], [0, 0, 1, 1], [], []>} : vector<128x32xbf16>, vector<32x32xbf16>, vector<128x32xf32> -> vector<128x32xf32>
    %61 = arith.addf %49, %60 : vector<128x32xf32>
    %62 = vector.extract_strided_slice %35 {offsets = [0, 2, 0, 0], sizes = [8, 8, 8, 32], strides = [1, 1, 1, 1]} : vector<10x10x8x32xbf16> to vector<8x8x8x32xbf16>
    %63 = vector.shape_cast %62 : vector<8x8x8x32xbf16> to vector<4x2x8x8x32xbf16>
    %64 = vector.extract_strided_slice %63 {offsets = [0, 0, 0, 0, 0], sizes = [4, 1, 8, 8, 32], strides = [1, 1, 1, 1, 1]} : vector<4x2x8x8x32xbf16> to vector<4x1x8x8x32xbf16>
    %65 = vector.shape_cast %64 : vector<4x1x8x8x32xbf16> to vector<4x8x8x32xbf16>
    %66 = vector.shape_cast %65 : vector<4x8x8x32xbf16> to vector<4x4x2x8x32xbf16>
    %67 = vector.extract_strided_slice %66 {offsets = [0, 0, 0, 0, 0], sizes = [4, 4, 1, 8, 32], strides = [1, 1, 1, 1, 1]} : vector<4x4x2x8x32xbf16> to vector<4x4x1x8x32xbf16>
    %68 = vector.shape_cast %67 : vector<4x4x1x8x32xbf16> to vector<4x4x8x32xbf16>
    %69 = vector.shape_cast %68 : vector<4x4x8x32xbf16> to vector<128x32xbf16>
    %70 = vector.extract_strided_slice %36 {offsets = [2, 0, 0], sizes = [1, 32, 32], strides = [1, 1, 1]} : vector<9x32x32xbf16> to vector<1x32x32xbf16>
    %71 = vector.shape_cast %70 : vector<1x32x32xbf16> to vector<32x32xbf16>
    %cst_25 = arith.constant dense<0.000000e+00> : vector<128x32xf32>
    %72 = tpu.matmul %69, %71, %cst_25 {dimension_numbers = #tpu.dot_dimension_numbers<[1], [0], [0], [1], [0, 0, 1, 1], [], []>} : vector<128x32xbf16>, vector<32x32xbf16>, vector<128x32xf32> -> vector<128x32xf32>
    %73 = arith.addf %61, %72 : vector<128x32xf32>
    %74 = vector.extract_strided_slice %35 {offsets = [1, 0, 0, 0], sizes = [8, 8, 8, 32], strides = [1, 1, 1, 1]} : vector<10x10x8x32xbf16> to vector<8x8x8x32xbf16>
    %75 = vector.shape_cast %74 : vector<8x8x8x32xbf16> to vector<4x2x8x8x32xbf16>
    %76 = vector.extract_strided_slice %75 {offsets = [0, 0, 0, 0, 0], sizes = [4, 1, 8, 8, 32], strides = [1, 1, 1, 1, 1]} : vector<4x2x8x8x32xbf16> to vector<4x1x8x8x32xbf16>
    %77 = vector.shape_cast %76 : vector<4x1x8x8x32xbf16> to vector<4x8x8x32xbf16>
    %78 = vector.shape_cast %77 : vector<4x8x8x32xbf16> to vector<4x4x2x8x32xbf16>
    %79 = vector.extract_strided_slice %78 {offsets = [0, 0, 0, 0, 0], sizes = [4, 4, 1, 8, 32], strides = [1, 1, 1, 1, 1]} : vector<4x4x2x8x32xbf16> to vector<4x4x1x8x32xbf16>
    %80 = vector.shape_cast %79 : vector<4x4x1x8x32xbf16> to vector<4x4x8x32xbf16>
    %81 = vector.shape_cast %80 : vector<4x4x8x32xbf16> to vector<128x32xbf16>
    %82 = vector.extract_strided_slice %36 {offsets = [3, 0, 0], sizes = [1, 32, 32], strides = [1, 1, 1]} : vector<9x32x32xbf16> to vector<1x32x32xbf16>
    %83 = vector.shape_cast %82 : vector<1x32x32xbf16> to vector<32x32xbf16>
    %cst_26 = arith.constant dense<0.000000e+00> : vector<128x32xf32>
    %84 = tpu.matmul %81, %83, %cst_26 {dimension_numbers = #tpu.dot_dimension_numbers<[1], [0], [0], [1], [0, 0, 1, 1], [], []>} : vector<128x32xbf16>, vector<32x32xbf16>, vector<128x32xf32> -> vector<128x32xf32>
    %85 = arith.addf %73, %84 : vector<128x32xf32>
    %86 = vector.extract_strided_slice %35 {offsets = [1, 1, 0, 0], sizes = [8, 8, 8, 32], strides = [1, 1, 1, 1]} : vector<10x10x8x32xbf16> to vector<8x8x8x32xbf16>
    %87 = vector.shape_cast %86 : vector<8x8x8x32xbf16> to vector<4x2x8x8x32xbf16>
    %88 = vector.extract_strided_slice %87 {offsets = [0, 0, 0, 0, 0], sizes = [4, 1, 8, 8, 32], strides = [1, 1, 1, 1, 1]} : vector<4x2x8x8x32xbf16> to vector<4x1x8x8x32xbf16>
    %89 = vector.shape_cast %88 : vector<4x1x8x8x32xbf16> to vector<4x8x8x32xbf16>
    %90 = vector.shape_cast %89 : vector<4x8x8x32xbf16> to vector<4x4x2x8x32xbf16>
    %91 = vector.extract_strided_slice %90 {offsets = [0, 0, 0, 0, 0], sizes = [4, 4, 1, 8, 32], strides = [1, 1, 1, 1, 1]} : vector<4x4x2x8x32xbf16> to vector<4x4x1x8x32xbf16>
    %92 = vector.shape_cast %91 : vector<4x4x1x8x32xbf16> to vector<4x4x8x32xbf16>
    %93 = vector.shape_cast %92 : vector<4x4x8x32xbf16> to vector<128x32xbf16>
    %94 = vector.extract_strided_slice %36 {offsets = [4, 0, 0], sizes = [1, 32, 32], strides = [1, 1, 1]} : vector<9x32x32xbf16> to vector<1x32x32xbf16>
    %95 = vector.shape_cast %94 : vector<1x32x32xbf16> to vector<32x32xbf16>
    %cst_27 = arith.constant dense<0.000000e+00> : vector<128x32xf32>
    %96 = tpu.matmul %93, %95, %cst_27 {dimension_numbers = #tpu.dot_dimension_numbers<[1], [0], [0], [1], [0, 0, 1, 1], [], []>} : vector<128x32xbf16>, vector<32x32xbf16>, vector<128x32xf32> -> vector<128x32xf32>
    %97 = arith.addf %85, %96 : vector<128x32xf32>
    %98 = vector.extract_strided_slice %35 {offsets = [1, 2, 0, 0], sizes = [8, 8, 8, 32], strides = [1, 1, 1, 1]} : vector<10x10x8x32xbf16> to vector<8x8x8x32xbf16>
    %99 = vector.shape_cast %98 : vector<8x8x8x32xbf16> to vector<4x2x8x8x32xbf16>
    %100 = vector.extract_strided_slice %99 {offsets = [0, 0, 0, 0, 0], sizes = [4, 1, 8, 8, 32], strides = [1, 1, 1, 1, 1]} : vector<4x2x8x8x32xbf16> to vector<4x1x8x8x32xbf16>
    %101 = vector.shape_cast %100 : vector<4x1x8x8x32xbf16> to vector<4x8x8x32xbf16>
    %102 = vector.shape_cast %101 : vector<4x8x8x32xbf16> to vector<4x4x2x8x32xbf16>
    %103 = vector.extract_strided_slice %102 {offsets = [0, 0, 0, 0, 0], sizes = [4, 4, 1, 8, 32], strides = [1, 1, 1, 1, 1]} : vector<4x4x2x8x32xbf16> to vector<4x4x1x8x32xbf16>
    %104 = vector.shape_cast %103 : vector<4x4x1x8x32xbf16> to vector<4x4x8x32xbf16>
    %105 = vector.shape_cast %104 : vector<4x4x8x32xbf16> to vector<128x32xbf16>
    %106 = vector.extract_strided_slice %36 {offsets = [5, 0, 0], sizes = [1, 32, 32], strides = [1, 1, 1]} : vector<9x32x32xbf16> to vector<1x32x32xbf16>
    %107 = vector.shape_cast %106 : vector<1x32x32xbf16> to vector<32x32xbf16>
    %cst_28 = arith.constant dense<0.000000e+00> : vector<128x32xf32>
    %108 = tpu.matmul %105, %107, %cst_28 {dimension_numbers = #tpu.dot_dimension_numbers<[1], [0], [0], [1], [0, 0, 1, 1], [], []>} : vector<128x32xbf16>, vector<32x32xbf16>, vector<128x32xf32> -> vector<128x32xf32>
    %109 = arith.addf %97, %108 : vector<128x32xf32>
    %110 = vector.extract_strided_slice %35 {offsets = [2, 0, 0, 0], sizes = [8, 8, 8, 32], strides = [1, 1, 1, 1]} : vector<10x10x8x32xbf16> to vector<8x8x8x32xbf16>
    %111 = vector.shape_cast %110 : vector<8x8x8x32xbf16> to vector<4x2x8x8x32xbf16>
    %112 = vector.extract_strided_slice %111 {offsets = [0, 0, 0, 0, 0], sizes = [4, 1, 8, 8, 32], strides = [1, 1, 1, 1, 1]} : vector<4x2x8x8x32xbf16> to vector<4x1x8x8x32xbf16>
    %113 = vector.shape_cast %112 : vector<4x1x8x8x32xbf16> to vector<4x8x8x32xbf16>
    %114 = vector.shape_cast %113 : vector<4x8x8x32xbf16> to vector<4x4x2x8x32xbf16>
    %115 = vector.extract_strided_slice %114 {offsets = [0, 0, 0, 0, 0], sizes = [4, 4, 1, 8, 32], strides = [1, 1, 1, 1, 1]} : vector<4x4x2x8x32xbf16> to vector<4x4x1x8x32xbf16>
    %116 = vector.shape_cast %115 : vector<4x4x1x8x32xbf16> to vector<4x4x8x32xbf16>
    %117 = vector.shape_cast %116 : vector<4x4x8x32xbf16> to vector<128x32xbf16>
    %118 = vector.extract_strided_slice %36 {offsets = [6, 0, 0], sizes = [1, 32, 32], strides = [1, 1, 1]} : vector<9x32x32xbf16> to vector<1x32x32xbf16>
    %119 = vector.shape_cast %118 : vector<1x32x32xbf16> to vector<32x32xbf16>
    %cst_29 = arith.constant dense<0.000000e+00> : vector<128x32xf32>
    %120 = tpu.matmul %117, %119, %cst_29 {dimension_numbers = #tpu.dot_dimension_numbers<[1], [0], [0], [1], [0, 0, 1, 1], [], []>} : vector<128x32xbf16>, vector<32x32xbf16>, vector<128x32xf32> -> vector<128x32xf32>
    %121 = arith.addf %109, %120 : vector<128x32xf32>
    %122 = vector.extract_strided_slice %35 {offsets = [2, 1, 0, 0], sizes = [8, 8, 8, 32], strides = [1, 1, 1, 1]} : vector<10x10x8x32xbf16> to vector<8x8x8x32xbf16>
    %123 = vector.shape_cast %122 : vector<8x8x8x32xbf16> to vector<4x2x8x8x32xbf16>
    %124 = vector.extract_strided_slice %123 {offsets = [0, 0, 0, 0, 0], sizes = [4, 1, 8, 8, 32], strides = [1, 1, 1, 1, 1]} : vector<4x2x8x8x32xbf16> to vector<4x1x8x8x32xbf16>
    %125 = vector.shape_cast %124 : vector<4x1x8x8x32xbf16> to vector<4x8x8x32xbf16>
    %126 = vector.shape_cast %125 : vector<4x8x8x32xbf16> to vector<4x4x2x8x32xbf16>
    %127 = vector.extract_strided_slice %126 {offsets = [0, 0, 0, 0, 0], sizes = [4, 4, 1, 8, 32], strides = [1, 1, 1, 1, 1]} : vector<4x4x2x8x32xbf16> to vector<4x4x1x8x32xbf16>
    %128 = vector.shape_cast %127 : vector<4x4x1x8x32xbf16> to vector<4x4x8x32xbf16>
    %129 = vector.shape_cast %128 : vector<4x4x8x32xbf16> to vector<128x32xbf16>
    %130 = vector.extract_strided_slice %36 {offsets = [7, 0, 0], sizes = [1, 32, 32], strides = [1, 1, 1]} : vector<9x32x32xbf16> to vector<1x32x32xbf16>
    %131 = vector.shape_cast %130 : vector<1x32x32xbf16> to vector<32x32xbf16>
    %cst_30 = arith.constant dense<0.000000e+00> : vector<128x32xf32>
    %132 = tpu.matmul %129, %131, %cst_30 {dimension_numbers = #tpu.dot_dimension_numbers<[1], [0], [0], [1], [0, 0, 1, 1], [], []>} : vector<128x32xbf16>, vector<32x32xbf16>, vector<128x32xf32> -> vector<128x32xf32>
    %133 = arith.addf %121, %132 : vector<128x32xf32>
    %134 = vector.extract_strided_slice %35 {offsets = [2, 2, 0, 0], sizes = [8, 8, 8, 32], strides = [1, 1, 1, 1]} : vector<10x10x8x32xbf16> to vector<8x8x8x32xbf16>
    %135 = vector.shape_cast %134 : vector<8x8x8x32xbf16> to vector<4x2x8x8x32xbf16>
    %136 = vector.extract_strided_slice %135 {offsets = [0, 0, 0, 0, 0], sizes = [4, 1, 8, 8, 32], strides = [1, 1, 1, 1, 1]} : vector<4x2x8x8x32xbf16> to vector<4x1x8x8x32xbf16>
    %137 = vector.shape_cast %136 : vector<4x1x8x8x32xbf16> to vector<4x8x8x32xbf16>
    %138 = vector.shape_cast %137 : vector<4x8x8x32xbf16> to vector<4x4x2x8x32xbf16>
    %139 = vector.extract_strided_slice %138 {offsets = [0, 0, 0, 0, 0], sizes = [4, 4, 1, 8, 32], strides = [1, 1, 1, 1, 1]} : vector<4x4x2x8x32xbf16> to vector<4x4x1x8x32xbf16>
    %140 = vector.shape_cast %139 : vector<4x4x1x8x32xbf16> to vector<4x4x8x32xbf16>
    %141 = vector.shape_cast %140 : vector<4x4x8x32xbf16> to vector<128x32xbf16>
    %142 = vector.extract_strided_slice %36 {offsets = [8, 0, 0], sizes = [1, 32, 32], strides = [1, 1, 1]} : vector<9x32x32xbf16> to vector<1x32x32xbf16>
    %143 = vector.shape_cast %142 : vector<1x32x32xbf16> to vector<32x32xbf16>
    %cst_31 = arith.constant dense<0.000000e+00> : vector<128x32xf32>
    %144 = tpu.matmul %141, %143, %cst_31 {dimension_numbers = #tpu.dot_dimension_numbers<[1], [0], [0], [1], [0, 0, 1, 1], [], []>} : vector<128x32xbf16>, vector<32x32xbf16>, vector<128x32xf32> -> vector<128x32xf32>
    %145 = arith.addf %133, %144 : vector<128x32xf32>
    %cst_32 = arith.constant dense<0.000000e+00> : vector<32xf32>
    %146 = vector.multi_reduction <add>, %145, %cst_32 [0] : vector<128x32xf32> to vector<32xf32>
    %147 = vector.shape_cast %146 : vector<32xf32> to vector<1x32xf32>
    %cst_33 = arith.constant 1.280000e+02 : f32
    %148 = vector.broadcast %cst_33 : f32 to vector<1x32xf32>
    %149 = arith.divf %147, %148 : vector<1x32xf32>
    %150 = vector.broadcast %149 : vector<1x32xf32> to vector<128x32xf32>
    %151 = arith.subf %145, %150 : vector<128x32xf32>
    %152 = arith.mulf %151, %151 : vector<128x32xf32>
    %cst_34 = arith.constant dense<0.000000e+00> : vector<32xf32>
    %153 = vector.multi_reduction <add>, %152, %cst_34 [0] : vector<128x32xf32> to vector<32xf32>
    %154 = vector.shape_cast %153 : vector<32xf32> to vector<1x32xf32>
    %cst_35 = arith.constant 1.280000e+02 : f32
    %155 = vector.broadcast %cst_35 : f32 to vector<1x32xf32>
    %156 = arith.divf %154, %155 : vector<1x32xf32>
    %c0_36 = arith.constant 0 : index
    %c0_37 = arith.constant 0 : index
    %157 = vector.load %arg6[%c0_36, %c0_37] : memref<1x32xf32, #tpu.memory_space<vmem>>, vector<1x32xf32>
    %cst_38 = arith.constant 9.99999974E-6 : f32
    %158 = vector.broadcast %cst_38 : f32 to vector<1x32xf32>
    %159 = arith.addf %156, %158 : vector<1x32xf32>
    %160 = math.rsqrt %159 : vector<1x32xf32>
    %161 = arith.mulf %157, %160 : vector<1x32xf32>
    %162 = vector.broadcast %161 : vector<1x32xf32> to vector<128x32xf32>
    %163 = arith.mulf %151, %162 : vector<128x32xf32>
    %c0_39 = arith.constant 0 : index
    %c0_40 = arith.constant 0 : index
    %164 = vector.load %arg7[%c0_39, %c0_40] : memref<1x32xf32, #tpu.memory_space<vmem>>, vector<1x32xf32>
    %165 = vector.broadcast %164 : vector<1x32xf32> to vector<128x32xf32>
    %166 = arith.addf %163, %165 : vector<128x32xf32>
    %cst_41 = arith.constant 0.000000e+00 : f32
    %167 = vector.broadcast %cst_41 : f32 to vector<128x32xf32>
    %168 = arith.maximumf %166, %167 : vector<128x32xf32>
    %169 = arith.truncf %168 : vector<128x32xf32> to vector<128x32xbf16>
    %c0_42 = arith.constant 0 : index
    %c0_43 = arith.constant 0 : index
    %170 = vector.load %arg8[%c0_42, %c0_43] : memref<32x128xbf16, #tpu.memory_space<vmem>>, vector<32x128xbf16>
    %cst_44 = arith.constant dense<0.000000e+00> : vector<128x128xf32>
    %171 = tpu.matmul %169, %170, %cst_44 {dimension_numbers = #tpu.dot_dimension_numbers<[1], [0], [0], [1], [0, 0, 1, 1], [], []>} : vector<128x32xbf16>, vector<32x128xbf16>, vector<128x128xf32> -> vector<128x128xf32>
    %cst_45 = arith.constant dense<0.000000e+00> : vector<128xf32>
    %172 = vector.multi_reduction <add>, %171, %cst_45 [0] : vector<128x128xf32> to vector<128xf32>
    %173 = vector.shape_cast %172 : vector<128xf32> to vector<1x128xf32>
    %cst_46 = arith.constant 1.280000e+02 : f32
    %174 = vector.broadcast %cst_46 : f32 to vector<1x128xf32>
    %175 = arith.divf %173, %174 : vector<1x128xf32>
    %176 = vector.broadcast %175 : vector<1x128xf32> to vector<128x128xf32>
    %177 = arith.subf %171, %176 : vector<128x128xf32>
    %178 = arith.mulf %177, %177 : vector<128x128xf32>
    %cst_47 = arith.constant dense<0.000000e+00> : vector<128xf32>
    %179 = vector.multi_reduction <add>, %178, %cst_47 [0] : vector<128x128xf32> to vector<128xf32>
    %180 = vector.shape_cast %179 : vector<128xf32> to vector<1x128xf32>
    %cst_48 = arith.constant 1.280000e+02 : f32
    %181 = vector.broadcast %cst_48 : f32 to vector<1x128xf32>
    %182 = arith.divf %180, %181 : vector<1x128xf32>
    %c0_49 = arith.constant 0 : index
    %c0_50 = arith.constant 0 : index
    %183 = vector.load %arg9[%c0_49, %c0_50] : memref<1x128xf32, #tpu.memory_space<vmem>>, vector<1x128xf32>
    %cst_51 = arith.constant 9.99999974E-6 : f32
    %184 = vector.broadcast %cst_51 : f32 to vector<1x128xf32>
    %185 = arith.addf %182, %184 : vector<1x128xf32>
    %186 = math.rsqrt %185 : vector<1x128xf32>
    %187 = arith.mulf %183, %186 : vector<1x128xf32>
    %188 = vector.broadcast %187 : vector<1x128xf32> to vector<128x128xf32>
    %189 = arith.mulf %177, %188 : vector<128x128xf32>
    %c0_52 = arith.constant 0 : index
    %c0_53 = arith.constant 0 : index
    %190 = vector.load %arg10[%c0_52, %c0_53] : memref<1x128xf32, #tpu.memory_space<vmem>>, vector<1x128xf32>
    %191 = vector.broadcast %190 : vector<1x128xf32> to vector<128x128xf32>
    %192 = arith.addf %189, %191 : vector<128x128xf32>
    %193 = vector.shape_cast %1 : vector<8x8x8x64xbf16> to vector<4x2x8x8x64xbf16>
    %194 = vector.extract_strided_slice %193 {offsets = [0, 0, 0, 0, 0], sizes = [4, 1, 8, 8, 64], strides = [1, 1, 1, 1, 1]} : vector<4x2x8x8x64xbf16> to vector<4x1x8x8x64xbf16>
    %195 = vector.shape_cast %194 : vector<4x1x8x8x64xbf16> to vector<4x8x8x64xbf16>
    %196 = vector.shape_cast %195 : vector<4x8x8x64xbf16> to vector<4x4x2x8x64xbf16>
    %197 = vector.extract_strided_slice %196 {offsets = [0, 0, 0, 0, 0], sizes = [4, 4, 1, 8, 64], strides = [1, 1, 1, 1, 1]} : vector<4x4x2x8x64xbf16> to vector<4x4x1x8x64xbf16>
    %198 = vector.shape_cast %197 : vector<4x4x1x8x64xbf16> to vector<4x4x8x64xbf16>
    %199 = vector.shape_cast %198 : vector<4x4x8x64xbf16> to vector<128x64xbf16>
    %c0_54 = arith.constant 0 : index
    %c0_55 = arith.constant 0 : index
    %200 = vector.load %arg11[%c0_54, %c0_55] : memref<64x128xbf16, #tpu.memory_space<vmem>>, vector<64x128xbf16>
    %cst_56 = arith.constant dense<0.000000e+00> : vector<128x128xf32>
    %201 = tpu.matmul %199, %200, %cst_56 {dimension_numbers = #tpu.dot_dimension_numbers<[1], [0], [0], [1], [0, 0, 1, 1], [], []>} : vector<128x64xbf16>, vector<64x128xbf16>, vector<128x128xf32> -> vector<128x128xf32>
    %cst_57 = arith.constant dense<0.000000e+00> : vector<128xf32>
    %202 = vector.multi_reduction <add>, %201, %cst_57 [0] : vector<128x128xf32> to vector<128xf32>
    %203 = vector.shape_cast %202 : vector<128xf32> to vector<1x128xf32>
    %cst_58 = arith.constant 1.280000e+02 : f32
    %204 = vector.broadcast %cst_58 : f32 to vector<1x128xf32>
    %205 = arith.divf %203, %204 : vector<1x128xf32>
    %206 = vector.broadcast %205 : vector<1x128xf32> to vector<128x128xf32>
    %207 = arith.subf %201, %206 : vector<128x128xf32>
    %208 = arith.mulf %207, %207 : vector<128x128xf32>
    %cst_59 = arith.constant dense<0.000000e+00> : vector<128xf32>
    %209 = vector.multi_reduction <add>, %208, %cst_59 [0] : vector<128x128xf32> to vector<128xf32>
    %210 = vector.shape_cast %209 : vector<128xf32> to vector<1x128xf32>
    %cst_60 = arith.constant 1.280000e+02 : f32
    %211 = vector.broadcast %cst_60 : f32 to vector<1x128xf32>
    %212 = arith.divf %210, %211 : vector<1x128xf32>
    %c0_61 = arith.constant 0 : index
    %c0_62 = arith.constant 0 : index
    %213 = vector.load %arg12[%c0_61, %c0_62] : memref<1x128xf32, #tpu.memory_space<vmem>>, vector<1x128xf32>
    %cst_63 = arith.constant 9.99999974E-6 : f32
    %214 = vector.broadcast %cst_63 : f32 to vector<1x128xf32>
    %215 = arith.addf %212, %214 : vector<1x128xf32>
    %216 = math.rsqrt %215 : vector<1x128xf32>
    %217 = arith.mulf %213, %216 : vector<1x128xf32>
    %218 = vector.broadcast %217 : vector<1x128xf32> to vector<128x128xf32>
    %219 = arith.mulf %207, %218 : vector<128x128xf32>
    %c0_64 = arith.constant 0 : index
    %c0_65 = arith.constant 0 : index
    %220 = vector.load %arg13[%c0_64, %c0_65] : memref<1x128xf32, #tpu.memory_space<vmem>>, vector<1x128xf32>
    %221 = vector.broadcast %220 : vector<1x128xf32> to vector<128x128xf32>
    %222 = arith.addf %219, %221 : vector<128x128xf32>
    %223 = arith.addf %192, %222 : vector<128x128xf32>
    %cst_66 = arith.constant 0.000000e+00 : f32
    %224 = vector.broadcast %cst_66 : f32 to vector<128x128xf32>
    %225 = arith.maximumf %223, %224 : vector<128x128xf32>
    %226 = vector.shape_cast %223 : vector<128x128xf32> to vector<4x4x8x128xf32>
    %c0_67 = arith.constant 0 : index
    %c0_68 = arith.constant 0 : index
    %c0_69 = arith.constant 0 : index
    %c0_70 = arith.constant 0 : index
    %227 = vector.load %arg15[%c0_67, %c0_68, %c0_69, %c0_70] : memref<4x4x8x128xf32, #tpu.memory_space<vmem>>, vector<4x4x8x128xf32>
    tpu.vector_store %arg15[%c0_67, %c0_68, %c0_69, %c0_70], %226 {strides = array<i32>} : memref<4x4x8x128xf32, #tpu.memory_space<vmem>>, vector<4x4x8x128xf32>,
    %228 = vector.shape_cast %225 : vector<128x128xf32> to vector<4x4x8x128xf32>
    %c0_71 = arith.constant 0 : index
    %c0_72 = arith.constant 0 : index
    %c0_73 = arith.constant 0 : index
    %c0_74 = arith.constant 0 : index
    %229 = vector.load %arg14[%c0_71, %c0_72, %c0_73, %c0_74] : memref<4x4x8x128xf32, #tpu.memory_space<vmem>>, vector<4x4x8x128xf32>
    tpu.vector_store %arg14[%c0_71, %c0_72, %c0_73, %c0_74], %228 {strides = array<i32>} : memref<4x4x8x128xf32, #tpu.memory_space<vmem>>, vector<4x4x8x128xf32>,
    return
  }
  func.func @transform_0(%arg0: i32) -> (i32, i32, i32, i32) {
    %c0_i32 = arith.constant 0 : i32
    %c0_i32_0 = arith.constant 0 : i32
    %c0_i32_1 = arith.constant 0 : i32
    %c0_i32_2 = arith.constant 0 : i32
    %c0_i32_3 = arith.constant 0 : i32
    return %c0_i32, %c0_i32_0, %c0_i32_1, %c0_i32_2 : i32, i32, i32, i32
  }
  func.func @transform_1(%arg0: i32) -> (i32, i32) {
    %c0_i32 = arith.constant 0 : i32
    %c0_i32_0 = arith.constant 0 : i32
    %c0_i32_1 = arith.constant 0 : i32
    return %c0_i32, %c0_i32_0 : i32, i32
  }
  func.func @transform_2(%arg0: i32) -> (i32, i32) {
    %c0_i32 = arith.constant 0 : i32
    %c0_i32_0 = arith.constant 0 : i32
    %c0_i32_1 = arith.constant 0 : i32
    return %c0_i32, %c0_i32_0 : i32, i32
  }
  func.func @transform_3(%arg0: i32) -> (i32, i32) {
    %c0_i32 = arith.constant 0 : i32
    %c0_i32_0 = arith.constant 0 : i32
    %c0_i32_1 = arith.constant 0 : i32
    return %c0_i32, %c0_i32_0 : i32, i32
  }
  func.func @transform_4(%arg0: i32) -> (i32, i32, i32) {
    %c0_i32 = arith.constant 0 : i32
    %c0_i32_0 = arith.constant 0 : i32
    %c0_i32_1 = arith.constant 0 : i32
    %c0_i32_2 = arith.constant 0 : i32
    return %c0_i32, %c0_i32_0, %c0_i32_1 : i32, i32, i32
  }
  func.func @transform_5(%arg0: i32) -> (i32, i32) {
    %c0_i32 = arith.constant 0 : i32
    %c0_i32_0 = arith.constant 0 : i32
    %c0_i32_1 = arith.constant 0 : i32
    return %c0_i32, %c0_i32_0 : i32, i32
  }
  func.func @transform_6(%arg0: i32) -> (i32, i32) {
    %c0_i32 = arith.constant 0 : i32
    %c0_i32_0 = arith.constant 0 : i32
    %c0_i32_1 = arith.constant 0 : i32
    return %c0_i32, %c0_i32_0 : i32, i32
  }
  func.func @transform_7(%arg0: i32) -> (i32, i32) {
    %c0_i32 = arith.constant 0 : i32
    %c0_i32_0 = arith.constant 0 : i32
    %c0_i32_1 = arith.constant 0 : i32
    return %c0_i32, %c0_i32_0 : i32, i32
  }
  func.func @transform_8(%arg0: i32) -> (i32, i32) {
    %c0_i32 = arith.constant 0 : i32
    %c0_i32_0 = arith.constant 0 : i32
    %c0_i32_1 = arith.constant 0 : i32
    return %c0_i32, %c0_i32_0 : i32, i32
  }
  func.func @transform_9(%arg0: i32) -> (i32, i32) {
    %c0_i32 = arith.constant 0 : i32
    %c0_i32_0 = arith.constant 0 : i32
    %c0_i32_1 = arith.constant 0 : i32
    return %c0_i32, %c0_i32_0 : i32, i32
  }
  func.func @transform_10(%arg0: i32) -> (i32, i32) {
    %c0_i32 = arith.constant 0 : i32
    %c0_i32_0 = arith.constant 0 : i32
    %c0_i32_1 = arith.constant 0 : i32
    return %c0_i32, %c0_i32_0 : i32, i32
  }
  func.func @transform_11(%arg0: i32) -> (i32, i32) {
    %c0_i32 = arith.constant 0 : i32
    %c0_i32_0 = arith.constant 0 : i32
    %c0_i32_1 = arith.constant 0 : i32
    return %c0_i32, %c0_i32_0 : i32, i32
  }
  func.func @transform_12(%arg0: i32) -> (i32, i32) {
    %c0_i32 = arith.constant 0 : i32
    %c0_i32_0 = arith.constant 0 : i32
    %c0_i32_1 = arith.constant 0 : i32
    return %c0_i32, %c0_i32_0 : i32, i32
  }
  func.func @transform_13(%arg0: i32) -> (i32, i32, i32, i32) {
    %c0_i32 = arith.constant 0 : i32
    %c0_i32_0 = arith.constant 0 : i32
    %c0_i32_1 = arith.constant 0 : i32
    %c0_i32_2 = arith.constant 0 : i32
    %c0_i32_3 = arith.constant 0 : i32
    return %c0_i32, %c0_i32_0, %c0_i32_1, %c0_i32_2 : i32, i32, i32, i32
  }
  func.func @transform_14(%arg0: i32) -> (i32, i32, i32, i32) {
    %c0_i32 = arith.constant 0 : i32
    %c0_i32_0 = arith.constant 0 : i32
    %c0_i32_1 = arith.constant 0 : i32
    %c0_i32_2 = arith.constant 0 : i32
    %c0_i32_3 = arith.constant 0 : i32
    return %c0_i32, %c0_i32_0, %c0_i32_1, %c0_i32_2 : i32, i32, i32, i32
  }
}

</mosaic_0001>

<llo_original>
// kernel: tpu_custom_call.1
$region0: #{tpu_custom_call.1}
  #allocation0 [shape = 'u32[]', space=smem, size = 0x4, offset = 0x4, fixed_abs, tag = 'smem constant byte address 0x4 - core index']
  #allocation1 [shape = 'u32[144,128]{1,0:T(1,128)}', space=vmem, size = 0x12000, scoped, tag = 'internal scratch']
  %s0 = inlined_call_operand.hbm [shape: f32[8,8,8,64], index: 0, kind: input, shape index: {}]
  %s1 = inlined_call_operand.vmem [shape: bf16[64,32], index: 1, kind: input, shape index: {}]
  %s2 = inlined_call_operand.vmem [shape: f32[1,32], index: 2, kind: input, shape index: {}]
  %s3 = inlined_call_operand.vmem [shape: f32[1,32], index: 3, kind: input, shape index: {}]
  %s4 = inlined_call_operand.hbm [shape: bf16[9,32,32], index: 4, kind: input, shape index: {}]
  %s5 = inlined_call_operand.vmem [shape: f32[1,32], index: 5, kind: input, shape index: {}]
  %s6 = inlined_call_operand.vmem [shape: f32[1,32], index: 6, kind: input, shape index: {}]
  %s7 = inlined_call_operand.vmem [shape: bf16[32,128], index: 7, kind: input, shape index: {}]
  %s8 = inlined_call_operand.vmem [shape: f32[1,128], index: 8, kind: input, shape index: {}]
  %s9 = inlined_call_operand.vmem [shape: f32[1,128], index: 9, kind: input, shape index: {}]
  %s10 = inlined_call_operand.vmem [shape: bf16[64,128], index: 10, kind: input, shape index: {}]
  %s11 = inlined_call_operand.vmem [shape: f32[1,128], index: 11, kind: input, shape index: {}]
  %s12 = inlined_call_operand.vmem [shape: f32[1,128], index: 12, kind: input, shape index: {}]
  %s13 = inlined_call_operand.hbm [shape: f32[4,4,8,128], index: 13, kind: output, shape index: {0}]
  %s14 = inlined_call_operand.hbm [shape: f32[4,4,8,128], index: 14, kind: output, shape index: {1}]
  %15 = xla_tuple %s13, %s14
  %s16 = sld [smem:[#allocation0]]
  $region78: #{tpu_custom_call.1} parent=0
    _
  %s18 = ssub.s32 1, %s16
  %s19 = scalar_select 0, %s18, %s16
  $region1: #{tpu_custom_call.1} parent=0
    #allocation2 [shape = 'u8[262144]{0}', space=vmem, size = 0x40000, scoped, tag = 'input window, operand 0, single buffered']
    #allocation3 [shape = 's32[1]{0}', space=sflag, size = 0x4, scoped, tag = 'scoped memory for tpu_custom_call.1']
    #allocation4 [shape = 's32[1]{0}', space=sflag, size = 0x4, scoped, tag = 'scoped memory for tpu_custom_call.1']
    #allocation5 [shape = 'u8[73728]{0}', space=vmem, size = 0x12000, scoped, tag = 'input window, operand 4, single buffered']
    #allocation6 [shape = 's32[1]{0}', space=sflag, size = 0x4, scoped, tag = 'scoped memory for tpu_custom_call.1']
    #allocation7 [shape = 'u8[65536]{0}', space=vmem, size = 0x10000, scoped, tag = 'output window, operand 0, single buffered']
    #allocation8 [shape = 'u8[65536]{0}', space=vmem, size = 0x10000, scoped, tag = 'output window, operand 1, single buffered']
    #allocation9 [shape = 's32[1]{0}', space=sflag, size = 0x4, scoped, tag = 'scoped memory for tpu_custom_call.1']
    %20 = vsyncpa [#allocation3], 0
    %21 = vsyncpa [#allocation6], 0
    %22 = vsyncpa [#allocation4], 0
    %23 = vsyncpa [#allocation9], 0
    // Predicated region
    $region2: #{tpu_custom_call.1} parent=1 // pred_check
      _
    $region3: #{tpu_custom_call.1} parent=1 // pred_check_branch
      %25 = sbr.rel (0) target = $region5
    $region4: #{tpu_custom_call.1} parent=1 // pred_region
      %s27 = ssub.s32 8192, 8192
      %28 = vsyncadd [#allocation3], %s27
      %s29 = sshll.u32 [#allocation2], 4
      %s30 = int_to_ptr.vmem [resolvable:$true] %s29
      %35 = dma.hbm_to_vmem [thread:$0]  %s0, 8192, %s30, [#allocation3], 128, 128, 8
    $region5: #{tpu_custom_call.1} parent=1 // pred_fallthru
      _
    // Predicated region
    $region6: #{tpu_custom_call.1} parent=1 // pred_check
      _
    $region7: #{tpu_custom_call.1} parent=1 // pred_check_branch
      %37 = sbr.rel (0) target = $region9
    $region8: #{tpu_custom_call.1} parent=1 // pred_region
      _
    $region9: #{tpu_custom_call.1} parent=1 // pred_fallthru
      _
    // Predicated region
    $region10: #{tpu_custom_call.1} parent=1 // pred_check
      _
    $region11: #{tpu_custom_call.1} parent=1 // pred_check_branch
      %39 = sbr.rel (0) target = $region13
    $region12: #{tpu_custom_call.1} parent=1 // pred_region
      _
    $region13: #{tpu_custom_call.1} parent=1 // pred_fallthru
      _
    // Predicated region
    $region14: #{tpu_custom_call.1} parent=1 // pred_check
      _
    $region15: #{tpu_custom_call.1} parent=1 // pred_check_branch
      %41 = sbr.rel (0) target = $region17
    $region16: #{tpu_custom_call.1} parent=1 // pred_region
      _
    $region17: #{tpu_custom_call.1} parent=1 // pred_fallthru
      _
    // Predicated region
    $region18: #{tpu_custom_call.1} parent=1 // pred_check
      _
    $region19: #{tpu_custom_call.1} parent=1 // pred_check_branch
      %43 = sbr.rel (0) target = $region21
    $region20: #{tpu_custom_call.1} parent=1 // pred_region
      %s45 = ssub.s32 2304, 2304
      %46 = vsyncadd [#allocation6], %s45
      %s47 = sshll.u32 [#allocation5], 4
      %s48 = int_to_ptr.vmem [resolvable:$true] %s47
      %53 = dma.hbm_to_vmem [thread:$0]  %s4, 2304, %s48, [#allocation6], 64, 64, 4
    $region21: #{tpu_custom_call.1} parent=1 // pred_fallthru
      _
    // Predicated region
    $region22: #{tpu_custom_call.1} parent=1 // pred_check
      _
    $region23: #{tpu_custom_call.1} parent=1 // pred_check_branch
      %55 = sbr.rel (0) target = $region25
    $region24: #{tpu_custom_call.1} parent=1 // pred_region
      _
    $region25: #{tpu_custom_call.1} parent=1 // pred_fallthru
      _
    // Predicated region
    $region26: #{tpu_custom_call.1} parent=1 // pred_check
      _
    $region27: #{tpu_custom_call.1} parent=1 // pred_check_branch
      %57 = sbr.rel (0) target = $region29
    $region28: #{tpu_custom_call.1} parent=1 // pred_region
      _
    $region29: #{tpu_custom_call.1} parent=1 // pred_fallthru
      _
    // Predicated region
    $region30: #{tpu_custom_call.1} parent=1 // pred_check
      _
    $region31: #{tpu_custom_call.1} parent=1 // pred_check_branch
      %59 = sbr.rel (0) target = $region33
    $region32: #{tpu_custom_call.1} parent=1 // pred_region
      _
    $region33: #{tpu_custom_call.1} parent=1 // pred_fallthru
      _
    // Predicated region
    $region34: #{tpu_custom_call.1} parent=1 // pred_check
      _
    $region35: #{tpu_custom_call.1} parent=1 // pred_check_branch
      %61 = sbr.rel (0) target = $region37
    $region36: #{tpu_custom_call.1} parent=1 // pred_region
      _
    $region37: #{tpu_custom_call.1} parent=1 // pred_fallthru
      _
    // Predicated region
    $region38: #{tpu_custom_call.1} parent=1 // pred_check
      _
    $region39: #{tpu_custom_call.1} parent=1 // pred_check_branch
      %63 = sbr.rel (0) target = $region41
    $region40: #{tpu_custom_call.1} parent=1 // pred_region
      _
    $region41: #{tpu_custom_call.1} parent=1 // pred_fallthru
      _
    // Predicated region
    $region42: #{tpu_custom_call.1} parent=1 // pred_check
      _
    $region43: #{tpu_custom_call.1} parent=1 // pred_check_branch
      %65 = sbr.rel (0) target = $region45
    $region44: #{tpu_custom_call.1} parent=1 // pred_region
      _
    $region45: #{tpu_custom_call.1} parent=1 // pred_fallthru
      _
    // Predicated region
    $region46: #{tpu_custom_call.1} parent=1 // pred_check
      _
    $region47: #{tpu_custom_call.1} parent=1 // pred_check_branch
      %67 = sbr.rel (0) target = $region49
    $region48: #{tpu_custom_call.1} parent=1 // pred_region
      _
    $region49: #{tpu_custom_call.1} parent=1 // pred_fallthru
      _
    // Predicated region
    $region50: #{tpu_custom_call.1} parent=1 // pred_check
      _
    $region51: #{tpu_custom_call.1} parent=1 // pred_check_branch
      %69 = sbr.rel (0) target = $region53
    $region52: #{tpu_custom_call.1} parent=1 // pred_region
      _
    $region53: #{tpu_custom_call.1} parent=1 // pred_fallthru
      _
    // Predicated region
    $region54: #{tpu_custom_call.1} parent=1 // pred_check
      _
    $region55: #{tpu_custom_call.1} parent=1 // pred_check_branch
      %71 = sbr.rel (0) target = $region57
    $region56: #{tpu_custom_call.1} parent=1 // pred_region
      %72 = dma.done [#allocation3], 8192
    $region57: #{tpu_custom_call.1} parent=1 // pred_fallthru
      _
    // Predicated region
    $region58: #{tpu_custom_call.1} parent=1 // pred_check
      _
    $region59: #{tpu_custom_call.1} parent=1 // pred_check_branch
      %74 = sbr.rel (0) target = $region61
    $region60: #{tpu_custom_call.1} parent=1 // pred_region
      %75 = dma.done [#allocation6], 2304
    $region61: #{tpu_custom_call.1} parent=1 // pred_fallthru
      _
    %v77 = vld [vmem:[#allocation2] sm:$0xff]
    %v78 = vld [vmem:[#allocation2 + $0x8] sm:$0xff]
    %v79 = vld [vmem:[#allocation2 + $0x10] sm:$0xff]
    %v80 = vld [vmem:[#allocation2 + $0x18] sm:$0xff]
    %v81 = vld [vmem:[#allocation2 + $0x20] sm:$0xff]
    %v82 = vld [vmem:[#allocation2 + $0x28] sm:$0xff]
    %v83 = vld [vmem:[#allocation2 + $0x30] sm:$0xff]
    %v84 = vld [vmem:[#allocation2 + $0x38] sm:$0xff]
    %v85 = vld [vmem:[#allocation2 + $0x40] sm:$0xff]
    %v86 = vld [vmem:[#allocation2 + $0x48] sm:$0xff]
    %v87 = vld [vmem:[#allocation2 + $0x50] sm:$0xff]
    %v88 = vld [vmem:[#allocation2 + $0x58] sm:$0xff]
    %v89 = vld [vmem:[#allocation2 + $0x60] sm:$0xff]
    %v90 = vld [vmem:[#allocation2 + $0x68] sm:$0xff]
    %v91 = vld [vmem:[#allocation2 + $0x70] sm:$0xff]
    %v92 = vld [vmem:[#allocation2 + $0x78] sm:$0xff]
    %v93 = vld [vmem:[#allocation2 + $0x80] sm:$0xff]
    %v94 = vld [vmem:[#allocation2 + $0x88] sm:$0xff]
    %v95 = vld [vmem:[#allocation2 + $0x90] sm:$0xff]
    %v96 = vld [vmem:[#allocation2 + $0x98] sm:$0xff]
    %v97 = vld [vmem:[#allocation2 + $0xa0] sm:$0xff]
    %v98 = vld [vmem:[#allocation2 + $0xa8] sm:$0xff]
    %v99 = vld [vmem:[#allocation2 + $0xb0] sm:$0xff]
    %v100 = vld [vmem:[#allocation2 + $0xb8] sm:$0xff]
    %v101 = vld [vmem:[#allocation2 + $0xc0] sm:$0xff]
    %v102 = vld [vmem:[#allocation2 + $0xc8] sm:$0xff]
    %v103 = vld [vmem:[#allocation2 + $0xd0] sm:$0xff]
    %v104 = vld [vmem:[#allocation2 + $0xd8] sm:$0xff]
    %v105 = vld [vmem:[#allocation2 + $0xe0] sm:$0xff]
    %v106 = vld [vmem:[#allocation2 + $0xe8] sm:$0xff]
    %v107 = vld [vmem:[#allocation2 + $0xf0] sm:$0xff]
    %v108 = vld [vmem:[#allocation2 + $0xf8] sm:$0xff]
    %v109 = vld [vmem:[#allocation2 + $0x100] sm:$0xff]
    %v110 = vld [vmem:[#allocation2 + $0x108] sm:$0xff]
    %v111 = vld [vmem:[#allocation2 + $0x110] sm:$0xff]
    %v112 = vld [vmem:[#allocation2 + $0x118] sm:$0xff]
    %v113 = vld [vmem:[#allocation2 + $0x120] sm:$0xff]
    %v114 = vld [vmem:[#allocation2 + $0x128] sm:$0xff]
    %v115 = vld [vmem:[#allocation2 + $0x130] sm:$0xff]
    %v116 = vld [vmem:[#allocation2 + $0x138] sm:$0xff]
    %v117 = vld [vmem:[#allocation2 + $0x140] sm:$0xff]
    %v118 = vld [vmem:[#allocation2 + $0x148] sm:$0xff]
    %v119 = vld [vmem:[#allocation2 + $0x150] sm:$0xff]
    %v120 = vld [vmem:[#allocation2 + $0x158] sm:$0xff]
    %v121 = vld [vmem:[#allocation2 + $0x160] sm:$0xff]
    %v122 = vld [vmem:[#allocation2 + $0x168] sm:$0xff]
    %v123 = vld [vmem:[#allocation2 + $0x170] sm:$0xff]
    %v124 = vld [vmem:[#allocation2 + $0x178] sm:$0xff]
    %v125 = vld [vmem:[#allocation2 + $0x180] sm:$0xff]
    %v126 = vld [vmem:[#allocation2 + $0x188] sm:$0xff]
    %v127 = vld [vmem:[#allocation2 + $0x190] sm:$0xff]
    %v128 = vld [vmem:[#allocation2 + $0x198] sm:$0xff]
    %v129 = vld [vmem:[#allocation2 + $0x1a0] sm:$0xff]
    %v130 = vld [vmem:[#allocation2 + $0x1a8] sm:$0xff]
    %v131 = vld [vmem:[#allocation2 + $0x1b0] sm:$0xff]
    %v132 = vld [vmem:[#allocation2 + $0x1b8] sm:$0xff]
    %v133 = vld [vmem:[#allocation2 + $0x1c0] sm:$0xff]
    %v134 = vld [vmem:[#allocation2 + $0x1c8] sm:$0xff]
    %v135 = vld [vmem:[#allocation2 + $0x1d0] sm:$0xff]
    %v136 = vld [vmem:[#allocation2 + $0x1d8] sm:$0xff]
    %v137 = vld [vmem:[#allocation2 + $0x1e0] sm:$0xff]
    %v138 = vld [vmem:[#allocation2 + $0x1e8] sm:$0xff]
    %v139 = vld [vmem:[#allocation2 + $0x1f0] sm:$0xff]
    %v140 = vld [vmem:[#allocation2 + $0x1f8] sm:$0xff]
    %v141 = vpack.c.bf16 %v77, %v77
    %v142 = vpack.c.bf16 %v78, %v78
    %v143 = vpack.c.bf16 %v79, %v79
    %v144 = vpack.c.bf16 %v80, %v80
    %v145 = vpack.c.bf16 %v81, %v81
    %v146 = vpack.c.bf16 %v82, %v82
    %v147 = vpack.c.bf16 %v83, %v83
    %v148 = vpack.c.bf16 %v84, %v84
    %v149 = vpack.c.bf16 %v85, %v85
    %v150 = vpack.c.bf16 %v86, %v86
    %v151 = vpack.c.bf16 %v87, %v87
    %v152 = vpack.c.bf16 %v88, %v88
    %v153 = vpack.c.bf16 %v89, %v89
    %v154 = vpack.c.bf16 %v90, %v90
    %v155 = vpack.c.bf16 %v91, %v91
    %v156 = vpack.c.bf16 %v92, %v92
    %v157 = vpack.c.bf16 %v93, %v93
    %v158 = vpack.c.bf16 %v94, %v94
    %v159 = vpack.c.bf16 %v95, %v95
    %v160 = vpack.c.bf16 %v96, %v96
    %v161 = vpack.c.bf16 %v97, %v97
    %v162 = vpack.c.bf16 %v98, %v98
    %v163 = vpack.c.bf16 %v99, %v99
    %v164 = vpack.c.bf16 %v100, %v100
    %v165 = vpack.c.bf16 %v101, %v101
    %v166 = vpack.c.bf16 %v102, %v102
    %v167 = vpack.c.bf16 %v103, %v103
    %v168 = vpack.c.bf16 %v104, %v104
    %v169 = vpack.c.bf16 %v105, %v105
    %v170 = vpack.c.bf16 %v106, %v106
    %v171 = vpack.c.bf16 %v107, %v107
    %v172 = vpack.c.bf16 %v108, %v108
    %v173 = vpack.c.bf16 %v109, %v109
    %v174 = vpack.c.bf16 %v110, %v110
    %v175 = vpack.c.bf16 %v111, %v111
    %v176 = vpack.c.bf16 %v112, %v112
    %v177 = vpack.c.bf16 %v113, %v113
    %v178 = vpack.c.bf16 %v114, %v114
    %v179 = vpack.c.bf16 %v115, %v115
    %v180 = vpack.c.bf16 %v116, %v116
    %v181 = vpack.c.bf16 %v117, %v117
    %v182 = vpack.c.bf16 %v118, %v118
    %v183 = vpack.c.bf16 %v119, %v119
    %v184 = vpack.c.bf16 %v120, %v120
    %v185 = vpack.c.bf16 %v121, %v121
    %v186 = vpack.c.bf16 %v122, %v122
    %v187 = vpack.c.bf16 %v123, %v123
    %v188 = vpack.c.bf16 %v124, %v124
    %v189 = vpack.c.bf16 %v125, %v125
    %v190 = vpack.c.bf16 %v126, %v126
    %v191 = vpack.c.bf16 %v127, %v127
    %v192 = vpack.c.bf16 %v128, %v128
    %v193 = vpack.c.bf16 %v129, %v129
    %v194 = vpack.c.bf16 %v130, %v130
    %v195 = vpack.c.bf16 %v131, %v131
    %v196 = vpack.c.bf16 %v132, %v132
    %v197 = vpack.c.bf16 %v133, %v133
    %v198 = vpack.c.bf16 %v134, %v134
    %v199 = vpack.c.bf16 %v135, %v135
    %v200 = vpack.c.bf16 %v136, %v136
    %v201 = vpack.c.bf16 %v137, %v137
    %v202 = vpack.c.bf16 %v138, %v138
    %v203 = vpack.c.bf16 %v139, %v139
    %v204 = vpack.c.bf16 %v140, %v140
    %v205 = vld [vmem:[%s1] sm:$0xf]
    %v206 = vld [vmem:[%s1 + $0x4] sm:$0xf]
    %v207 = vld [vmem:[%s1 + $0x8] sm:$0xf]
    %v208 = vld [vmem:[%s1 + $0xc] sm:$0xf]
    %v209 = vld [vmem:[%s1 + $0x10] sm:$0xf]
    %v210 = vld [vmem:[%s1 + $0x14] sm:$0xf]
    %v211 = vld [vmem:[%s1 + $0x18] sm:$0xf]
    %v212 = vld [vmem:[%s1 + $0x1c] sm:$0xf]
    %v277 = vunpack.c.l.b16 %v141
    %v278 = vunpack.c.l.b16 %v142
    %v279 = vunpack.c.l.b16 %v143
    %v280 = vunpack.c.l.b16 %v144
    %v281 = vunpack.c.l.b16 %v145
    %v282 = vunpack.c.l.b16 %v146
    %v283 = vunpack.c.l.b16 %v147
    %v284 = vunpack.c.l.b16 %v148
    %v285 = vunpack.c.l.b16 %v149
    %v286 = vunpack.c.l.b16 %v150
    %v287 = vunpack.c.l.b16 %v151
    %v288 = vunpack.c.l.b16 %v152
    %v289 = vunpack.c.l.b16 %v153
    %v290 = vunpack.c.l.b16 %v154
    %v291 = vunpack.c.l.b16 %v155
    %v292 = vunpack.c.l.b16 %v156
    %v293 = vunpack.c.l.b16 %v157
    %v294 = vunpack.c.l.b16 %v158
    %v295 = vunpack.c.l.b16 %v159
    %v296 = vunpack.c.l.b16 %v160
    %v297 = vunpack.c.l.b16 %v161
    %v298 = vunpack.c.l.b16 %v162
    %v299 = vunpack.c.l.b16 %v163
    %v300 = vunpack.c.l.b16 %v164
    %v301 = vunpack.c.l.b16 %v165
    %v302 = vunpack.c.l.b16 %v166
    %v303 = vunpack.c.l.b16 %v167
    %v304 = vunpack.c.l.b16 %v168
    %v305 = vunpack.c.l.b16 %v169
    %v306 = vunpack.c.l.b16 %v170
    %v307 = vunpack.c.l.b16 %v171
    %v308 = vunpack.c.l.b16 %v172
    %v309 = vunpack.c.l.b16 %v173
    %v310 = vunpack.c.l.b16 %v174
    %v311 = vunpack.c.l.b16 %v175
    %v312 = vunpack.c.l.b16 %v176
    %v313 = vunpack.c.l.b16 %v177
    %v314 = vunpack.c.l.b16 %v178
    %v315 = vunpack.c.l.b16 %v179
    %v316 = vunpack.c.l.b16 %v180
    %v317 = vunpack.c.l.b16 %v181
    %v318 = vunpack.c.l.b16 %v182
    %v319 = vunpack.c.l.b16 %v183
    %v320 = vunpack.c.l.b16 %v184
    %v321 = vunpack.c.l.b16 %v185
    %v322 = vunpack.c.l.b16 %v186
    %v323 = vunpack.c.l.b16 %v187
    %v324 = vunpack.c.l.b16 %v188
    %v325 = vunpack.c.l.b16 %v189
    %v326 = vunpack.c.l.b16 %v190
    %v327 = vunpack.c.l.b16 %v191
    %v328 = vunpack.c.l.b16 %v192
    %v329 = vunpack.c.l.b16 %v193
    %v330 = vunpack.c.l.b16 %v194
    %v331 = vunpack.c.l.b16 %v195
    %v332 = vunpack.c.l.b16 %v196
    %v333 = vunpack.c.l.b16 %v197
    %v334 = vunpack.c.l.b16 %v198
    %v335 = vunpack.c.l.b16 %v199
    %v336 = vunpack.c.l.b16 %v200
    %v337 = vunpack.c.l.b16 %v201
    %v338 = vunpack.c.l.b16 %v202
    %v339 = vunpack.c.l.b16 %v203
    %v340 = vunpack.c.l.b16 %v204
    %v341 = vpack.c.b16 %v278, %v277
    %v342 = vpack.c.b16 %v280, %v279
    %v343 = vpack.c.b16 %v282, %v281
    %v344 = vpack.c.b16 %v284, %v283
    %v345 = vpack.c.b16 %v286, %v285
    %v346 = vpack.c.b16 %v288, %v287
    %v347 = vpack.c.b16 %v290, %v289
    %v348 = vpack.c.b16 %v292, %v291
    %v349 = vpack.c.b16 %v294, %v293
    %v350 = vpack.c.b16 %v296, %v295
    %v351 = vpack.c.b16 %v298, %v297
    %v352 = vpack.c.b16 %v300, %v299
    %v353 = vpack.c.b16 %v302, %v301
    %v354 = vpack.c.b16 %v304, %v303
    %v355 = vpack.c.b16 %v306, %v305
    %v356 = vpack.c.b16 %v308, %v307
    %v357 = vpack.c.b16 %v310, %v309
    %v358 = vpack.c.b16 %v312, %v311
    %v359 = vpack.c.b16 %v314, %v313
    %v360 = vpack.c.b16 %v316, %v315
    %v361 = vpack.c.b16 %v318, %v317
    %v362 = vpack.c.b16 %v320, %v319
    %v363 = vpack.c.b16 %v322, %v321
    %v364 = vpack.c.b16 %v324, %v323
    %v365 = vpack.c.b16 %v326, %v325
    %v366 = vpack.c.b16 %v328, %v327
    %v367 = vpack.c.b16 %v330, %v329
    %v368 = vpack.c.b16 %v332, %v331
    %v369 = vpack.c.b16 %v334, %v333
    %v370 = vpack.c.b16 %v336, %v335
    %v371 = vpack.c.b16 %v338, %v337
    %v372 = vpack.c.b16 %v340, %v339
    %v381 = vunpack.c.l.b16 %v205
    %v382 = vunpack.c.l.b16 %v206
    %v383 = vunpack.c.l.b16 %v207
    %v384 = vunpack.c.l.b16 %v208
    %v385 = vunpack.c.l.b16 %v209
    %v386 = vunpack.c.l.b16 %v210
    %v387 = vunpack.c.l.b16 %v211
    %v388 = vunpack.c.l.b16 %v212
    %v389 = vpack.c.b16 %v382, %v381
    %v390 = vpack.c.b16 %v384, %v383
    %v391 = vpack.c.b16 %v386, %v385
    %v392 = vpack.c.b16 %v388, %v387
    %vm397 = vcmask 523264
    %v399 = vsel %vm397, %v341, 0
    %v402 = vsel %vm397, %v342, 0
    %v405 = vsel %vm397, %v343, 0
    %v408 = vsel %vm397, %v344, 0
    %v411 = vsel %vm397, %v345, 0
    %v414 = vsel %vm397, %v346, 0
    %v417 = vsel %vm397, %v347, 0
    %v420 = vsel %vm397, %v348, 0
    %v423 = vsel %vm397, %v349, 0
    %v426 = vsel %vm397, %v350, 0
    %v429 = vsel %vm397, %v351, 0
    %v432 = vsel %vm397, %v352, 0
    %v435 = vsel %vm397, %v353, 0
    %v438 = vsel %vm397, %v354, 0
    %v441 = vsel %vm397, %v355, 0
    %v444 = vsel %vm397, %v356, 0
    %v447 = vsel %vm397, %v357, 0
    %v450 = vsel %vm397, %v358, 0
    %v453 = vsel %vm397, %v359, 0
    %v456 = vsel %vm397, %v360, 0
    %v459 = vsel %vm397, %v361, 0
    %v462 = vsel %vm397, %v362, 0
    %v465 = vsel %vm397, %v363, 0
    %v468 = vsel %vm397, %v364, 0
    %v471 = vsel %vm397, %v365, 0
    %v474 = vsel %vm397, %v366, 0
    %v477 = vsel %vm397, %v367, 0
    %v480 = vsel %vm397, %v368, 0
    %v483 = vsel %vm397, %v369, 0
    %v486 = vsel %vm397, %v370, 0
    %v489 = vsel %vm397, %v371, 0
    %v492 = vsel %vm397, %v372, 0
    %494 = vmatprep.subr.bf16.mxu0 0
    %495 = vmatpush1.bf16.msra.mxu0 0
    %496 = vmatprep.subr.bf16.mxu0 0
    %497 = vmatpush1.bf16.msra.mxu0 0
    %498 = vmatprep.subr.bf16.mxu0 0
    %499 = vmatpush1.bf16.msra.mxu0 0
    %500 = vmatprep.subr.bf16.mxu0 0
    %501 = vmatpush1.bf16.msra.mxu0 0
    %502 = vmatprep.subr.bf16.mxu0 0
    %503 = vmatpush1.bf16.msra.mxu0 %v392
    %504 = vmatprep.subr.bf16.mxu0 0
    %505 = vmatpush1.bf16.msra.mxu0 %v391
    %506 = vmatprep.subr.bf16.mxu0 0
    %507 = vmatpush1.bf16.msra.mxu0 %v390
    %508 = vmatprep.subr.bf16.mxu0 0
    %509 = vmatpush1.bf16.msra.mxu0 %v389
    %510 = vmatprep.subr.bf16.mxu0 0
    %511 = vmatpush2.bf16.msra.mxu0 0
    %512 = vmatprep.subr.bf16.mxu0 0
    %513 = vmatpush2.bf16.msra.mxu0 0
    %514 = vmatprep.subr.bf16.mxu0 0
    %515 = vmatpush2.bf16.msra.mxu0 0
    %516 = vmatprep.subr.bf16.mxu0 0
    %517 = vmatpush2.bf16.msra.mxu0 0
    %518 = vmatprep.subr.bf16.mxu0 0
    %519 = vmatpush2.bf16.msra.mxu0 0
    %520 = vmatprep.subr.bf16.mxu0 0
    %521 = vmatpush2.bf16.msra.mxu0 0
    %522 = vmatprep.subr.bf16.mxu0 0
    %523 = vmatpush2.bf16.msra.mxu0 0
    %524 = vmatprep.subr.bf16.mxu0 0
    %525 = vmatpush2.bf16.msra.mxu0 0
    %526 = vmatprep.mubr.bf16.mxu0 0
    %527 = vmatmul.mubr.bf16.gmra.mxu0 %v399
    %v528 = vpop.f32.mrf.mxu0
    %v529 = vadd.f32 0.0, %v528
    %v530 = vpop.f32.mrf.mxu0
    %v531 = vpop.f32.mrf.mxu0
    %v532 = vadd.f32 0.0, %v531
    %v533 = vpop.f32.mrf.mxu0
    %534 = vmatprep.mubr.bf16.mxu0 0
    %535 = vmatmul.mubr.bf16.gmra.mxu0 %v402
    %v536 = vpop.f32.mrf.mxu0
    %v537 = vadd.f32 0.0, %v536
    %v538 = vpop.f32.mrf.mxu0
    %v539 = vpop.f32.mrf.mxu0
    %v540 = vadd.f32 0.0, %v539
    %v541 = vpop.f32.mrf.mxu0
    %542 = vmatprep.mubr.bf16.mxu0 0
    %543 = vmatmul.mubr.bf16.gmra.mxu0 %v405
    %v544 = vpop.f32.mrf.mxu0
    %v545 = vadd.f32 0.0, %v544
    %v546 = vpop.f32.mrf.mxu0
    %v547 = vpop.f32.mrf.mxu0
    %v548 = vadd.f32 0.0, %v547
    %v549 = vpop.f32.mrf.mxu0
    %550 = vmatprep.mubr.bf16.mxu0 0
    %551 = vmatmul.mubr.bf16.gmra.mxu0 %v408
    %v552 = vpop.f32.mrf.mxu0
    %v553 = vadd.f32 0.0, %v552
    %v554 = vpop.f32.mrf.mxu0
    %v555 = vpop.f32.mrf.mxu0
    %v556 = vadd.f32 0.0, %v555
    %v557 = vpop.f32.mrf.mxu0
    %558 = vmatprep.mubr.bf16.mxu0 0
    %559 = vmatmul.mubr.bf16.gmra.mxu0 %v411
    %v560 = vpop.f32.mrf.mxu0
    %v561 = vadd.f32 0.0, %v560
    %v562 = vpop.f32.mrf.mxu0
    %v563 = vpop.f32.mrf.mxu0
    %v564 = vadd.f32 0.0, %v563
    %v565 = vpop.f32.mrf.mxu0
    %566 = vmatprep.mubr.bf16.mxu0 0
    %567 = vmatmul.mubr.bf16.gmra.mxu0 %v414
    %v568 = vpop.f32.mrf.mxu0
    %v569 = vadd.f32 0.0, %v568
    %v570 = vpop.f32.mrf.mxu0
    %v571 = vpop.f32.mrf.mxu0
    %v572 = vadd.f32 0.0, %v571
    %v573 = vpop.f32.mrf.mxu0
    %574 = vmatprep.mubr.bf16.mxu0 0
    %575 = vmatmul.mubr.bf16.gmra.mxu0 %v417
    %v576 = vpop.f32.mrf.mxu0
    %v577 = vadd.f32 0.0, %v576
    %v578 = vpop.f32.mrf.mxu0
    %v579 = vpop.f32.mrf.mxu0
    %v580 = vadd.f32 0.0, %v579
    %v581 = vpop.f32.mrf.mxu0
    %582 = vmatprep.mubr.bf16.mxu0 0
    %583 = vmatmul.mubr.bf16.gmra.mxu0 %v420
    %v584 = vpop.f32.mrf.mxu0
    %v585 = vadd.f32 0.0, %v584
    %v586 = vpop.f32.mrf.mxu0
    %v587 = vpop.f32.mrf.mxu0
    %v588 = vadd.f32 0.0, %v587
    %v589 = vpop.f32.mrf.mxu0
    %590 = vmatprep.mubr.bf16.mxu0 0
    %591 = vmatmul.mubr.bf16.gmra.mxu0 %v423
    %v592 = vpop.f32.mrf.mxu0
    %v593 = vadd.f32 0.0, %v592
    %v594 = vpop.f32.mrf.mxu0
    %v595 = vpop.f32.mrf.mxu0
    %v596 = vadd.f32 0.0, %v595
    %v597 = vpop.f32.mrf.mxu0
    %598 = vmatprep.mubr.bf16.mxu0 0
    %599 = vmatmul.mubr.bf16.gmra.mxu0 %v426
    %v600 = vpop.f32.mrf.mxu0
    %v601 = vadd.f32 0.0, %v600
    %v602 = vpop.f32.mrf.mxu0
    %v603 = vpop.f32.mrf.mxu0
    %v604 = vadd.f32 0.0, %v603
    %v605 = vpop.f32.mrf.mxu0
    %606 = vmatprep.mubr.bf16.mxu0 0
    %607 = vmatmul.mubr.bf16.gmra.mxu0 %v429
    %v608 = vpop.f32.mrf.mxu0
    %v609 = vadd.f32 0.0, %v608
    %v610 = vpop.f32.mrf.mxu0
    %v611 = vpop.f32.mrf.mxu0
    %v612 = vadd.f32 0.0, %v611
    %v613 = vpop.f32.mrf.mxu0
    %614 = vmatprep.mubr.bf16.mxu0 0
    %615 = vmatmul.mubr.bf16.gmra.mxu0 %v432
    %v616 = vpop.f32.mrf.mxu0
    %v617 = vadd.f32 0.0, %v616
    %v618 = vpop.f32.mrf.mxu0
    %v619 = vpop.f32.mrf.mxu0
    %v620 = vadd.f32 0.0, %v619
    %v621 = vpop.f32.mrf.mxu0
    %622 = vmatprep.mubr.bf16.mxu0 0
    %623 = vmatmul.mubr.bf16.gmra.mxu0 %v435
    %v624 = vpop.f32.mrf.mxu0
    %v625 = vadd.f32 0.0, %v624
    %v626 = vpop.f32.mrf.mxu0
    %v627 = vpop.f32.mrf.mxu0
    %v628 = vadd.f32 0.0, %v627
    %v629 = vpop.f32.mrf.mxu0
    %630 = vmatprep.mubr.bf16.mxu0 0
    %631 = vmatmul.mubr.bf16.gmra.mxu0 %v438
    %v632 = vpop.f32.mrf.mxu0
    %v633 = vadd.f32 0.0, %v632
    %v634 = vpop.f32.mrf.mxu0
    %v635 = vpop.f32.mrf.mxu0
    %v636 = vadd.f32 0.0, %v635
    %v637 = vpop.f32.mrf.mxu0
    %638 = vmatprep.mubr.bf16.mxu0 0
    %639 = vmatmul.mubr.bf16.gmra.mxu0 %v441
    %v640 = vpop.f32.mrf.mxu0
    %v641 = vadd.f32 0.0, %v640
    %v642 = vpop.f32.mrf.mxu0
    %v643 = vpop.f32.mrf.mxu0
    %v644 = vadd.f32 0.0, %v643
    %v645 = vpop.f32.mrf.mxu0
    %646 = vmatprep.mubr.bf16.mxu0 0
    %647 = vmatmul.mubr.bf16.gmra.mxu0 %v444
    %v648 = vpop.f32.mrf.mxu0
    %v649 = vadd.f32 0.0, %v648
    %v650 = vpop.f32.mrf.mxu0
    %v651 = vpop.f32.mrf.mxu0
    %v652 = vadd.f32 0.0, %v651
    %v653 = vpop.f32.mrf.mxu0
    %654 = vmatprep.mubr.bf16.mxu0 0
    %655 = vmatmul.mubr.bf16.gmra.mxu0 %v447
    %v656 = vpop.f32.mrf.mxu0
    %v657 = vadd.f32 0.0, %v656
    %v658 = vpop.f32.mrf.mxu0
    %v659 = vpop.f32.mrf.mxu0
    %v660 = vadd.f32 0.0, %v659
    %v661 = vpop.f32.mrf.mxu0
    %662 = vmatprep.mubr.bf16.mxu0 0
    %663 = vmatmul.mubr.bf16.gmra.mxu0 %v450
    %v664 = vpop.f32.mrf.mxu0
    %v665 = vadd.f32 0.0, %v664
    %v666 = vpop.f32.mrf.mxu0
    %v667 = vpop.f32.mrf.mxu0
    %v668 = vadd.f32 0.0, %v667
    %v669 = vpop.f32.mrf.mxu0
    %670 = vmatprep.mubr.bf16.mxu0 0
    %671 = vmatmul.mubr.bf16.gmra.mxu0 %v453
    %v672 = vpop.f32.mrf.mxu0
    %v673 = vadd.f32 0.0, %v672
    %v674 = vpop.f32.mrf.mxu0
    %v675 = vpop.f32.mrf.mxu0
    %v676 = vadd.f32 0.0, %v675
    %v677 = vpop.f32.mrf.mxu0
    %678 = vmatprep.mubr.bf16.mxu0 0
    %679 = vmatmul.mubr.bf16.gmra.mxu0 %v456
    %v680 = vpop.f32.mrf.mxu0
    %v681 = vadd.f32 0.0, %v680
    %v682 = vpop.f32.mrf.mxu0
    %v683 = vpop.f32.mrf.mxu0
    %v684 = vadd.f32 0.0, %v683
    %v685 = vpop.f32.mrf.mxu0
    %686 = vmatprep.mubr.bf16.mxu0 0
    %687 = vmatmul.mubr.bf16.gmra.mxu0 %v459
    %v688 = vpop.f32.mrf.mxu0
    %v689 = vadd.f32 0.0, %v688
    %v690 = vpop.f32.mrf.mxu0
    %v691 = vpop.f32.mrf.mxu0
    %v692 = vadd.f32 0.0, %v691
    %v693 = vpop.f32.mrf.mxu0
    %694 = vmatprep.mubr.bf16.mxu0 0
    %695 = vmatmul.mubr.bf16.gmra.mxu0 %v462
    %v696 = vpop.f32.mrf.mxu0
    %v697 = vadd.f32 0.0, %v696
    %v698 = vpop.f32.mrf.mxu0
    %v699 = vpop.f32.mrf.mxu0
    %v700 = vadd.f32 0.0, %v699
    %v701 = vpop.f32.mrf.mxu0
    %702 = vmatprep.mubr.bf16.mxu0 0
    %703 = vmatmul.mubr.bf16.gmra.mxu0 %v465
    %v704 = vpop.f32.mrf.mxu0
    %v705 = vadd.f32 0.0, %v704
    %v706 = vpop.f32.mrf.mxu0
    %v707 = vpop.f32.mrf.mxu0
    %v708 = vadd.f32 0.0, %v707
    %v709 = vpop.f32.mrf.mxu0
    %710 = vmatprep.mubr.bf16.mxu0 0
    %711 = vmatmul.mubr.bf16.gmra.mxu0 %v468
    %v712 = vpop.f32.mrf.mxu0
    %v713 = vadd.f32 0.0, %v712
    %v714 = vpop.f32.mrf.mxu0
    %v715 = vpop.f32.mrf.mxu0
    %v716 = vadd.f32 0.0, %v715
    %v717 = vpop.f32.mrf.mxu0
    %718 = vmatprep.mubr.bf16.mxu0 0
    %719 = vmatmul.mubr.bf16.gmra.mxu0 %v471
    %v720 = vpop.f32.mrf.mxu0
    %v721 = vadd.f32 0.0, %v720
    %v722 = vpop.f32.mrf.mxu0
    %v723 = vpop.f32.mrf.mxu0
    %v724 = vadd.f32 0.0, %v723
    %v725 = vpop.f32.mrf.mxu0
    %726 = vmatprep.mubr.bf16.mxu0 0
    %727 = vmatmul.mubr.bf16.gmra.mxu0 %v474
    %v728 = vpop.f32.mrf.mxu0
    %v729 = vadd.f32 0.0, %v728
    %v730 = vpop.f32.mrf.mxu0
    %v731 = vpop.f32.mrf.mxu0
    %v732 = vadd.f32 0.0, %v731
    %v733 = vpop.f32.mrf.mxu0
    %734 = vmatprep.mubr.bf16.mxu0 0
    %735 = vmatmul.mubr.bf16.gmra.mxu0 %v477
    %v736 = vpop.f32.mrf.mxu0
    %v737 = vadd.f32 0.0, %v736
    %v738 = vpop.f32.mrf.mxu0
    %v739 = vpop.f32.mrf.mxu0
    %v740 = vadd.f32 0.0, %v739
    %v741 = vpop.f32.mrf.mxu0
    %742 = vmatprep.mubr.bf16.mxu0 0
    %743 = vmatmul.mubr.bf16.gmra.mxu0 %v480
    %v744 = vpop.f32.mrf.mxu0
    %v745 = vadd.f32 0.0, %v744
    %v746 = vpop.f32.mrf.mxu0
    %v747 = vpop.f32.mrf.mxu0
    %v748 = vadd.f32 0.0, %v747
    %v749 = vpop.f32.mrf.mxu0
    %750 = vmatprep.mubr.bf16.mxu0 0
    %751 = vmatmul.mubr.bf16.gmra.mxu0 %v483
    %v752 = vpop.f32.mrf.mxu0
    %v753 = vadd.f32 0.0, %v752
    %v754 = vpop.f32.mrf.mxu0
    %v755 = vpop.f32.mrf.mxu0
    %v756 = vadd.f32 0.0, %v755
    %v757 = vpop.f32.mrf.mxu0
    %758 = vmatprep.mubr.bf16.mxu0 0
    %759 = vmatmul.mubr.bf16.gmra.mxu0 %v486
    %v760 = vpop.f32.mrf.mxu0
    %v761 = vadd.f32 0.0, %v760
    %v762 = vpop.f32.mrf.mxu0
    %v763 = vpop.f32.mrf.mxu0
    %v764 = vadd.f32 0.0, %v763
    %v765 = vpop.f32.mrf.mxu0
    %766 = vmatprep.mubr.bf16.mxu0 0
    %767 = vmatmul.mubr.bf16.gmra.mxu0 %v489
    %v768 = vpop.f32.mrf.mxu0
    %v769 = vadd.f32 0.0, %v768
    %v770 = vpop.f32.mrf.mxu0
    %v771 = vpop.f32.mrf.mxu0
    %v772 = vadd.f32 0.0, %v771
    %v773 = vpop.f32.mrf.mxu0
    %774 = vmatprep.mubr.bf16.mxu0 0
    %775 = vmatmul.mubr.bf16.gmra.mxu0 %v492
    %v776 = vpop.f32.mrf.mxu0
    %v777 = vadd.f32 0.0, %v776
    %v778 = vpop.f32.mrf.mxu0
    %v779 = vpop.f32.mrf.mxu0
    %v780 = vadd.f32 0.0, %v779
    %v781 = vpop.f32.mrf.mxu0
    %782 = vdwg.mxu0
    %vm783 = vcmask 261120
    %v784 = vsel %vm783, %v529, 0.0
    %v785 = vsel %vm783, %v532, 0.0
    %v786 = vadd.f32 %v784, %v785
    %v787 = vsel %vm783, %v537, 0.0
    %v788 = vadd.f32 %v786, %v787
    %v789 = vsel %vm783, %v540, 0.0
    %v790 = vadd.f32 %v788, %v789
    %v791 = vsel %vm783, %v545, 0.0
    %v792 = vadd.f32 %v790, %v791
    %v793 = vsel %vm783, %v548, 0.0
    %v794 = vadd.f32 %v792, %v793
    %v795 = vsel %vm783, %v553, 0.0
    %v796 = vadd.f32 %v794, %v795
    %v797 = vsel %vm783, %v556, 0.0
    %v798 = vadd.f32 %v796, %v797
    %v799 = vsel %vm783, %v561, 0.0
    %v800 = vadd.f32 %v798, %v799
    %v801 = vsel %vm783, %v564, 0.0
    %v802 = vadd.f32 %v800, %v801
    %v803 = vsel %vm783, %v569, 0.0
    %v804 = vadd.f32 %v802, %v803
    %v805 = vsel %vm783, %v572, 0.0
    %v806 = vadd.f32 %v804, %v805
    %v807 = vsel %vm783, %v577, 0.0
    %v808 = vadd.f32 %v806, %v807
    %v809 = vsel %vm783, %v580, 0.0
    %v810 = vadd.f32 %v808, %v809
    %v811 = vsel %vm783, %v585, 0.0
    %v812 = vadd.f32 %v810, %v811
    %v813 = vsel %vm783, %v588, 0.0
    %v814 = vadd.f32 %v812, %v813
    %v815 = vsel %vm783, %v593, 0.0
    %v816 = vadd.f32 %v814, %v815
    %v817 = vsel %vm783, %v596, 0.0
    %v818 = vadd.f32 %v816, %v817
    %v819 = vsel %vm783, %v601, 0.0
    %v820 = vadd.f32 %v818, %v819
    %v821 = vsel %vm783, %v604, 0.0
    %v822 = vadd.f32 %v820, %v821
    %v823 = vsel %vm783, %v609, 0.0
    %v824 = vadd.f32 %v822, %v823
    %v825 = vsel %vm783, %v612, 0.0
    %v826 = vadd.f32 %v824, %v825
    %v827 = vsel %vm783, %v617, 0.0
    %v828 = vadd.f32 %v826, %v827
    %v829 = vsel %vm783, %v620, 0.0
    %v830 = vadd.f32 %v828, %v829
    %v831 = vsel %vm783, %v625, 0.0
    %v832 = vadd.f32 %v830, %v831
    %v833 = vsel %vm783, %v628, 0.0
    %v834 = vadd.f32 %v832, %v833
    %v835 = vsel %vm783, %v633, 0.0
    %v836 = vadd.f32 %v834, %v835
    %v837 = vsel %vm783, %v636, 0.0
    %v838 = vadd.f32 %v836, %v837
    %v839 = vsel %vm783, %v641, 0.0
    %v840 = vadd.f32 %v838, %v839
    %v841 = vsel %vm783, %v644, 0.0
    %v842 = vadd.f32 %v840, %v841
    %v843 = vsel %vm783, %v649, 0.0
    %v844 = vadd.f32 %v842, %v843
    %v845 = vsel %vm783, %v652, 0.0
    %v846 = vadd.f32 %v844, %v845
    %v847 = vsel %vm783, %v657, 0.0
    %v848 = vadd.f32 %v846, %v847
    %v849 = vsel %vm783, %v660, 0.0
    %v850 = vadd.f32 %v848, %v849
    %v851 = vsel %vm783, %v665, 0.0
    %v852 = vadd.f32 %v850, %v851
    %v853 = vsel %vm783, %v668, 0.0
    %v854 = vadd.f32 %v852, %v853
    %v855 = vsel %vm783, %v673, 0.0
    %v856 = vadd.f32 %v854, %v855
    %v857 = vsel %vm783, %v676, 0.0
    %v858 = vadd.f32 %v856, %v857
    %v859 = vsel %vm783, %v681, 0.0
    %v860 = vadd.f32 %v858, %v859
    %v861 = vsel %vm783, %v684, 0.0
    %v862 = vadd.f32 %v860, %v861
    %v863 = vsel %vm783, %v689, 0.0
    %v864 = vadd.f32 %v862, %v863
    %v865 = vsel %vm783, %v692, 0.0
    %v866 = vadd.f32 %v864, %v865
    %v867 = vsel %vm783, %v697, 0.0
    %v868 = vadd.f32 %v866, %v867
    %v869 = vsel %vm783, %v700, 0.0
    %v870 = vadd.f32 %v868, %v869
    %v871 = vsel %vm783, %v705, 0.0
    %v872 = vadd.f32 %v870, %v871
    %v873 = vsel %vm783, %v708, 0.0
    %v874 = vadd.f32 %v872, %v873
    %v875 = vsel %vm783, %v713, 0.0
    %v876 = vadd.f32 %v874, %v875
    %v877 = vsel %vm783, %v716, 0.0
    %v878 = vadd.f32 %v876, %v877
    %v879 = vsel %vm783, %v721, 0.0
    %v880 = vadd.f32 %v878, %v879
    %v881 = vsel %vm783, %v724, 0.0
    %v882 = vadd.f32 %v880, %v881
    %v883 = vsel %vm783, %v729, 0.0
    %v884 = vadd.f32 %v882, %v883
    %v885 = vsel %vm783, %v732, 0.0
    %v886 = vadd.f32 %v884, %v885
    %v887 = vsel %vm783, %v737, 0.0
    %v888 = vadd.f32 %v886, %v887
    %v889 = vsel %vm783, %v740, 0.0
    %v890 = vadd.f32 %v888, %v889
    %v891 = vsel %vm783, %v745, 0.0
    %v892 = vadd.f32 %v890, %v891
    %v893 = vsel %vm783, %v748, 0.0
    %v894 = vadd.f32 %v892, %v893
    %v895 = vsel %vm783, %v753, 0.0
    %v896 = vadd.f32 %v894, %v895
    %v897 = vsel %vm783, %v756, 0.0
    %v898 = vadd.f32 %v896, %v897
    %v899 = vsel %vm783, %v761, 0.0
    %v900 = vadd.f32 %v898, %v899
    %v901 = vsel %vm783, %v764, 0.0
    %v902 = vadd.f32 %v900, %v901
    %v903 = vsel %vm783, %v769, 0.0
    %v904 = vadd.f32 %v902, %v903
    %v905 = vsel %vm783, %v772, 0.0
    %v906 = vadd.f32 %v904, %v905
    %v907 = vsel %vm783, %v777, 0.0
    %v908 = vadd.f32 %v906, %v907
    %v909 = vsel %vm783, %v780, 0.0
    %v910 = vadd.f32 %v908, %v909
    %v911 = vrot.slane %v910, 4
    %v912 = vadd.f32 %v910, %v911
    %v913 = vrot.slane %v912, 2
    %v914 = vadd.f32 %v912, %v913
    %v915 = vrot.slane %v914, 1
    %v916 = vadd.f32 %v914, %v915
    %v917 = vrcp.pop 512.0
    %v918 = vmul.f32 %v916, %v917
    %v919 = vsub.f32 %v529, %v918
    %v920 = vsub.f32 %v532, %v918
    %v921 = vsub.f32 %v537, %v918
    %v922 = vsub.f32 %v540, %v918
    %v923 = vsub.f32 %v545, %v918
    %v924 = vsub.f32 %v548, %v918
    %v925 = vsub.f32 %v553, %v918
    %v926 = vsub.f32 %v556, %v918
    %v927 = vsub.f32 %v561, %v918
    %v928 = vsub.f32 %v564, %v918
    %v929 = vsub.f32 %v569, %v918
    %v930 = vsub.f32 %v572, %v918
    %v931 = vsub.f32 %v577, %v918
    %v932 = vsub.f32 %v580, %v918
    %v933 = vsub.f32 %v585, %v918
    %v934 = vsub.f32 %v588, %v918
    %v935 = vsub.f32 %v593, %v918
    %v936 = vsub.f32 %v596, %v918
    %v937 = vsub.f32 %v601, %v918
    %v938 = vsub.f32 %v604, %v918
    %v939 = vsub.f32 %v609, %v918
    %v940 = vsub.f32 %v612, %v918
    %v941 = vsub.f32 %v617, %v918
    %v942 = vsub.f32 %v620, %v918
    %v943 = vsub.f32 %v625, %v918
    %v944 = vsub.f32 %v628, %v918
    %v945 = vsub.f32 %v633, %v918
    %v946 = vsub.f32 %v636, %v918
    %v947 = vsub.f32 %v641, %v918
    %v948 = vsub.f32 %v644, %v918
    %v949 = vsub.f32 %v649, %v918
    %v950 = vsub.f32 %v652, %v918
    %v951 = vsub.f32 %v657, %v918
    %v952 = vsub.f32 %v660, %v918
    %v953 = vsub.f32 %v665, %v918
    %v954 = vsub.f32 %v668, %v918
    %v955 = vsub.f32 %v673, %v918
    %v956 = vsub.f32 %v676, %v918
    %v957 = vsub.f32 %v681, %v918
    %v958 = vsub.f32 %v684, %v918
    %v959 = vsub.f32 %v689, %v918
    %v960 = vsub.f32 %v692, %v918
    %v961 = vsub.f32 %v697, %v918
    %v962 = vsub.f32 %v700, %v918
    %v963 = vsub.f32 %v705, %v918
    %v964 = vsub.f32 %v708, %v918
    %v965 = vsub.f32 %v713, %v918
    %v966 = vsub.f32 %v716, %v918
    %v967 = vsub.f32 %v721, %v918
    %v968 = vsub.f32 %v724, %v918
    %v969 = vsub.f32 %v729, %v918
    %v970 = vsub.f32 %v732, %v918
    %v971 = vsub.f32 %v737, %v918
    %v972 = vsub.f32 %v740, %v918
    %v973 = vsub.f32 %v745, %v918
    %v974 = vsub.f32 %v748, %v918
    %v975 = vsub.f32 %v753, %v918
    %v976 = vsub.f32 %v756, %v918
    %v977 = vsub.f32 %v761, %v918
    %v978 = vsub.f32 %v764, %v918
    %v979 = vsub.f32 %v769, %v918
    %v980 = vsub.f32 %v772, %v918
    %v981 = vsub.f32 %v777, %v918
    %v982 = vsub.f32 %v780, %v918
    %v983 = vmul.f32 %v919, %v919
    %v984 = vmul.f32 %v920, %v920
    %v985 = vmul.f32 %v921, %v921
    %v986 = vmul.f32 %v922, %v922
    %v987 = vmul.f32 %v923, %v923
    %v988 = vmul.f32 %v924, %v924
    %v989 = vmul.f32 %v925, %v925
    %v990 = vmul.f32 %v926, %v926
    %v991 = vmul.f32 %v927, %v927
    %v992 = vmul.f32 %v928, %v928
    %v993 = vmul.f32 %v929, %v929
    %v994 = vmul.f32 %v930, %v930
    %v995 = vmul.f32 %v931, %v931
    %v996 = vmul.f32 %v932, %v932
    %v997 = vmul.f32 %v933, %v933
    %v998 = vmul.f32 %v934, %v934
    %v999 = vmul.f32 %v935, %v935
    %v1000 = vmul.f32 %v936, %v936
    %v1001 = vmul.f32 %v937, %v937
    %v1002 = vmul.f32 %v938, %v938
    %v1003 = vmul.f32 %v939, %v939
    %v1004 = vmul.f32 %v940, %v940
    %v1005 = vmul.f32 %v941, %v941
    %v1006 = vmul.f32 %v942, %v942
    %v1007 = vmul.f32 %v943, %v943
    %v1008 = vmul.f32 %v944, %v944
    %v1009 = vmul.f32 %v945, %v945
    %v1010 = vmul.f32 %v946, %v946
    %v1011 = vmul.f32 %v947, %v947
    %v1012 = vmul.f32 %v948, %v948
    %v1013 = vmul.f32 %v949, %v949
    %v1014 = vmul.f32 %v950, %v950
    %v1015 = vmul.f32 %v951, %v951
    %v1016 = vmul.f32 %v952, %v952
    %v1017 = vmul.f32 %v953, %v953
    %v1018 = vmul.f32 %v954, %v954
    %v1019 = vmul.f32 %v955, %v955
    %v1020 = vmul.f32 %v956, %v956
    %v1021 = vmul.f32 %v957, %v957
    %v1022 = vmul.f32 %v958, %v958
    %v1023 = vmul.f32 %v959, %v959
    %v1024 = vmul.f32 %v960, %v960
    %v1025 = vmul.f32 %v961, %v961
    %v1026 = vmul.f32 %v962, %v962
    %v1027 = vmul.f32 %v963, %v963
    %v1028 = vmul.f32 %v964, %v964
    %v1029 = vmul.f32 %v965, %v965
    %v1030 = vmul.f32 %v966, %v966
    %v1031 = vmul.f32 %v967, %v967
    %v1032 = vmul.f32 %v968, %v968
    %v1033 = vmul.f32 %v969, %v969
    %v1034 = vmul.f32 %v970, %v970
    %v1035 = vmul.f32 %v971, %v971
    %v1036 = vmul.f32 %v972, %v972
    %v1037 = vmul.f32 %v973, %v973
    %v1038 = vmul.f32 %v974, %v974
    %v1039 = vmul.f32 %v975, %v975
    %v1040 = vmul.f32 %v976, %v976
    %v1041 = vmul.f32 %v977, %v977
    %v1042 = vmul.f32 %v978, %v978
    %v1043 = vmul.f32 %v979, %v979
    %v1044 = vmul.f32 %v980, %v980
    %v1045 = vmul.f32 %v981, %v981
    %v1046 = vmul.f32 %v982, %v982
    %v1047 = vsel %vm783, %v983, 0.0
    %v1048 = vsel %vm783, %v984, 0.0
    %v1049 = vadd.f32 %v1047, %v1048
    %v1050 = vsel %vm783, %v985, 0.0
    %v1051 = vadd.f32 %v1049, %v1050
    %v1052 = vsel %vm783, %v986, 0.0
    %v1053 = vadd.f32 %v1051, %v1052
    %v1054 = vsel %vm783, %v987, 0.0
    %v1055 = vadd.f32 %v1053, %v1054
    %v1056 = vsel %vm783, %v988, 0.0
    %v1057 = vadd.f32 %v1055, %v1056
    %v1058 = vsel %vm783, %v989, 0.0
    %v1059 = vadd.f32 %v1057, %v1058
    %v1060 = vsel %vm783, %v990, 0.0
    %v1061 = vadd.f32 %v1059, %v1060
    %v1062 = vsel %vm783, %v991, 0.0
    %v1063 = vadd.f32 %v1061, %v1062
    %v1064 = vsel %vm783, %v992, 0.0
    %v1065 = vadd.f32 %v1063, %v1064
    %v1066 = vsel %vm783, %v993, 0.0
    %v1067 = vadd.f32 %v1065, %v1066
    %v1068 = vsel %vm783, %v994, 0.0
    %v1069 = vadd.f32 %v1067, %v1068
    %v1070 = vsel %vm783, %v995, 0.0
    %v1071 = vadd.f32 %v1069, %v1070
    %v1072 = vsel %vm783, %v996, 0.0
    %v1073 = vadd.f32 %v1071, %v1072
    %v1074 = vsel %vm783, %v997, 0.0
    %v1075 = vadd.f32 %v1073, %v1074
    %v1076 = vsel %vm783, %v998, 0.0
    %v1077 = vadd.f32 %v1075, %v1076
    %v1078 = vsel %vm783, %v999, 0.0
    %v1079 = vadd.f32 %v1077, %v1078
    %v1080 = vsel %vm783, %v1000, 0.0
    %v1081 = vadd.f32 %v1079, %v1080
    %v1082 = vsel %vm783, %v1001, 0.0
    %v1083 = vadd.f32 %v1081, %v1082
    %v1084 = vsel %vm783, %v1002, 0.0
    %v1085 = vadd.f32 %v1083, %v1084
    %v1086 = vsel %vm783, %v1003, 0.0
    %v1087 = vadd.f32 %v1085, %v1086
    %v1088 = vsel %vm783, %v1004, 0.0
    %v1089 = vadd.f32 %v1087, %v1088
    %v1090 = vsel %vm783, %v1005, 0.0
    %v1091 = vadd.f32 %v1089, %v1090
    %v1092 = vsel %vm783, %v1006, 0.0
    %v1093 = vadd.f32 %v1091, %v1092
    %v1094 = vsel %vm783, %v1007, 0.0
    %v1095 = vadd.f32 %v1093, %v1094
    %v1096 = vsel %vm783, %v1008, 0.0
    %v1097 = vadd.f32 %v1095, %v1096
    %v1098 = vsel %vm783, %v1009, 0.0
    %v1099 = vadd.f32 %v1097, %v1098
    %v1100 = vsel %vm783, %v1010, 0.0
    %v1101 = vadd.f32 %v1099, %v1100
    %v1102 = vsel %vm783, %v1011, 0.0
    %v1103 = vadd.f32 %v1101, %v1102
    %v1104 = vsel %vm783, %v1012, 0.0
    %v1105 = vadd.f32 %v1103, %v1104
    %v1106 = vsel %vm783, %v1013, 0.0
    %v1107 = vadd.f32 %v1105, %v1106
    %v1108 = vsel %vm783, %v1014, 0.0
    %v1109 = vadd.f32 %v1107, %v1108
    %v1110 = vsel %vm783, %v1015, 0.0
    %v1111 = vadd.f32 %v1109, %v1110
    %v1112 = vsel %vm783, %v1016, 0.0
    %v1113 = vadd.f32 %v1111, %v1112
    %v1114 = vsel %vm783, %v1017, 0.0
    %v1115 = vadd.f32 %v1113, %v1114
    %v1116 = vsel %vm783, %v1018, 0.0
    %v1117 = vadd.f32 %v1115, %v1116
    %v1118 = vsel %vm783, %v1019, 0.0
    %v1119 = vadd.f32 %v1117, %v1118
    %v1120 = vsel %vm783, %v1020, 0.0
    %v1121 = vadd.f32 %v1119, %v1120
    %v1122 = vsel %vm783, %v1021, 0.0
    %v1123 = vadd.f32 %v1121, %v1122
    %v1124 = vsel %vm783, %v1022, 0.0
    %v1125 = vadd.f32 %v1123, %v1124
    %v1126 = vsel %vm783, %v1023, 0.0
    %v1127 = vadd.f32 %v1125, %v1126
    %v1128 = vsel %vm783, %v1024, 0.0
    %v1129 = vadd.f32 %v1127, %v1128
    %v1130 = vsel %vm783, %v1025, 0.0
    %v1131 = vadd.f32 %v1129, %v1130
    %v1132 = vsel %vm783, %v1026, 0.0
    %v1133 = vadd.f32 %v1131, %v1132
    %v1134 = vsel %vm783, %v1027, 0.0
    %v1135 = vadd.f32 %v1133, %v1134
    %v1136 = vsel %vm783, %v1028, 0.0
    %v1137 = vadd.f32 %v1135, %v1136
    %v1138 = vsel %vm783, %v1029, 0.0
    %v1139 = vadd.f32 %v1137, %v1138
    %v1140 = vsel %vm783, %v1030, 0.0
    %v1141 = vadd.f32 %v1139, %v1140
    %v1142 = vsel %vm783, %v1031, 0.0
    %v1143 = vadd.f32 %v1141, %v1142
    %v1144 = vsel %vm783, %v1032, 0.0
    %v1145 = vadd.f32 %v1143, %v1144
    %v1146 = vsel %vm783, %v1033, 0.0
    %v1147 = vadd.f32 %v1145, %v1146
    %v1148 = vsel %vm783, %v1034, 0.0
    %v1149 = vadd.f32 %v1147, %v1148
    %v1150 = vsel %vm783, %v1035, 0.0
    %v1151 = vadd.f32 %v1149, %v1150
    %v1152 = vsel %vm783, %v1036, 0.0
    %v1153 = vadd.f32 %v1151, %v1152
    %v1154 = vsel %vm783, %v1037, 0.0
    %v1155 = vadd.f32 %v1153, %v1154
    %v1156 = vsel %vm783, %v1038, 0.0
    %v1157 = vadd.f32 %v1155, %v1156
    %v1158 = vsel %vm783, %v1039, 0.0
    %v1159 = vadd.f32 %v1157, %v1158
    %v1160 = vsel %vm783, %v1040, 0.0
    %v1161 = vadd.f32 %v1159, %v1160
    %v1162 = vsel %vm783, %v1041, 0.0
    %v1163 = vadd.f32 %v1161, %v1162
    %v1164 = vsel %vm783, %v1042, 0.0
    %v1165 = vadd.f32 %v1163, %v1164
    %v1166 = vsel %vm783, %v1043, 0.0
    %v1167 = vadd.f32 %v1165, %v1166
    %v1168 = vsel %vm783, %v1044, 0.0
    %v1169 = vadd.f32 %v1167, %v1168
    %v1170 = vsel %vm783, %v1045, 0.0
    %v1171 = vadd.f32 %v1169, %v1170
    %v1172 = vsel %vm783, %v1046, 0.0
    %v1173 = vadd.f32 %v1171, %v1172
    %v1174 = vrot.slane %v1173, 4
    %v1175 = vadd.f32 %v1173, %v1174
    %v1176 = vrot.slane %v1175, 2
    %v1177 = vadd.f32 %v1175, %v1176
    %v1178 = vrot.slane %v1177, 1
    %v1179 = vadd.f32 %v1177, %v1178
    %v1180 = vmul.f32 %v1179, %v917
    %v1181 = vld [vmem:[%s2] sm:$0x1]
    %v1182 = vadd.f32 %v1180, 1e-05
    %v1183 = vrsqrt.pop %v1182
    %v1184 = vmul.f32 %v1181, %v1183
    %v1186 = vlaneseq
    %v1187 = vshrl.u32 %v1186, 7
    %v1188 = vsub.s32 0, %v1187
    %v1189 = vrot.slane %v1184, %v1188
    %v1191 = vmul.f32 %v919, %v1189
    %v1192 = vmul.f32 %v920, %v1189
    %v1193 = vmul.f32 %v921, %v1189
    %v1194 = vmul.f32 %v922, %v1189
    %v1195 = vmul.f32 %v923, %v1189
    %v1196 = vmul.f32 %v924, %v1189
    %v1197 = vmul.f32 %v925, %v1189
    %v1198 = vmul.f32 %v926, %v1189
    %v1199 = vmul.f32 %v927, %v1189
    %v1200 = vmul.f32 %v928, %v1189
    %v1201 = vmul.f32 %v929, %v1189
    %v1202 = vmul.f32 %v930, %v1189
    %v1203 = vmul.f32 %v931, %v1189
    %v1204 = vmul.f32 %v932, %v1189
    %v1205 = vmul.f32 %v933, %v1189
    %v1206 = vmul.f32 %v934, %v1189
    %v1207 = vmul.f32 %v935, %v1189
    %v1208 = vmul.f32 %v936, %v1189
    %v1209 = vmul.f32 %v937, %v1189
    %v1210 = vmul.f32 %v938, %v1189
    %v1211 = vmul.f32 %v939, %v1189
    %v1212 = vmul.f32 %v940, %v1189
    %v1213 = vmul.f32 %v941, %v1189
    %v1214 = vmul.f32 %v942, %v1189
    %v1215 = vmul.f32 %v943, %v1189
    %v1216 = vmul.f32 %v944, %v1189
    %v1217 = vmul.f32 %v945, %v1189
    %v1218 = vmul.f32 %v946, %v1189
    %v1219 = vmul.f32 %v947, %v1189
    %v1220 = vmul.f32 %v948, %v1189
    %v1221 = vmul.f32 %v949, %v1189
    %v1222 = vmul.f32 %v950, %v1189
    %v1223 = vmul.f32 %v951, %v1189
    %v1224 = vmul.f32 %v952, %v1189
    %v1225 = vmul.f32 %v953, %v1189
    %v1226 = vmul.f32 %v954, %v1189
    %v1227 = vmul.f32 %v955, %v1189
    %v1228 = vmul.f32 %v956, %v1189
    %v1229 = vmul.f32 %v957, %v1189
    %v1230 = vmul.f32 %v958, %v1189
    %v1231 = vmul.f32 %v959, %v1189
    %v1232 = vmul.f32 %v960, %v1189
    %v1233 = vmul.f32 %v961, %v1189
    %v1234 = vmul.f32 %v962, %v1189
    %v1235 = vmul.f32 %v963, %v1189
    %v1236 = vmul.f32 %v964, %v1189
    %v1237 = vmul.f32 %v965, %v1189
    %v1238 = vmul.f32 %v966, %v1189
    %v1239 = vmul.f32 %v967, %v1189
    %v1240 = vmul.f32 %v968, %v1189
    %v1241 = vmul.f32 %v969, %v1189
    %v1242 = vmul.f32 %v970, %v1189
    %v1243 = vmul.f32 %v971, %v1189
    %v1244 = vmul.f32 %v972, %v1189
    %v1245 = vmul.f32 %v973, %v1189
    %v1246 = vmul.f32 %v974, %v1189
    %v1247 = vmul.f32 %v975, %v1189
    %v1248 = vmul.f32 %v976, %v1189
    %v1249 = vmul.f32 %v977, %v1189
    %v1250 = vmul.f32 %v978, %v1189
    %v1251 = vmul.f32 %v979, %v1189
    %v1252 = vmul.f32 %v980, %v1189
    %v1253 = vmul.f32 %v981, %v1189
    %v1254 = vmul.f32 %v982, %v1189
    %v1255 = vld [vmem:[%s3] sm:$0x1]
    %v1257 = vlaneseq
    %v1258 = vshrl.u32 %v1257, 7
    %v1259 = vsub.s32 0, %v1258
    %v1260 = vrot.slane %v1255, %v1259
    %v1262 = vadd.f32 %v1191, %v1260
    %v1263 = vadd.f32 %v1192, %v1260
    %v1264 = vadd.f32 %v1193, %v1260
    %v1265 = vadd.f32 %v1194, %v1260
    %v1266 = vadd.f32 %v1195, %v1260
    %v1267 = vadd.f32 %v1196, %v1260
    %v1268 = vadd.f32 %v1197, %v1260
    %v1269 = vadd.f32 %v1198, %v1260
    %v1270 = vadd.f32 %v1199, %v1260
    %v1271 = vadd.f32 %v1200, %v1260
    %v1272 = vadd.f32 %v1201, %v1260
    %v1273 = vadd.f32 %v1202, %v1260
    %v1274 = vadd.f32 %v1203, %v1260
    %v1275 = vadd.f32 %v1204, %v1260
    %v1276 = vadd.f32 %v1205, %v1260
    %v1277 = vadd.f32 %v1206, %v1260
    %v1278 = vadd.f32 %v1207, %v1260
    %v1279 = vadd.f32 %v1208, %v1260
    %v1280 = vadd.f32 %v1209, %v1260
    %v1281 = vadd.f32 %v1210, %v1260
    %v1282 = vadd.f32 %v1211, %v1260
    %v1283 = vadd.f32 %v1212, %v1260
    %v1284 = vadd.f32 %v1213, %v1260
    %v1285 = vadd.f32 %v1214, %v1260
    %v1286 = vadd.f32 %v1215, %v1260
    %v1287 = vadd.f32 %v1216, %v1260
    %v1288 = vadd.f32 %v1217, %v1260
    %v1289 = vadd.f32 %v1218, %v1260
    %v1290 = vadd.f32 %v1219, %v1260
    %v1291 = vadd.f32 %v1220, %v1260
    %v1292 = vadd.f32 %v1221, %v1260
    %v1293 = vadd.f32 %v1222, %v1260
    %v1294 = vadd.f32 %v1223, %v1260
    %v1295 = vadd.f32 %v1224, %v1260
    %v1296 = vadd.f32 %v1225, %v1260
    %v1297 = vadd.f32 %v1226, %v1260
    %v1298 = vadd.f32 %v1227, %v1260
    %v1299 = vadd.f32 %v1228, %v1260
    %v1300 = vadd.f32 %v1229, %v1260
    %v1301 = vadd.f32 %v1230, %v1260
    %v1302 = vadd.f32 %v1231, %v1260
    %v1303 = vadd.f32 %v1232, %v1260
    %v1304 = vadd.f32 %v1233, %v1260
    %v1305 = vadd.f32 %v1234, %v1260
    %v1306 = vadd.f32 %v1235, %v1260
    %v1307 = vadd.f32 %v1236, %v1260
    %v1308 = vadd.f32 %v1237, %v1260
    %v1309 = vadd.f32 %v1238, %v1260
    %v1310 = vadd.f32 %v1239, %v1260
    %v1311 = vadd.f32 %v1240, %v1260
    %v1312 = vadd.f32 %v1241, %v1260
    %v1313 = vadd.f32 %v1242, %v1260
    %v1314 = vadd.f32 %v1243, %v1260
    %v1315 = vadd.f32 %v1244, %v1260
    %v1316 = vadd.f32 %v1245, %v1260
    %v1317 = vadd.f32 %v1246, %v1260
    %v1318 = vadd.f32 %v1247, %v1260
    %v1319 = vadd.f32 %v1248, %v1260
    %v1320 = vadd.f32 %v1249, %v1260
    %v1321 = vadd.f32 %v1250, %v1260
    %v1322 = vadd.f32 %v1251, %v1260
    %v1323 = vadd.f32 %v1252, %v1260
    %v1324 = vadd.f32 %v1253, %v1260
    %v1325 = vadd.f32 %v1254, %v1260
    %v1326 = vmax.f32 %v1262, 0.0
    %v1327 = vmax.f32 %v1263, 0.0
    %v1328 = vmax.f32 %v1264, 0.0
    %v1329 = vmax.f32 %v1265, 0.0
    %v1330 = vmax.f32 %v1266, 0.0
    %v1331 = vmax.f32 %v1267, 0.0
    %v1332 = vmax.f32 %v1268, 0.0
    %v1333 = vmax.f32 %v1269, 0.0
    %v1334 = vmax.f32 %v1270, 0.0
    %v1335 = vmax.f32 %v1271, 0.0
    %v1336 = vmax.f32 %v1272, 0.0
    %v1337 = vmax.f32 %v1273, 0.0
    %v1338 = vmax.f32 %v1274, 0.0
    %v1339 = vmax.f32 %v1275, 0.0
    %v1340 = vmax.f32 %v1276, 0.0
    %v1341 = vmax.f32 %v1277, 0.0
    %v1342 = vmax.f32 %v1278, 0.0
    %v1343 = vmax.f32 %v1279, 0.0
    %v1344 = vmax.f32 %v1280, 0.0
    %v1345 = vmax.f32 %v1281, 0.0
    %v1346 = vmax.f32 %v1282, 0.0
    %v1347 = vmax.f32 %v1283, 0.0
    %v1348 = vmax.f32 %v1284, 0.0
    %v1349 = vmax.f32 %v1285, 0.0
    %v1350 = vmax.f32 %v1286, 0.0
    %v1351 = vmax.f32 %v1287, 0.0
    %v1352 = vmax.f32 %v1288, 0.0
    %v1353 = vmax.f32 %v1289, 0.0
    %v1354 = vmax.f32 %v1290, 0.0
    %v1355 = vmax.f32 %v1291, 0.0
    %v1356 = vmax.f32 %v1292, 0.0
    %v1357 = vmax.f32 %v1293, 0.0
    %v1358 = vmax.f32 %v1294, 0.0
    %v1359 = vmax.f32 %v1295, 0.0
    %v1360 = vmax.f32 %v1296, 0.0
    %v1361 = vmax.f32 %v1297, 0.0
    %v1362 = vmax.f32 %v1298, 0.0
    %v1363 = vmax.f32 %v1299, 0.0
    %v1364 = vmax.f32 %v1300, 0.0
    %v1365 = vmax.f32 %v1301, 0.0
    %v1366 = vmax.f32 %v1302, 0.0
    %v1367 = vmax.f32 %v1303, 0.0
    %v1368 = vmax.f32 %v1304, 0.0
    %v1369 = vmax.f32 %v1305, 0.0
    %v1370 = vmax.f32 %v1306, 0.0
    %v1371 = vmax.f32 %v1307, 0.0
    %v1372 = vmax.f32 %v1308, 0.0
    %v1373 = vmax.f32 %v1309, 0.0
    %v1374 = vmax.f32 %v1310, 0.0
    %v1375 = vmax.f32 %v1311, 0.0
    %v1376 = vmax.f32 %v1312, 0.0
    %v1377 = vmax.f32 %v1313, 0.0
    %v1378 = vmax.f32 %v1314, 0.0
    %v1379 = vmax.f32 %v1315, 0.0
    %v1380 = vmax.f32 %v1316, 0.0
    %v1381 = vmax.f32 %v1317, 0.0
    %v1382 = vmax.f32 %v1318, 0.0
    %v1383 = vmax.f32 %v1319, 0.0
    %v1384 = vmax.f32 %v1320, 0.0
    %v1385 = vmax.f32 %v1321, 0.0
    %v1386 = vmax.f32 %v1322, 0.0
    %v1387 = vmax.f32 %v1323, 0.0
    %v1388 = vmax.f32 %v1324, 0.0
    %v1389 = vmax.f32 %v1325, 0.0
    %v1390 = vpack.c.bf16 0.0, 0.0
    %v1391 = vpack.c.bf16 %v1326, %v1326
    %v1392 = vpack.c.bf16 %v1327, %v1327
    %v1393 = vpack.c.bf16 %v1328, %v1328
    %v1394 = vpack.c.bf16 %v1329, %v1329
    %v1395 = vpack.c.bf16 %v1330, %v1330
    %v1396 = vpack.c.bf16 %v1331, %v1331
    %v1397 = vpack.c.bf16 %v1332, %v1332
    %v1398 = vpack.c.bf16 %v1333, %v1333
    %v1399 = vpack.c.bf16 %v1334, %v1334
    %v1400 = vpack.c.bf16 %v1335, %v1335
    %v1401 = vpack.c.bf16 %v1336, %v1336
    %v1402 = vpack.c.bf16 %v1337, %v1337
    %v1403 = vpack.c.bf16 %v1338, %v1338
    %v1404 = vpack.c.bf16 %v1339, %v1339
    %v1405 = vpack.c.bf16 %v1340, %v1340
    %v1406 = vpack.c.bf16 %v1341, %v1341
    %v1407 = vpack.c.bf16 %v1342, %v1342
    %v1408 = vpack.c.bf16 %v1343, %v1343
    %v1409 = vpack.c.bf16 %v1344, %v1344
    %v1410 = vpack.c.bf16 %v1345, %v1345
    %v1411 = vpack.c.bf16 %v1346, %v1346
    %v1412 = vpack.c.bf16 %v1347, %v1347
    %v1413 = vpack.c.bf16 %v1348, %v1348
    %v1414 = vpack.c.bf16 %v1349, %v1349
    %v1415 = vpack.c.bf16 %v1350, %v1350
    %v1416 = vpack.c.bf16 %v1351, %v1351
    %v1417 = vpack.c.bf16 %v1352, %v1352
    %v1418 = vpack.c.bf16 %v1353, %v1353
    %v1419 = vpack.c.bf16 %v1354, %v1354
    %v1420 = vpack.c.bf16 %v1355, %v1355
    %v1421 = vpack.c.bf16 %v1356, %v1356
    %v1422 = vpack.c.bf16 %v1357, %v1357
    %v1423 = vpack.c.bf16 %v1358, %v1358
    %v1424 = vpack.c.bf16 %v1359, %v1359
    %v1425 = vpack.c.bf16 %v1360, %v1360
    %v1426 = vpack.c.bf16 %v1361, %v1361
    %v1427 = vpack.c.bf16 %v1362, %v1362
    %v1428 = vpack.c.bf16 %v1363, %v1363
    %v1429 = vpack.c.bf16 %v1364, %v1364
    %v1430 = vpack.c.bf16 %v1365, %v1365
    %v1431 = vpack.c.bf16 %v1366, %v1366
    %v1432 = vpack.c.bf16 %v1367, %v1367
    %v1433 = vpack.c.bf16 %v1368, %v1368
    %v1434 = vpack.c.bf16 %v1369, %v1369
    %v1435 = vpack.c.bf16 %v1370, %v1370
    %v1436 = vpack.c.bf16 %v1371, %v1371
    %v1437 = vpack.c.bf16 %v1372, %v1372
    %v1438 = vpack.c.bf16 %v1373, %v1373
    %v1439 = vpack.c.bf16 %v1374, %v1374
    %v1440 = vpack.c.bf16 %v1375, %v1375
    %v1441 = vpack.c.bf16 %v1376, %v1376
    %v1442 = vpack.c.bf16 %v1377, %v1377
    %v1443 = vpack.c.bf16 %v1378, %v1378
    %v1444 = vpack.c.bf16 %v1379, %v1379
    %v1445 = vpack.c.bf16 %v1380, %v1380
    %v1446 = vpack.c.bf16 %v1381, %v1381
    %v1447 = vpack.c.bf16 %v1382, %v1382
    %v1448 = vpack.c.bf16 %v1383, %v1383
    %v1449 = vpack.c.bf16 %v1384, %v1384
    %v1450 = vpack.c.bf16 %v1385, %v1385
    %v1451 = vpack.c.bf16 %v1386, %v1386
    %v1452 = vpack.c.bf16 %v1387, %v1387
    %v1453 = vpack.c.bf16 %v1388, %v1388
    %v1454 = vpack.c.bf16 %v1389, %v1389
    %v1455 = vld [vmem:[#allocation5] sm:$0xf]
    %v1456 = vld [vmem:[#allocation5 + $0x4] sm:$0xf]
    %v1457 = vld [vmem:[#allocation5 + $0x8] sm:$0xf]
    %v1458 = vld [vmem:[#allocation5 + $0xc] sm:$0xf]
    %v1459 = vld [vmem:[#allocation5 + $0x10] sm:$0xf]
    %v1460 = vld [vmem:[#allocation5 + $0x14] sm:$0xf]
    %v1461 = vld [vmem:[#allocation5 + $0x18] sm:$0xf]
    %v1462 = vld [vmem:[#allocation5 + $0x1c] sm:$0xf]
    %v1463 = vld [vmem:[#allocation5 + $0x20] sm:$0xf]
    %v1464 = vld [vmem:[#allocation5 + $0x24] sm:$0xf]
    %v1465 = vld [vmem:[#allocation5 + $0x28] sm:$0xf]
    %v1466 = vld [vmem:[#allocation5 + $0x2c] sm:$0xf]
    %v1467 = vld [vmem:[#allocation5 + $0x30] sm:$0xf]
    %v1468 = vld [vmem:[#allocation5 + $0x34] sm:$0xf]
    %v1469 = vld [vmem:[#allocation5 + $0x38] sm:$0xf]
    %v1470 = vld [vmem:[#allocation5 + $0x3c] sm:$0xf]
    %v1471 = vld [vmem:[#allocation5 + $0x40] sm:$0xf]
    %v1472 = vld [vmem:[#allocation5 + $0x44] sm:$0xf]
    %v1473 = vld [vmem:[#allocation5 + $0x48] sm:$0xf]
    %v1474 = vld [vmem:[#allocation5 + $0x4c] sm:$0xf]
    %v1475 = vld [vmem:[#allocation5 + $0x50] sm:$0xf]
    %v1476 = vld [vmem:[#allocation5 + $0x54] sm:$0xf]
    %v1477 = vld [vmem:[#allocation5 + $0x58] sm:$0xf]
    %v1478 = vld [vmem:[#allocation5 + $0x5c] sm:$0xf]
    %v1479 = vld [vmem:[#allocation5 + $0x60] sm:$0xf]
    %v1480 = vld [vmem:[#allocation5 + $0x64] sm:$0xf]
    %v1481 = vld [vmem:[#allocation5 + $0x68] sm:$0xf]
    %v1482 = vld [vmem:[#allocation5 + $0x6c] sm:$0xf]
    %v1483 = vld [vmem:[#allocation5 + $0x70] sm:$0xf]
    %v1484 = vld [vmem:[#allocation5 + $0x74] sm:$0xf]
    %v1485 = vld [vmem:[#allocation5 + $0x78] sm:$0xf]
    %v1486 = vld [vmem:[#allocation5 + $0x7c] sm:$0xf]
    %v1487 = vld [vmem:[#allocation5 + $0x80] sm:$0xf]
    %v1488 = vld [vmem:[#allocation5 + $0x84] sm:$0xf]
    %v1489 = vld [vmem:[#allocation5 + $0x88] sm:$0xf]
    %v1490 = vld [vmem:[#allocation5 + $0x8c] sm:$0xf]
    %v1504 = vunpack.c.l.b16 %v1390
    %v1505 = vunpack.c.l.b16 %v1399
    %v1506 = vunpack.c.l.b16 %v1401
    %v1507 = vunpack.c.l.b16 %v1403
    %v1508 = vunpack.c.l.b16 %v1405
    %v1509 = vunpack.c.l.b16 %v1415
    %v1510 = vunpack.c.l.b16 %v1417
    %v1511 = vunpack.c.l.b16 %v1419
    %v1512 = vunpack.c.l.b16 %v1421
    %v1513 = vunpack.c.l.b16 %v1431
    %v1514 = vunpack.c.l.b16 %v1433
    %v1515 = vunpack.c.l.b16 %v1435
    %v1516 = vunpack.c.l.b16 %v1437
    %v1517 = vpack.c.b16 %v1504, %v1504
    %v1518 = vpack.c.b16 %v1506, %v1505
    %v1519 = vpack.c.b16 %v1508, %v1507
    %v1520 = vpack.c.b16 %v1510, %v1509
    %v1521 = vpack.c.b16 %v1512, %v1511
    %v1522 = vpack.c.b16 %v1514, %v1513
    %v1523 = vpack.c.b16 %v1516, %v1515
    %v1528 = vunpack.c.l.b16 %v1459
    %v1529 = vunpack.c.l.b16 %v1460
    %v1530 = vunpack.c.l.b16 %v1461
    %v1531 = vunpack.c.l.b16 %v1462
    %v1532 = vpack.c.b16 %v1529, %v1528
    %v1533 = vpack.c.b16 %v1531, %v1530
    %v1537 = vsel %vm783, %v1517, 0
    %v1540 = vsel %vm783, %v1518, 0
    %v1543 = vsel %vm783, %v1519, 0
    %v1546 = vsel %vm783, %v1520, 0
    %v1549 = vsel %vm783, %v1521, 0
    %v1552 = vsel %vm783, %v1522, 0
    %v1555 = vsel %vm783, %v1523, 0
    %1557 = vmatprep.subr.bf16.mxu0 0
    %1558 = vmatpush1.bf16.msra.mxu0 0
    %1559 = vmatprep.subr.bf16.mxu0 0
    %1560 = vmatpush1.bf16.msra.mxu0 0
    %1561 = vmatprep.subr.bf16.mxu0 0
    %1562 = vmatpush1.bf16.msra.mxu0 0
    %1563 = vmatprep.subr.bf16.mxu0 0
    %1564 = vmatpush1.bf16.msra.mxu0 0
    %1565 = vmatprep.subr.bf16.mxu0 0
    %1566 = vmatpush1.bf16.msra.mxu0 0
    %1567 = vmatprep.subr.bf16.mxu0 0
    %1568 = vmatpush1.bf16.msra.mxu0 0
    %1569 = vmatprep.subr.bf16.mxu0 0
    %1570 = vmatpush1.bf16.msra.mxu0 %v1533
    %1571 = vmatprep.subr.bf16.mxu0 0
    %1572 = vmatpush1.bf16.msra.mxu0 %v1532
    %1573 = vmatprep.subr.bf16.mxu0 0
    %1574 = vmatpush2.bf16.msra.mxu0 0
    %1575 = vmatprep.subr.bf16.mxu0 0
    %1576 = vmatpush2.bf16.msra.mxu0 0
    %1577 = vmatprep.subr.bf16.mxu0 0
    %1578 = vmatpush2.bf16.msra.mxu0 0
    %1579 = vmatprep.subr.bf16.mxu0 0
    %1580 = vmatpush2.bf16.msra.mxu0 0
    %1581 = vmatprep.subr.bf16.mxu0 0
    %1582 = vmatpush2.bf16.msra.mxu0 0
    %1583 = vmatprep.subr.bf16.mxu0 0
    %1584 = vmatpush2.bf16.msra.mxu0 0
    %1585 = vmatprep.subr.bf16.mxu0 0
    %1586 = vmatpush2.bf16.msra.mxu0 0
    %1587 = vmatprep.subr.bf16.mxu0 0
    %1588 = vmatpush2.bf16.msra.mxu0 0
    %1589 = vmatprep.mubr.bf16.mxu0 0
    %1590 = vmatmul.mubr.bf16.gmra.mxu0 %v1537
    %v1591 = vpop.f32.mrf.mxu0
    %v1592 = vadd.f32 0.0, %v1591
    %v1593 = vpop.f32.mrf.mxu0
    %v1594 = vpop.f32.mrf.mxu0
    %v1595 = vadd.f32 0.0, %v1594
    %v1596 = vpop.f32.mrf.mxu0
    %1597 = vmatprep.mubr.bf16.mxu0 0
    %1598 = vmatmul.mubr.bf16.gmra.mxu0 %v1537
    %v1599 = vpop.f32.mrf.mxu0
    %v1600 = vadd.f32 0.0, %v1599
    %v1601 = vpop.f32.mrf.mxu0
    %v1602 = vpop.f32.mrf.mxu0
    %v1603 = vadd.f32 0.0, %v1602
    %v1604 = vpop.f32.mrf.mxu0
    %1605 = vmatprep.mubr.bf16.mxu0 0
    %1606 = vmatmul.mubr.bf16.gmra.mxu0 %v1540
    %v1607 = vpop.f32.mrf.mxu0
    %v1608 = vadd.f32 0.0, %v1607
    %v1609 = vpop.f32.mrf.mxu0
    %v1610 = vpop.f32.mrf.mxu0
    %v1611 = vadd.f32 0.0, %v1610
    %v1612 = vpop.f32.mrf.mxu0
    %1613 = vmatprep.mubr.bf16.mxu0 0
    %1614 = vmatmul.mubr.bf16.gmra.mxu0 %v1543
    %v1615 = vpop.f32.mrf.mxu0
    %v1616 = vadd.f32 0.0, %v1615
    %v1617 = vpop.f32.mrf.mxu0
    %v1618 = vpop.f32.mrf.mxu0
    %v1619 = vadd.f32 0.0, %v1618
    %v1620 = vpop.f32.mrf.mxu0
    %1621 = vmatprep.mubr.bf16.mxu0 0
    %1622 = vmatmul.mubr.bf16.gmra.mxu0 %v1546
    %v1623 = vpop.f32.mrf.mxu0
    %v1624 = vadd.f32 0.0, %v1623
    %v1625 = vpop.f32.mrf.mxu0
    %v1626 = vpop.f32.mrf.mxu0
    %v1627 = vadd.f32 0.0, %v1626
    %v1628 = vpop.f32.mrf.mxu0
    %1629 = vmatprep.mubr.bf16.mxu0 0
    %1630 = vmatmul.mubr.bf16.gmra.mxu0 %v1549
    %v1631 = vpop.f32.mrf.mxu0
    %v1632 = vadd.f32 0.0, %v1631
    %v1633 = vpop.f32.mrf.mxu0
    %v1634 = vpop.f32.mrf.mxu0
    %v1635 = vadd.f32 0.0, %v1634
    %v1636 = vpop.f32.mrf.mxu0
    %1637 = vmatprep.mubr.bf16.mxu0 0
    %1638 = vmatmul.mubr.bf16.gmra.mxu0 %v1552
    %v1639 = vpop.f32.mrf.mxu0
    %v1640 = vadd.f32 0.0, %v1639
    %v1641 = vpop.f32.mrf.mxu0
    %v1642 = vpop.f32.mrf.mxu0
    %v1643 = vadd.f32 0.0, %v1642
    %v1644 = vpop.f32.mrf.mxu0
    %1645 = vmatprep.mubr.bf16.mxu0 0
    %1646 = vmatmul.mubr.bf16.gmra.mxu0 %v1555
    %v1647 = vpop.f32.mrf.mxu0
    %v1648 = vadd.f32 0.0, %v1647
    %v1649 = vpop.f32.mrf.mxu0
    %v1650 = vpop.f32.mrf.mxu0
    %v1651 = vadd.f32 0.0, %v1650
    %v1652 = vpop.f32.mrf.mxu0
    %1653 = vdwg.mxu0
    %v1663 = vunpack.c.l.b16 %v1400
    %v1664 = vunpack.c.l.b16 %v1402
    %v1665 = vunpack.c.l.b16 %v1404
    %v1666 = vunpack.c.l.b16 %v1416
    %v1667 = vunpack.c.l.b16 %v1418
    %v1668 = vunpack.c.l.b16 %v1420
    %v1669 = vunpack.c.l.b16 %v1432
    %v1670 = vunpack.c.l.b16 %v1434
    %v1671 = vunpack.c.l.b16 %v1436
    %v1672 = vpack.c.b16 %v1663, %v1504
    %v1673 = vpack.c.b16 %v1665, %v1664
    %v1674 = vpack.c.b16 %v1666, %v1504
    %v1675 = vpack.c.b16 %v1668, %v1667
    %v1676 = vpack.c.b16 %v1669, %v1504
    %v1677 = vpack.c.b16 %v1671, %v1670
    %v1682 = vunpack.c.l.b16 %v1455
    %v1683 = vunpack.c.l.b16 %v1456
    %v1684 = vunpack.c.l.b16 %v1457
    %v1685 = vunpack.c.l.b16 %v1458
    %v1686 = vpack.c.b16 %v1683, %v1682
    %v1687 = vpack.c.b16 %v1685, %v1684
    %v1691 = vsel %vm783, %v1672, 0
    %v1694 = vsel %vm783, %v1673, 0
    %v1697 = vsel %vm783, %v1674, 0
    %v1700 = vsel %vm783, %v1675, 0
    %v1703 = vsel %vm783, %v1676, 0
    %v1706 = vsel %vm783, %v1677, 0
    %1708 = vmatprep.subr.bf16.mxu0 0
    %1709 = vmatpush1.bf16.msra.mxu0 0
    %1710 = vmatprep.subr.bf16.mxu0 0
    %1711 = vmatpush1.bf16.msra.mxu0 0
    %1712 = vmatprep.subr.bf16.mxu0 0
    %1713 = vmatpush1.bf16.msra.mxu0 0
    %1714 = vmatprep.subr.bf16.mxu0 0
    %1715 = vmatpush1.bf16.msra.mxu0 0
    %1716 = vmatprep.subr.bf16.mxu0 0
    %1717 = vmatpush1.bf16.msra.mxu0 0
    %1718 = vmatprep.subr.bf16.mxu0 0
    %1719 = vmatpush1.bf16.msra.mxu0 0
    %1720 = vmatprep.subr.bf16.mxu0 0
    %1721 = vmatpush1.bf16.msra.mxu0 %v1687
    %1722 = vmatprep.subr.bf16.mxu0 0
    %1723 = vmatpush1.bf16.msra.mxu0 %v1686
    %1724 = vmatprep.subr.bf16.mxu0 0
    %1725 = vmatpush2.bf16.msra.mxu0 0
    %1726 = vmatprep.subr.bf16.mxu0 0
    %1727 = vmatpush2.bf16.msra.mxu0 0
    %1728 = vmatprep.subr.bf16.mxu0 0
    %1729 = vmatpush2.bf16.msra.mxu0 0
    %1730 = vmatprep.subr.bf16.mxu0 0
    %1731 = vmatpush2.bf16.msra.mxu0 0
    %1732 = vmatprep.subr.bf16.mxu0 0
    %1733 = vmatpush2.bf16.msra.mxu0 0
    %1734 = vmatprep.subr.bf16.mxu0 0
    %1735 = vmatpush2.bf16.msra.mxu0 0
    %1736 = vmatprep.subr.bf16.mxu0 0
    %1737 = vmatpush2.bf16.msra.mxu0 0
    %1738 = vmatprep.subr.bf16.mxu0 0
    %1739 = vmatpush2.bf16.msra.mxu0 0
    %1740 = vmatprep.mubr.bf16.mxu0 0
    %1741 = vmatmul.mubr.bf16.gmra.mxu0 %v1537
    %v1742 = vpop.f32.mrf.mxu0
    %v1743 = vadd.f32 %v1592, %v1742
    %v1744 = vpop.f32.mrf.mxu0
    %v1745 = vpop.f32.mrf.mxu0
    %v1746 = vadd.f32 %v1595, %v1745
    %v1747 = vpop.f32.mrf.mxu0
    %1748 = vmatprep.mubr.bf16.mxu0 0
    %1749 = vmatmul.mubr.bf16.gmra.mxu0 %v1537
    %v1750 = vpop.f32.mrf.mxu0
    %v1751 = vadd.f32 %v1600, %v1750
    %v1752 = vpop.f32.mrf.mxu0
    %v1753 = vpop.f32.mrf.mxu0
    %v1754 = vadd.f32 %v1603, %v1753
    %v1755 = vpop.f32.mrf.mxu0
    %1756 = vmatprep.mubr.bf16.mxu0 0
    %1757 = vmatmul.mubr.bf16.gmra.mxu0 %v1691
    %v1758 = vpop.f32.mrf.mxu0
    %v1759 = vadd.f32 %v1608, %v1758
    %v1760 = vpop.f32.mrf.mxu0
    %v1761 = vpop.f32.mrf.mxu0
    %v1762 = vadd.f32 %v1611, %v1761
    %v1763 = vpop.f32.mrf.mxu0
    %1764 = vmatprep.mubr.bf16.mxu0 0
    %1765 = vmatmul.mubr.bf16.gmra.mxu0 %v1694
    %v1766 = vpop.f32.mrf.mxu0
    %v1767 = vadd.f32 %v1616, %v1766
    %v1768 = vpop.f32.mrf.mxu0
    %v1769 = vpop.f32.mrf.mxu0
    %v1770 = vadd.f32 %v1619, %v1769
    %v1771 = vpop.f32.mrf.mxu0
    %1772 = vmatprep.mubr.bf16.mxu0 0
    %1773 = vmatmul.mubr.bf16.gmra.mxu0 %v1697
    %v1774 = vpop.f32.mrf.mxu0
    %v1775 = vadd.f32 %v1624, %v1774
    %v1776 = vpop.f32.mrf.mxu0
    %v1777 = vpop.f32.mrf.mxu0
    %v1778 = vadd.f32 %v1627, %v1777
    %v1779 = vpop.f32.mrf.mxu0
    %1780 = vmatprep.mubr.bf16.mxu0 0
    %1781 = vmatmul.mubr.bf16.gmra.mxu0 %v1700
    %v1782 = vpop.f32.mrf.mxu0
    %v1783 = vadd.f32 %v1632, %v1782
    %v1784 = vpop.f32.mrf.mxu0
    %v1785 = vpop.f32.mrf.mxu0
    %v1786 = vadd.f32 %v1635, %v1785
    %v1787 = vpop.f32.mrf.mxu0
    %1788 = vmatprep.mubr.bf16.mxu0 0
    %1789 = vmatmul.mubr.bf16.gmra.mxu0 %v1703
    %v1790 = vpop.f32.mrf.mxu0
    %v1791 = vadd.f32 %v1640, %v1790
    %v1792 = vpop.f32.mrf.mxu0
    %v1793 = vpop.f32.mrf.mxu0
    %v1794 = vadd.f32 %v1643, %v1793
    %v1795 = vpop.f32.mrf.mxu0
    %1796 = vmatprep.mubr.bf16.mxu0 0
    %1797 = vmatmul.mubr.bf16.gmra.mxu0 %v1706
    %v1798 = vpop.f32.mrf.mxu0
    %v1799 = vadd.f32 %v1648, %v1798
    %v1800 = vpop.f32.mrf.mxu0
    %v1801 = vpop.f32.mrf.mxu0
    %v1802 = vadd.f32 %v1651, %v1801
    %v1803 = vpop.f32.mrf.mxu0
    %1804 = vdwg.mxu0
    %v1808 = vunpack.c.l.b16 %v1406
    %v1809 = vunpack.c.l.b16 %v1422
    %v1810 = vunpack.c.l.b16 %v1438
    %v1811 = vpack.c.b16 %v1664, %v1663
    %v1812 = vpack.c.b16 %v1808, %v1665
    %v1813 = vpack.c.b16 %v1667, %v1666
    %v1814 = vpack.c.b16 %v1809, %v1668
    %v1815 = vpack.c.b16 %v1670, %v1669
    %v1816 = vpack.c.b16 %v1810, %v1671
    %v1821 = vunpack.c.l.b16 %v1463
    %v1822 = vunpack.c.l.b16 %v1464
    %v1823 = vunpack.c.l.b16 %v1465
    %v1824 = vunpack.c.l.b16 %v1466
    %v1825 = vpack.c.b16 %v1822, %v1821
    %v1826 = vpack.c.b16 %v1824, %v1823
    %v1830 = vsel %vm783, %v1811, 0
    %v1833 = vsel %vm783, %v1812, 0
    %v1836 = vsel %vm783, %v1813, 0
    %v1839 = vsel %vm783, %v1814, 0
    %v1842 = vsel %vm783, %v1815, 0
    %v1845 = vsel %vm783, %v1816, 0
    %1847 = vmatprep.subr.bf16.mxu0 0
    %1848 = vmatpush1.bf16.msra.mxu0 0
    %1849 = vmatprep.subr.bf16.mxu0 0
    %1850 = vmatpush1.bf16.msra.mxu0 0
    %1851 = vmatprep.subr.bf16.mxu0 0
    %1852 = vmatpush1.bf16.msra.mxu0 0
    %1853 = vmatprep.subr.bf16.mxu0 0
    %1854 = vmatpush1.bf16.msra.mxu0 0
    %1855 = vmatprep.subr.bf16.mxu0 0
    %1856 = vmatpush1.bf16.msra.mxu0 0
    %1857 = vmatprep.subr.bf16.mxu0 0
    %1858 = vmatpush1.bf16.msra.mxu0 0
    %1859 = vmatprep.subr.bf16.mxu0 0
    %1860 = vmatpush1.bf16.msra.mxu0 %v1826
    %1861 = vmatprep.subr.bf16.mxu0 0
    %1862 = vmatpush1.bf16.msra.mxu0 %v1825
    %1863 = vmatprep.subr.bf16.mxu0 0
    %1864 = vmatpush2.bf16.msra.mxu0 0
    %1865 = vmatprep.subr.bf16.mxu0 0
    %1866 = vmatpush2.bf16.msra.mxu0 0
    %1867 = vmatprep.subr.bf16.mxu0 0
    %1868 = vmatpush2.bf16.msra.mxu0 0
    %1869 = vmatprep.subr.bf16.mxu0 0
    %1870 = vmatpush2.bf16.msra.mxu0 0
    %1871 = vmatprep.subr.bf16.mxu0 0
    %1872 = vmatpush2.bf16.msra.mxu0 0
    %1873 = vmatprep.subr.bf16.mxu0 0
    %1874 = vmatpush2.bf16.msra.mxu0 0
    %1875 = vmatprep.subr.bf16.mxu0 0
    %1876 = vmatpush2.bf16.msra.mxu0 0
    %1877 = vmatprep.subr.bf16.mxu0 0
    %1878 = vmatpush2.bf16.msra.mxu0 0
    %1879 = vmatprep.mubr.bf16.mxu0 0
    %1880 = vmatmul.mubr.bf16.gmra.mxu0 %v1537
    %v1881 = vpop.f32.mrf.mxu0
    %v1882 = vadd.f32 0.0, %v1881
    %v1883 = vpop.f32.mrf.mxu0
    %v1884 = vpop.f32.mrf.mxu0
    %v1885 = vadd.f32 0.0, %v1884
    %v1886 = vpop.f32.mrf.mxu0
    %1887 = vmatprep.mubr.bf16.mxu0 0
    %1888 = vmatmul.mubr.bf16.gmra.mxu0 %v1537
    %v1889 = vpop.f32.mrf.mxu0
    %v1890 = vadd.f32 0.0, %v1889
    %v1891 = vpop.f32.mrf.mxu0
    %v1892 = vpop.f32.mrf.mxu0
    %v1893 = vadd.f32 0.0, %v1892
    %v1894 = vpop.f32.mrf.mxu0
    %1895 = vmatprep.mubr.bf16.mxu0 0
    %1896 = vmatmul.mubr.bf16.gmra.mxu0 %v1830
    %v1897 = vpop.f32.mrf.mxu0
    %v1898 = vadd.f32 0.0, %v1897
    %v1899 = vpop.f32.mrf.mxu0
    %v1900 = vpop.f32.mrf.mxu0
    %v1901 = vadd.f32 0.0, %v1900
    %v1902 = vpop.f32.mrf.mxu0
    %1903 = vmatprep.mubr.bf16.mxu0 0
    %1904 = vmatmul.mubr.bf16.gmra.mxu0 %v1833
    %v1905 = vpop.f32.mrf.mxu0
    %v1906 = vadd.f32 0.0, %v1905
    %v1907 = vpop.f32.mrf.mxu0
    %v1908 = vpop.f32.mrf.mxu0
    %v1909 = vadd.f32 0.0, %v1908
    %v1910 = vpop.f32.mrf.mxu0
    %1911 = vmatprep.mubr.bf16.mxu0 0
    %1912 = vmatmul.mubr.bf16.gmra.mxu0 %v1836
    %v1913 = vpop.f32.mrf.mxu0
    %v1914 = vadd.f32 0.0, %v1913
    %v1915 = vpop.f32.mrf.mxu0
    %v1916 = vpop.f32.mrf.mxu0
    %v1917 = vadd.f32 0.0, %v1916
    %v1918 = vpop.f32.mrf.mxu0
    %1919 = vmatprep.mubr.bf16.mxu0 0
    %1920 = vmatmul.mubr.bf16.gmra.mxu0 %v1839
    %v1921 = vpop.f32.mrf.mxu0
    %v1922 = vadd.f32 0.0, %v1921
    %v1923 = vpop.f32.mrf.mxu0
    %v1924 = vpop.f32.mrf.mxu0
    %v1925 = vadd.f32 0.0, %v1924
    %v1926 = vpop.f32.mrf.mxu0
    %1927 = vmatprep.mubr.bf16.mxu0 0
    %1928 = vmatmul.mubr.bf16.gmra.mxu0 %v1842
    %v1929 = vpop.f32.mrf.mxu0
    %v1930 = vadd.f32 0.0, %v1929
    %v1931 = vpop.f32.mrf.mxu0
    %v1932 = vpop.f32.mrf.mxu0
    %v1933 = vadd.f32 0.0, %v1932
    %v1934 = vpop.f32.mrf.mxu0
    %1935 = vmatprep.mubr.bf16.mxu0 0
    %1936 = vmatmul.mubr.bf16.gmra.mxu0 %v1845
    %v1937 = vpop.f32.mrf.mxu0
    %v1938 = vadd.f32 0.0, %v1937
    %v1939 = vpop.f32.mrf.mxu0
    %v1940 = vpop.f32.mrf.mxu0
    %v1941 = vadd.f32 0.0, %v1940
    %v1942 = vpop.f32.mrf.mxu0
    %1943 = vdwg.mxu0
    %v1944 = vadd.f32 %v1743, %v1882
    %v1945 = vadd.f32 %v1746, %v1885
    %v1946 = vadd.f32 %v1751, %v1890
    %v1947 = vadd.f32 %v1754, %v1893
    %v1948 = vadd.f32 %v1759, %v1898
    %v1949 = vadd.f32 %v1762, %v1901
    %v1950 = vadd.f32 %v1767, %v1906
    %v1951 = vadd.f32 %v1770, %v1909
    %v1952 = vadd.f32 %v1775, %v1914
    %v1953 = vadd.f32 %v1778, %v1917
    %v1954 = vadd.f32 %v1783, %v1922
    %v1955 = vadd.f32 %v1786, %v1925
    %v1956 = vadd.f32 %v1791, %v1930
    %v1957 = vadd.f32 %v1794, %v1933
    %v1958 = vadd.f32 %v1799, %v1938
    %v1959 = vadd.f32 %v1802, %v1941
    %v1972 = vunpack.c.l.b16 %v1392
    %v1973 = vunpack.c.l.b16 %v1394
    %v1974 = vunpack.c.l.b16 %v1396
    %v1975 = vunpack.c.l.b16 %v1408
    %v1976 = vunpack.c.l.b16 %v1410
    %v1977 = vunpack.c.l.b16 %v1412
    %v1978 = vunpack.c.l.b16 %v1424
    %v1979 = vunpack.c.l.b16 %v1426
    %v1980 = vunpack.c.l.b16 %v1428
    %v1981 = vunpack.c.l.b16 %v1440
    %v1982 = vunpack.c.l.b16 %v1442
    %v1983 = vunpack.c.l.b16 %v1444
    %v1984 = vpack.c.b16 %v1972, %v1504
    %v1985 = vpack.c.b16 %v1974, %v1973
    %v1986 = vpack.c.b16 %v1975, %v1504
    %v1987 = vpack.c.b16 %v1977, %v1976
    %v1988 = vpack.c.b16 %v1978, %v1504
    %v1989 = vpack.c.b16 %v1980, %v1979
    %v1990 = vpack.c.b16 %v1981, %v1504
    %v1991 = vpack.c.b16 %v1983, %v1982
    %v1996 = vunpack.c.l.b16 %v1467
    %v1997 = vunpack.c.l.b16 %v1468
    %v1998 = vunpack.c.l.b16 %v1469
    %v1999 = vunpack.c.l.b16 %v1470
    %v2000 = vpack.c.b16 %v1997, %v1996
    %v2001 = vpack.c.b16 %v1999, %v1998
    %v2005 = vsel %vm783, %v1984, 0
    %v2008 = vsel %vm783, %v1985, 0
    %v2011 = vsel %vm783, %v1986, 0
    %v2014 = vsel %vm783, %v1987, 0
    %v2017 = vsel %vm783, %v1988, 0
    %v2020 = vsel %vm783, %v1989, 0
    %v2023 = vsel %vm783, %v1990, 0
    %v2026 = vsel %vm783, %v1991, 0
    %2028 = vmatprep.subr.bf16.mxu0 0
    %2029 = vmatpush1.bf16.msra.mxu0 0
    %2030 = vmatprep.subr.bf16.mxu0 0
    %2031 = vmatpush1.bf16.msra.mxu0 0
    %2032 = vmatprep.subr.bf16.mxu0 0
    %2033 = vmatpush1.bf16.msra.mxu0 0
    %2034 = vmatprep.subr.bf16.mxu0 0
    %2035 = vmatpush1.bf16.msra.mxu0 0
    %2036 = vmatprep.subr.bf16.mxu0 0
    %2037 = vmatpush1.bf16.msra.mxu0 0
    %2038 = vmatprep.subr.bf16.mxu0 0
    %2039 = vmatpush1.bf16.msra.mxu0 0
    %2040 = vmatprep.subr.bf16.mxu0 0
    %2041 = vmatpush1.bf16.msra.mxu0 %v2001
    %2042 = vmatprep.subr.bf16.mxu0 0
    %2043 = vmatpush1.bf16.msra.mxu0 %v2000
    %2044 = vmatprep.subr.bf16.mxu0 0
    %2045 = vmatpush2.bf16.msra.mxu0 0
    %2046 = vmatprep.subr.bf16.mxu0 0
    %2047 = vmatpush2.bf16.msra.mxu0 0
    %2048 = vmatprep.subr.bf16.mxu0 0
    %2049 = vmatpush2.bf16.msra.mxu0 0
    %2050 = vmatprep.subr.bf16.mxu0 0
    %2051 = vmatpush2.bf16.msra.mxu0 0
    %2052 = vmatprep.subr.bf16.mxu0 0
    %2053 = vmatpush2.bf16.msra.mxu0 0
    %2054 = vmatprep.subr.bf16.mxu0 0
    %2055 = vmatpush2.bf16.msra.mxu0 0
    %2056 = vmatprep.subr.bf16.mxu0 0
    %2057 = vmatpush2.bf16.msra.mxu0 0
    %2058 = vmatprep.subr.bf16.mxu0 0
    %2059 = vmatpush2.bf16.msra.mxu0 0
    %2060 = vmatprep.mubr.bf16.mxu0 0
    %2061 = vmatmul.mubr.bf16.gmra.mxu0 %v2005
    %v2062 = vpop.f32.mrf.mxu0
    %v2063 = vadd.f32 0.0, %v2062
    %v2064 = vpop.f32.mrf.mxu0
    %v2065 = vpop.f32.mrf.mxu0
    %v2066 = vadd.f32 0.0, %v2065
    %v2067 = vpop.f32.mrf.mxu0
    %2068 = vmatprep.mubr.bf16.mxu0 0
    %2069 = vmatmul.mubr.bf16.gmra.mxu0 %v2008
    %v2070 = vpop.f32.mrf.mxu0
    %v2071 = vadd.f32 0.0, %v2070
    %v2072 = vpop.f32.mrf.mxu0
    %v2073 = vpop.f32.mrf.mxu0
    %v2074 = vadd.f32 0.0, %v2073
    %v2075 = vpop.f32.mrf.mxu0
    %2076 = vmatprep.mubr.bf16.mxu0 0
    %2077 = vmatmul.mubr.bf16.gmra.mxu0 %v2011
    %v2078 = vpop.f32.mrf.mxu0
    %v2079 = vadd.f32 0.0, %v2078
    %v2080 = vpop.f32.mrf.mxu0
    %v2081 = vpop.f32.mrf.mxu0
    %v2082 = vadd.f32 0.0, %v2081
    %v2083 = vpop.f32.mrf.mxu0
    %2084 = vmatprep.mubr.bf16.mxu0 0
    %2085 = vmatmul.mubr.bf16.gmra.mxu0 %v2014
    %v2086 = vpop.f32.mrf.mxu0
    %v2087 = vadd.f32 0.0, %v2086
    %v2088 = vpop.f32.mrf.mxu0
    %v2089 = vpop.f32.mrf.mxu0
    %v2090 = vadd.f32 0.0, %v2089
    %v2091 = vpop.f32.mrf.mxu0
    %2092 = vmatprep.mubr.bf16.mxu0 0
    %2093 = vmatmul.mubr.bf16.gmra.mxu0 %v2017
    %v2094 = vpop.f32.mrf.mxu0
    %v2095 = vadd.f32 0.0, %v2094
    %v2096 = vpop.f32.mrf.mxu0
    %v2097 = vpop.f32.mrf.mxu0
    %v2098 = vadd.f32 0.0, %v2097
    %v2099 = vpop.f32.mrf.mxu0
    %2100 = vmatprep.mubr.bf16.mxu0 0
    %2101 = vmatmul.mubr.bf16.gmra.mxu0 %v2020
    %v2102 = vpop.f32.mrf.mxu0
    %v2103 = vadd.f32 0.0, %v2102
    %v2104 = vpop.f32.mrf.mxu0
    %v2105 = vpop.f32.mrf.mxu0
    %v2106 = vadd.f32 0.0, %v2105
    %v2107 = vpop.f32.mrf.mxu0
    %2108 = vmatprep.mubr.bf16.mxu0 0
    %2109 = vmatmul.mubr.bf16.gmra.mxu0 %v2023
    %v2110 = vpop.f32.mrf.mxu0
    %v2111 = vadd.f32 0.0, %v2110
    %v2112 = vpop.f32.mrf.mxu0
    %v2113 = vpop.f32.mrf.mxu0
    %v2114 = vadd.f32 0.0, %v2113
    %v2115 = vpop.f32.mrf.mxu0
    %2116 = vmatprep.mubr.bf16.mxu0 0
    %2117 = vmatmul.mubr.bf16.gmra.mxu0 %v2026
    %v2118 = vpop.f32.mrf.mxu0
    %v2119 = vadd.f32 0.0, %v2118
    %v2120 = vpop.f32.mrf.mxu0
    %v2121 = vpop.f32.mrf.mxu0
    %v2122 = vadd.f32 0.0, %v2121
    %v2123 = vpop.f32.mrf.mxu0
    %2124 = vdwg.mxu0
    %v2125 = vadd.f32 %v1944, %v2063
    %v2126 = vadd.f32 %v1945, %v2066
    %v2127 = vadd.f32 %v1946, %v2071
    %v2128 = vadd.f32 %v1947, %v2074
    %v2129 = vadd.f32 %v1948, %v2079
    %v2130 = vadd.f32 %v1949, %v2082
    %v2131 = vadd.f32 %v1950, %v2087
    %v2132 = vadd.f32 %v1951, %v2090
    %v2133 = vadd.f32 %v1952, %v2095
    %v2134 = vadd.f32 %v1953, %v2098
    %v2135 = vadd.f32 %v1954, %v2103
    %v2136 = vadd.f32 %v1955, %v2106
    %v2137 = vadd.f32 %v1956, %v2111
    %v2138 = vadd.f32 %v1957, %v2114
    %v2139 = vadd.f32 %v1958, %v2119
    %v2140 = vadd.f32 %v1959, %v2122
    %v2157 = vunpack.c.l.b16 %v1391
    %v2158 = vunpack.c.l.b16 %v1393
    %v2159 = vunpack.c.l.b16 %v1395
    %v2160 = vunpack.c.l.b16 %v1397
    %v2161 = vunpack.c.l.b16 %v1407
    %v2162 = vunpack.c.l.b16 %v1409
    %v2163 = vunpack.c.l.b16 %v1411
    %v2164 = vunpack.c.l.b16 %v1413
    %v2165 = vunpack.c.l.b16 %v1423
    %v2166 = vunpack.c.l.b16 %v1425
    %v2167 = vunpack.c.l.b16 %v1427
    %v2168 = vunpack.c.l.b16 %v1429
    %v2169 = vunpack.c.l.b16 %v1439
    %v2170 = vunpack.c.l.b16 %v1441
    %v2171 = vunpack.c.l.b16 %v1443
    %v2172 = vunpack.c.l.b16 %v1445
    %v2173 = vpack.c.b16 %v2158, %v2157
    %v2174 = vpack.c.b16 %v2160, %v2159
    %v2175 = vpack.c.b16 %v2162, %v2161
    %v2176 = vpack.c.b16 %v2164, %v2163
    %v2177 = vpack.c.b16 %v2166, %v2165
    %v2178 = vpack.c.b16 %v2168, %v2167
    %v2179 = vpack.c.b16 %v2170, %v2169
    %v2180 = vpack.c.b16 %v2172, %v2171
    %v2185 = vunpack.c.l.b16 %v1471
    %v2186 = vunpack.c.l.b16 %v1472
    %v2187 = vunpack.c.l.b16 %v1473
    %v2188 = vunpack.c.l.b16 %v1474
    %v2189 = vpack.c.b16 %v2186, %v2185
    %v2190 = vpack.c.b16 %v2188, %v2187
    %v2194 = vsel %vm783, %v2173, 0
    %v2197 = vsel %vm783, %v2174, 0
    %v2200 = vsel %vm783, %v2175, 0
    %v2203 = vsel %vm783, %v2176, 0
    %v2206 = vsel %vm783, %v2177, 0
    %v2209 = vsel %vm783, %v2178, 0
    %v2212 = vsel %vm783, %v2179, 0
    %v2215 = vsel %vm783, %v2180, 0
    %2217 = vmatprep.subr.bf16.mxu0 0
    %2218 = vmatpush1.bf16.msra.mxu0 0
    %2219 = vmatprep.subr.bf16.mxu0 0
    %2220 = vmatpush1.bf16.msra.mxu0 0
    %2221 = vmatprep.subr.bf16.mxu0 0
    %2222 = vmatpush1.bf16.msra.mxu0 0
    %2223 = vmatprep.subr.bf16.mxu0 0
    %2224 = vmatpush1.bf16.msra.mxu0 0
    %2225 = vmatprep.subr.bf16.mxu0 0
    %2226 = vmatpush1.bf16.msra.mxu0 0
    %2227 = vmatprep.subr.bf16.mxu0 0
    %2228 = vmatpush1.bf16.msra.mxu0 0
    %2229 = vmatprep.subr.bf16.mxu0 0
    %2230 = vmatpush1.bf16.msra.mxu0 %v2190
    %2231 = vmatprep.subr.bf16.mxu0 0
    %2232 = vmatpush1.bf16.msra.mxu0 %v2189
    %2233 = vmatprep.subr.bf16.mxu0 0
    %2234 = vmatpush2.bf16.msra.mxu0 0
    %2235 = vmatprep.subr.bf16.mxu0 0
    %2236 = vmatpush2.bf16.msra.mxu0 0
    %2237 = vmatprep.subr.bf16.mxu0 0
    %2238 = vmatpush2.bf16.msra.mxu0 0
    %2239 = vmatprep.subr.bf16.mxu0 0
    %2240 = vmatpush2.bf16.msra.mxu0 0
    %2241 = vmatprep.subr.bf16.mxu0 0
    %2242 = vmatpush2.bf16.msra.mxu0 0
    %2243 = vmatprep.subr.bf16.mxu0 0
    %2244 = vmatpush2.bf16.msra.mxu0 0
    %2245 = vmatprep.subr.bf16.mxu0 0
    %2246 = vmatpush2.bf16.msra.mxu0 0
    %2247 = vmatprep.subr.bf16.mxu0 0
    %2248 = vmatpush2.bf16.msra.mxu0 0
    %2249 = vmatprep.mubr.bf16.mxu0 0
    %2250 = vmatmul.mubr.bf16.gmra.mxu0 %v2194
    %v2251 = vpop.f32.mrf.mxu0
    %v2252 = vadd.f32 0.0, %v2251
    %v2253 = vpop.f32.mrf.mxu0
    %v2254 = vpop.f32.mrf.mxu0
    %v2255 = vadd.f32 0.0, %v2254
    %v2256 = vpop.f32.mrf.mxu0
    %2257 = vmatprep.mubr.bf16.mxu0 0
    %2258 = vmatmul.mubr.bf16.gmra.mxu0 %v2197
    %v2259 = vpop.f32.mrf.mxu0
    %v2260 = vadd.f32 0.0, %v2259
    %v2261 = vpop.f32.mrf.mxu0
    %v2262 = vpop.f32.mrf.mxu0
    %v2263 = vadd.f32 0.0, %v2262
    %v2264 = vpop.f32.mrf.mxu0
    %2265 = vmatprep.mubr.bf16.mxu0 0
    %2266 = vmatmul.mubr.bf16.gmra.mxu0 %v2200
    %v2267 = vpop.f32.mrf.mxu0
    %v2268 = vadd.f32 0.0, %v2267
    %v2269 = vpop.f32.mrf.mxu0
    %v2270 = vpop.f32.mrf.mxu0
    %v2271 = vadd.f32 0.0, %v2270
    %v2272 = vpop.f32.mrf.mxu0
    %2273 = vmatprep.mubr.bf16.mxu0 0
    %2274 = vmatmul.mubr.bf16.gmra.mxu0 %v2203
    %v2275 = vpop.f32.mrf.mxu0
    %v2276 = vadd.f32 0.0, %v2275
    %v2277 = vpop.f32.mrf.mxu0
    %v2278 = vpop.f32.mrf.mxu0
    %v2279 = vadd.f32 0.0, %v2278
    %v2280 = vpop.f32.mrf.mxu0
    %2281 = vmatprep.mubr.bf16.mxu0 0
    %2282 = vmatmul.mubr.bf16.gmra.mxu0 %v2206
    %v2283 = vpop.f32.mrf.mxu0
    %v2284 = vadd.f32 0.0, %v2283
    %v2285 = vpop.f32.mrf.mxu0
    %v2286 = vpop.f32.mrf.mxu0
    %v2287 = vadd.f32 0.0, %v2286
    %v2288 = vpop.f32.mrf.mxu0
    %2289 = vmatprep.mubr.bf16.mxu0 0
    %2290 = vmatmul.mubr.bf16.gmra.mxu0 %v2209
    %v2291 = vpop.f32.mrf.mxu0
    %v2292 = vadd.f32 0.0, %v2291
    %v2293 = vpop.f32.mrf.mxu0
    %v2294 = vpop.f32.mrf.mxu0
    %v2295 = vadd.f32 0.0, %v2294
    %v2296 = vpop.f32.mrf.mxu0
    %2297 = vmatprep.mubr.bf16.mxu0 0
    %2298 = vmatmul.mubr.bf16.gmra.mxu0 %v2212
    %v2299 = vpop.f32.mrf.mxu0
    %v2300 = vadd.f32 0.0, %v2299
    %v2301 = vpop.f32.mrf.mxu0
    %v2302 = vpop.f32.mrf.mxu0
    %v2303 = vadd.f32 0.0, %v2302
    %v2304 = vpop.f32.mrf.mxu0
    %2305 = vmatprep.mubr.bf16.mxu0 0
    %2306 = vmatmul.mubr.bf16.gmra.mxu0 %v2215
    %v2307 = vpop.f32.mrf.mxu0
    %v2308 = vadd.f32 0.0, %v2307
    %v2309 = vpop.f32.mrf.mxu0
    %v2310 = vpop.f32.mrf.mxu0
    %v2311 = vadd.f32 0.0, %v2310
    %v2312 = vpop.f32.mrf.mxu0
    %2313 = vdwg.mxu0
    %v2314 = vadd.f32 %v2125, %v2252
    %v2315 = vadd.f32 %v2126, %v2255
    %v2316 = vadd.f32 %v2127, %v2260
    %v2317 = vadd.f32 %v2128, %v2263
    %v2318 = vadd.f32 %v2129, %v2268
    %v2319 = vadd.f32 %v2130, %v2271
    %v2320 = vadd.f32 %v2131, %v2276
    %v2321 = vadd.f32 %v2132, %v2279
    %v2322 = vadd.f32 %v2133, %v2284
    %v2323 = vadd.f32 %v2134, %v2287
    %v2324 = vadd.f32 %v2135, %v2292
    %v2325 = vadd.f32 %v2136, %v2295
    %v2326 = vadd.f32 %v2137, %v2300
    %v2327 = vadd.f32 %v2138, %v2303
    %v2328 = vadd.f32 %v2139, %v2308
    %v2329 = vadd.f32 %v2140, %v2311
    %v2334 = vunpack.c.l.b16 %v1398
    %v2335 = vunpack.c.l.b16 %v1414
    %v2336 = vunpack.c.l.b16 %v1430
    %v2337 = vunpack.c.l.b16 %v1446
    %v2338 = vpack.c.b16 %v1973, %v1972
    %v2339 = vpack.c.b16 %v2334, %v1974
    %v2340 = vpack.c.b16 %v1976, %v1975
    %v2341 = vpack.c.b16 %v2335, %v1977
    %v2342 = vpack.c.b16 %v1979, %v1978
    %v2343 = vpack.c.b16 %v2336, %v1980
    %v2344 = vpack.c.b16 %v1982, %v1981
    %v2345 = vpack.c.b16 %v2337, %v1983
    %v2350 = vunpack.c.l.b16 %v1475
    %v2351 = vunpack.c.l.b16 %v1476
    %v2352 = vunpack.c.l.b16 %v1477
    %v2353 = vunpack.c.l.b16 %v1478
    %v2354 = vpack.c.b16 %v2351, %v2350
    %v2355 = vpack.c.b16 %v2353, %v2352
    %v2359 = vsel %vm783, %v2338, 0
    %v2362 = vsel %vm783, %v2339, 0
    %v2365 = vsel %vm783, %v2340, 0
    %v2368 = vsel %vm783, %v2341, 0
    %v2371 = vsel %vm783, %v2342, 0
    %v2374 = vsel %vm783, %v2343, 0
    %v2377 = vsel %vm783, %v2344, 0
    %v2380 = vsel %vm783, %v2345, 0
    %2382 = vmatprep.subr.bf16.mxu0 0
    %2383 = vmatpush1.bf16.msra.mxu0 0
    %2384 = vmatprep.subr.bf16.mxu0 0
    %2385 = vmatpush1.bf16.msra.mxu0 0
    %2386 = vmatprep.subr.bf16.mxu0 0
    %2387 = vmatpush1.bf16.msra.mxu0 0
    %2388 = vmatprep.subr.bf16.mxu0 0
    %2389 = vmatpush1.bf16.msra.mxu0 0
    %2390 = vmatprep.subr.bf16.mxu0 0
    %2391 = vmatpush1.bf16.msra.mxu0 0
    %2392 = vmatprep.subr.bf16.mxu0 0
    %2393 = vmatpush1.bf16.msra.mxu0 0
    %2394 = vmatprep.subr.bf16.mxu0 0
    %2395 = vmatpush1.bf16.msra.mxu0 %v2355
    %2396 = vmatprep.subr.bf16.mxu0 0
    %2397 = vmatpush1.bf16.msra.mxu0 %v2354
    %2398 = vmatprep.subr.bf16.mxu0 0
    %2399 = vmatpush2.bf16.msra.mxu0 0
    %2400 = vmatprep.subr.bf16.mxu0 0
    %2401 = vmatpush2.bf16.msra.mxu0 0
    %2402 = vmatprep.subr.bf16.mxu0 0
    %2403 = vmatpush2.bf16.msra.mxu0 0
    %2404 = vmatprep.subr.bf16.mxu0 0
    %2405 = vmatpush2.bf16.msra.mxu0 0
    %2406 = vmatprep.subr.bf16.mxu0 0
    %2407 = vmatpush2.bf16.msra.mxu0 0
    %2408 = vmatprep.subr.bf16.mxu0 0
    %2409 = vmatpush2.bf16.msra.mxu0 0
    %2410 = vmatprep.subr.bf16.mxu0 0
    %2411 = vmatpush2.bf16.msra.mxu0 0
    %2412 = vmatprep.subr.bf16.mxu0 0
    %2413 = vmatpush2.bf16.msra.mxu0 0
    %2414 = vmatprep.mubr.bf16.mxu0 0
    %2415 = vmatmul.mubr.bf16.gmra.mxu0 %v2359
    %v2416 = vpop.f32.mrf.mxu0
    %v2417 = vadd.f32 0.0, %v2416
    %v2418 = vpop.f32.mrf.mxu0
    %v2419 = vpop.f32.mrf.mxu0
    %v2420 = vadd.f32 0.0, %v2419
    %v2421 = vpop.f32.mrf.mxu0
    %2422 = vmatprep.mubr.bf16.mxu0 0
    %2423 = vmatmul.mubr.bf16.gmra.mxu0 %v2362
    %v2424 = vpop.f32.mrf.mxu0
    %v2425 = vadd.f32 0.0, %v2424
    %v2426 = vpop.f32.mrf.mxu0
    %v2427 = vpop.f32.mrf.mxu0
    %v2428 = vadd.f32 0.0, %v2427
    %v2429 = vpop.f32.mrf.mxu0
    %2430 = vmatprep.mubr.bf16.mxu0 0
    %2431 = vmatmul.mubr.bf16.gmra.mxu0 %v2365
    %v2432 = vpop.f32.mrf.mxu0
    %v2433 = vadd.f32 0.0, %v2432
    %v2434 = vpop.f32.mrf.mxu0
    %v2435 = vpop.f32.mrf.mxu0
    %v2436 = vadd.f32 0.0, %v2435
    %v2437 = vpop.f32.mrf.mxu0
    %2438 = vmatprep.mubr.bf16.mxu0 0
    %2439 = vmatmul.mubr.bf16.gmra.mxu0 %v2368
    %v2440 = vpop.f32.mrf.mxu0
    %v2441 = vadd.f32 0.0, %v2440
    %v2442 = vpop.f32.mrf.mxu0
    %v2443 = vpop.f32.mrf.mxu0
    %v2444 = vadd.f32 0.0, %v2443
    %v2445 = vpop.f32.mrf.mxu0
    %2446 = vmatprep.mubr.bf16.mxu0 0
    %2447 = vmatmul.mubr.bf16.gmra.mxu0 %v2371
    %v2448 = vpop.f32.mrf.mxu0
    %v2449 = vadd.f32 0.0, %v2448
    %v2450 = vpop.f32.mrf.mxu0
    %v2451 = vpop.f32.mrf.mxu0
    %v2452 = vadd.f32 0.0, %v2451
    %v2453 = vpop.f32.mrf.mxu0
    %2454 = vmatprep.mubr.bf16.mxu0 0
    %2455 = vmatmul.mubr.bf16.gmra.mxu0 %v2374
    %v2456 = vpop.f32.mrf.mxu0
    %v2457 = vadd.f32 0.0, %v2456
    %v2458 = vpop.f32.mrf.mxu0
    %v2459 = vpop.f32.mrf.mxu0
    %v2460 = vadd.f32 0.0, %v2459
    %v2461 = vpop.f32.mrf.mxu0
    %2462 = vmatprep.mubr.bf16.mxu0 0
    %2463 = vmatmul.mubr.bf16.gmra.mxu0 %v2377
    %v2464 = vpop.f32.mrf.mxu0
    %v2465 = vadd.f32 0.0, %v2464
    %v2466 = vpop.f32.mrf.mxu0
    %v2467 = vpop.f32.mrf.mxu0
    %v2468 = vadd.f32 0.0, %v2467
    %v2469 = vpop.f32.mrf.mxu0
    %2470 = vmatprep.mubr.bf16.mxu0 0
    %2471 = vmatmul.mubr.bf16.gmra.mxu0 %v2380
    %v2472 = vpop.f32.mrf.mxu0
    %v2473 = vadd.f32 0.0, %v2472
    %v2474 = vpop.f32.mrf.mxu0
    %v2475 = vpop.f32.mrf.mxu0
    %v2476 = vadd.f32 0.0, %v2475
    %v2477 = vpop.f32.mrf.mxu0
    %2478 = vdwg.mxu0
    %v2479 = vadd.f32 %v2314, %v2417
    %v2480 = vadd.f32 %v2315, %v2420
    %v2481 = vadd.f32 %v2316, %v2425
    %v2482 = vadd.f32 %v2317, %v2428
    %v2483 = vadd.f32 %v2318, %v2433
    %v2484 = vadd.f32 %v2319, %v2436
    %v2485 = vadd.f32 %v2320, %v2441
    %v2486 = vadd.f32 %v2321, %v2444
    %v2487 = vadd.f32 %v2322, %v2449
    %v2488 = vadd.f32 %v2323, %v2452
    %v2489 = vadd.f32 %v2324, %v2457
    %v2490 = vadd.f32 %v2325, %v2460
    %v2491 = vadd.f32 %v2326, %v2465
    %v2492 = vadd.f32 %v2327, %v2468
    %v2493 = vadd.f32 %v2328, %v2473
    %v2494 = vadd.f32 %v2329, %v2476
    %v2498 = vunpack.c.l.b16 %v1448
    %v2499 = vunpack.c.l.b16 %v1450
    %v2500 = vunpack.c.l.b16 %v1452
    %v2501 = vpack.c.b16 %v2498, %v1504
    %v2502 = vpack.c.b16 %v2500, %v2499
    %v2507 = vunpack.c.l.b16 %v1479
    %v2508 = vunpack.c.l.b16 %v1480
    %v2509 = vunpack.c.l.b16 %v1481
    %v2510 = vunpack.c.l.b16 %v1482
    %v2511 = vpack.c.b16 %v2508, %v2507
    %v2512 = vpack.c.b16 %v2510, %v2509
    %v2516 = vsel %vm783, %v2501, 0
    %v2519 = vsel %vm783, %v2502, 0
    %2521 = vmatprep.subr.bf16.mxu0 0
    %2522 = vmatpush1.bf16.msra.mxu0 0
    %2523 = vmatprep.subr.bf16.mxu0 0
    %2524 = vmatpush1.bf16.msra.mxu0 0
    %2525 = vmatprep.subr.bf16.mxu0 0
    %2526 = vmatpush1.bf16.msra.mxu0 0
    %2527 = vmatprep.subr.bf16.mxu0 0
    %2528 = vmatpush1.bf16.msra.mxu0 0
    %2529 = vmatprep.subr.bf16.mxu0 0
    %2530 = vmatpush1.bf16.msra.mxu0 0
    %2531 = vmatprep.subr.bf16.mxu0 0
    %2532 = vmatpush1.bf16.msra.mxu0 0
    %2533 = vmatprep.subr.bf16.mxu0 0
    %2534 = vmatpush1.bf16.msra.mxu0 %v2512
    %2535 = vmatprep.subr.bf16.mxu0 0
    %2536 = vmatpush1.bf16.msra.mxu0 %v2511
    %2537 = vmatprep.subr.bf16.mxu0 0
    %2538 = vmatpush2.bf16.msra.mxu0 0
    %2539 = vmatprep.subr.bf16.mxu0 0
    %2540 = vmatpush2.bf16.msra.mxu0 0
    %2541 = vmatprep.subr.bf16.mxu0 0
    %2542 = vmatpush2.bf16.msra.mxu0 0
    %2543 = vmatprep.subr.bf16.mxu0 0
    %2544 = vmatpush2.bf16.msra.mxu0 0
    %2545 = vmatprep.subr.bf16.mxu0 0
    %2546 = vmatpush2.bf16.msra.mxu0 0
    %2547 = vmatprep.subr.bf16.mxu0 0
    %2548 = vmatpush2.bf16.msra.mxu0 0
    %2549 = vmatprep.subr.bf16.mxu0 0
    %2550 = vmatpush2.bf16.msra.mxu0 0
    %2551 = vmatprep.subr.bf16.mxu0 0
    %2552 = vmatpush2.bf16.msra.mxu0 0
    %2553 = vmatprep.mubr.bf16.mxu0 0
    %2554 = vmatmul.mubr.bf16.gmra.mxu0 %v1691
    %v2555 = vpop.f32.mrf.mxu0
    %v2556 = vadd.f32 0.0, %v2555
    %v2557 = vpop.f32.mrf.mxu0
    %v2558 = vpop.f32.mrf.mxu0
    %v2559 = vadd.f32 0.0, %v2558
    %v2560 = vpop.f32.mrf.mxu0
    %2561 = vmatprep.mubr.bf16.mxu0 0
    %2562 = vmatmul.mubr.bf16.gmra.mxu0 %v1694
    %v2563 = vpop.f32.mrf.mxu0
    %v2564 = vadd.f32 0.0, %v2563
    %v2565 = vpop.f32.mrf.mxu0
    %v2566 = vpop.f32.mrf.mxu0
    %v2567 = vadd.f32 0.0, %v2566
    %v2568 = vpop.f32.mrf.mxu0
    %2569 = vmatprep.mubr.bf16.mxu0 0
    %2570 = vmatmul.mubr.bf16.gmra.mxu0 %v1697
    %v2571 = vpop.f32.mrf.mxu0
    %v2572 = vadd.f32 0.0, %v2571
    %v2573 = vpop.f32.mrf.mxu0
    %v2574 = vpop.f32.mrf.mxu0
    %v2575 = vadd.f32 0.0, %v2574
    %v2576 = vpop.f32.mrf.mxu0
    %2577 = vmatprep.mubr.bf16.mxu0 0
    %2578 = vmatmul.mubr.bf16.gmra.mxu0 %v1700
    %v2579 = vpop.f32.mrf.mxu0
    %v2580 = vadd.f32 0.0, %v2579
    %v2581 = vpop.f32.mrf.mxu0
    %v2582 = vpop.f32.mrf.mxu0
    %v2583 = vadd.f32 0.0, %v2582
    %v2584 = vpop.f32.mrf.mxu0
    %2585 = vmatprep.mubr.bf16.mxu0 0
    %2586 = vmatmul.mubr.bf16.gmra.mxu0 %v1703
    %v2587 = vpop.f32.mrf.mxu0
    %v2588 = vadd.f32 0.0, %v2587
    %v2589 = vpop.f32.mrf.mxu0
    %v2590 = vpop.f32.mrf.mxu0
    %v2591 = vadd.f32 0.0, %v2590
    %v2592 = vpop.f32.mrf.mxu0
    %2593 = vmatprep.mubr.bf16.mxu0 0
    %2594 = vmatmul.mubr.bf16.gmra.mxu0 %v1706
    %v2595 = vpop.f32.mrf.mxu0
    %v2596 = vadd.f32 0.0, %v2595
    %v2597 = vpop.f32.mrf.mxu0
    %v2598 = vpop.f32.mrf.mxu0
    %v2599 = vadd.f32 0.0, %v2598
    %v2600 = vpop.f32.mrf.mxu0
    %2601 = vmatprep.mubr.bf16.mxu0 0
    %2602 = vmatmul.mubr.bf16.gmra.mxu0 %v2516
    %v2603 = vpop.f32.mrf.mxu0
    %v2604 = vadd.f32 0.0, %v2603
    %v2605 = vpop.f32.mrf.mxu0
    %v2606 = vpop.f32.mrf.mxu0
    %v2607 = vadd.f32 0.0, %v2606
    %v2608 = vpop.f32.mrf.mxu0
    %2609 = vmatprep.mubr.bf16.mxu0 0
    %2610 = vmatmul.mubr.bf16.gmra.mxu0 %v2519
    %v2611 = vpop.f32.mrf.mxu0
    %v2612 = vadd.f32 0.0, %v2611
    %v2613 = vpop.f32.mrf.mxu0
    %v2614 = vpop.f32.mrf.mxu0
    %v2615 = vadd.f32 0.0, %v2614
    %v2616 = vpop.f32.mrf.mxu0
    %2617 = vdwg.mxu0
    %v2618 = vadd.f32 %v2479, %v2556
    %v2619 = vadd.f32 %v2480, %v2559
    %v2620 = vadd.f32 %v2481, %v2564
    %v2621 = vadd.f32 %v2482, %v2567
    %v2622 = vadd.f32 %v2483, %v2572
    %v2623 = vadd.f32 %v2484, %v2575
    %v2624 = vadd.f32 %v2485, %v2580
    %v2625 = vadd.f32 %v2486, %v2583
    %v2626 = vadd.f32 %v2487, %v2588
    %v2627 = vadd.f32 %v2488, %v2591
    %v2628 = vadd.f32 %v2489, %v2596
    %v2629 = vadd.f32 %v2490, %v2599
    %v2630 = vadd.f32 %v2491, %v2604
    %v2631 = vadd.f32 %v2492, %v2607
    %v2632 = vadd.f32 %v2493, %v2612
    %v2633 = vadd.f32 %v2494, %v2615
    %v2638 = vunpack.c.l.b16 %v1447
    %v2639 = vunpack.c.l.b16 %v1449
    %v2640 = vunpack.c.l.b16 %v1451
    %v2641 = vunpack.c.l.b16 %v1453
    %v2642 = vpack.c.b16 %v2639, %v2638
    %v2643 = vpack.c.b16 %v2641, %v2640
    %v2648 = vunpack.c.l.b16 %v1483
    %v2649 = vunpack.c.l.b16 %v1484
    %v2650 = vunpack.c.l.b16 %v1485
    %v2651 = vunpack.c.l.b16 %v1486
    %v2652 = vpack.c.b16 %v2649, %v2648
    %v2653 = vpack.c.b16 %v2651, %v2650
    %v2657 = vsel %vm783, %v2642, 0
    %v2660 = vsel %vm783, %v2643, 0
    %2662 = vmatprep.subr.bf16.mxu0 0
    %2663 = vmatpush1.bf16.msra.mxu0 0
    %2664 = vmatprep.subr.bf16.mxu0 0
    %2665 = vmatpush1.bf16.msra.mxu0 0
    %2666 = vmatprep.subr.bf16.mxu0 0
    %2667 = vmatpush1.bf16.msra.mxu0 0
    %2668 = vmatprep.subr.bf16.mxu0 0
    %2669 = vmatpush1.bf16.msra.mxu0 0
    %2670 = vmatprep.subr.bf16.mxu0 0
    %2671 = vmatpush1.bf16.msra.mxu0 0
    %2672 = vmatprep.subr.bf16.mxu0 0
    %2673 = vmatpush1.bf16.msra.mxu0 0
    %2674 = vmatprep.subr.bf16.mxu0 0
    %2675 = vmatpush1.bf16.msra.mxu0 %v2653
    %2676 = vmatprep.subr.bf16.mxu0 0
    %2677 = vmatpush1.bf16.msra.mxu0 %v2652
    %2678 = vmatprep.subr.bf16.mxu0 0
    %2679 = vmatpush2.bf16.msra.mxu0 0
    %2680 = vmatprep.subr.bf16.mxu0 0
    %2681 = vmatpush2.bf16.msra.mxu0 0
    %2682 = vmatprep.subr.bf16.mxu0 0
    %2683 = vmatpush2.bf16.msra.mxu0 0
    %2684 = vmatprep.subr.bf16.mxu0 0
    %2685 = vmatpush2.bf16.msra.mxu0 0
    %2686 = vmatprep.subr.bf16.mxu0 0
    %2687 = vmatpush2.bf16.msra.mxu0 0
    %2688 = vmatprep.subr.bf16.mxu0 0
    %2689 = vmatpush2.bf16.msra.mxu0 0
    %2690 = vmatprep.subr.bf16.mxu0 0
    %2691 = vmatpush2.bf16.msra.mxu0 0
    %2692 = vmatprep.subr.bf16.mxu0 0
    %2693 = vmatpush2.bf16.msra.mxu0 0
    %2694 = vmatprep.mubr.bf16.mxu0 0
    %2695 = vmatmul.mubr.bf16.gmra.mxu0 %v1540
    %v2696 = vpop.f32.mrf.mxu0
    %v2697 = vadd.f32 0.0, %v2696
    %v2698 = vpop.f32.mrf.mxu0
    %v2699 = vpop.f32.mrf.mxu0
    %v2700 = vadd.f32 0.0, %v2699
    %v2701 = vpop.f32.mrf.mxu0
    %2702 = vmatprep.mubr.bf16.mxu0 0
    %2703 = vmatmul.mubr.bf16.gmra.mxu0 %v1543
    %v2704 = vpop.f32.mrf.mxu0
    %v2705 = vadd.f32 0.0, %v2704
    %v2706 = vpop.f32.mrf.mxu0
    %v2707 = vpop.f32.mrf.mxu0
    %v2708 = vadd.f32 0.0, %v2707
    %v2709 = vpop.f32.mrf.mxu0
    %2710 = vmatprep.mubr.bf16.mxu0 0
    %2711 = vmatmul.mubr.bf16.gmra.mxu0 %v1546
    %v2712 = vpop.f32.mrf.mxu0
    %v2713 = vadd.f32 0.0, %v2712
    %v2714 = vpop.f32.mrf.mxu0
    %v2715 = vpop.f32.mrf.mxu0
    %v2716 = vadd.f32 0.0, %v2715
    %v2717 = vpop.f32.mrf.mxu0
    %2718 = vmatprep.mubr.bf16.mxu0 0
    %2719 = vmatmul.mubr.bf16.gmra.mxu0 %v1549
    %v2720 = vpop.f32.mrf.mxu0
    %v2721 = vadd.f32 0.0, %v2720
    %v2722 = vpop.f32.mrf.mxu0
    %v2723 = vpop.f32.mrf.mxu0
    %v2724 = vadd.f32 0.0, %v2723
    %v2725 = vpop.f32.mrf.mxu0
    %2726 = vmatprep.mubr.bf16.mxu0 0
    %2727 = vmatmul.mubr.bf16.gmra.mxu0 %v1552
    %v2728 = vpop.f32.mrf.mxu0
    %v2729 = vadd.f32 0.0, %v2728
    %v2730 = vpop.f32.mrf.mxu0
    %v2731 = vpop.f32.mrf.mxu0
    %v2732 = vadd.f32 0.0, %v2731
    %v2733 = vpop.f32.mrf.mxu0
    %2734 = vmatprep.mubr.bf16.mxu0 0
    %2735 = vmatmul.mubr.bf16.gmra.mxu0 %v1555
    %v2736 = vpop.f32.mrf.mxu0
    %v2737 = vadd.f32 0.0, %v2736
    %v2738 = vpop.f32.mrf.mxu0
    %v2739 = vpop.f32.mrf.mxu0
    %v2740 = vadd.f32 0.0, %v2739
    %v2741 = vpop.f32.mrf.mxu0
    %2742 = vmatprep.mubr.bf16.mxu0 0
    %2743 = vmatmul.mubr.bf16.gmra.mxu0 %v2657
    %v2744 = vpop.f32.mrf.mxu0
    %v2745 = vadd.f32 0.0, %v2744
    %v2746 = vpop.f32.mrf.mxu0
    %v2747 = vpop.f32.mrf.mxu0
    %v2748 = vadd.f32 0.0, %v2747
    %v2749 = vpop.f32.mrf.mxu0
    %2750 = vmatprep.mubr.bf16.mxu0 0
    %2751 = vmatmul.mubr.bf16.gmra.mxu0 %v2660
    %v2752 = vpop.f32.mrf.mxu0
    %v2753 = vadd.f32 0.0, %v2752
    %v2754 = vpop.f32.mrf.mxu0
    %v2755 = vpop.f32.mrf.mxu0
    %v2756 = vadd.f32 0.0, %v2755
    %v2757 = vpop.f32.mrf.mxu0
    %2758 = vdwg.mxu0
    %v2759 = vadd.f32 %v2618, %v2697
    %v2760 = vadd.f32 %v2619, %v2700
    %v2761 = vadd.f32 %v2620, %v2705
    %v2762 = vadd.f32 %v2621, %v2708
    %v2763 = vadd.f32 %v2622, %v2713
    %v2764 = vadd.f32 %v2623, %v2716
    %v2765 = vadd.f32 %v2624, %v2721
    %v2766 = vadd.f32 %v2625, %v2724
    %v2767 = vadd.f32 %v2626, %v2729
    %v2768 = vadd.f32 %v2627, %v2732
    %v2769 = vadd.f32 %v2628, %v2737
    %v2770 = vadd.f32 %v2629, %v2740
    %v2771 = vadd.f32 %v2630, %v2745
    %v2772 = vadd.f32 %v2631, %v2748
    %v2773 = vadd.f32 %v2632, %v2753
    %v2774 = vadd.f32 %v2633, %v2756
    %v2776 = vunpack.c.l.b16 %v1454
    %v2777 = vpack.c.b16 %v2499, %v2498
    %v2778 = vpack.c.b16 %v2776, %v2500
    %v2783 = vunpack.c.l.b16 %v1487
    %v2784 = vunpack.c.l.b16 %v1488
    %v2785 = vunpack.c.l.b16 %v1489
    %v2786 = vunpack.c.l.b16 %v1490
    %v2787 = vpack.c.b16 %v2784, %v2783
    %v2788 = vpack.c.b16 %v2786, %v2785
    %v2792 = vsel %vm783, %v2777, 0
    %v2795 = vsel %vm783, %v2778, 0
    %2797 = vmatprep.subr.bf16.mxu0 0
    %2798 = vmatpush1.bf16.msra.mxu0 0
    %2799 = vmatprep.subr.bf16.mxu0 0
    %2800 = vmatpush1.bf16.msra.mxu0 0
    %2801 = vmatprep.subr.bf16.mxu0 0
    %2802 = vmatpush1.bf16.msra.mxu0 0
    %2803 = vmatprep.subr.bf16.mxu0 0
    %2804 = vmatpush1.bf16.msra.mxu0 0
    %2805 = vmatprep.subr.bf16.mxu0 0
    %2806 = vmatpush1.bf16.msra.mxu0 0
    %2807 = vmatprep.subr.bf16.mxu0 0
    %2808 = vmatpush1.bf16.msra.mxu0 0
    %2809 = vmatprep.subr.bf16.mxu0 0
    %2810 = vmatpush1.bf16.msra.mxu0 %v2788
    %2811 = vmatprep.subr.bf16.mxu0 0
    %2812 = vmatpush1.bf16.msra.mxu0 %v2787
    %2813 = vmatprep.subr.bf16.mxu0 0
    %2814 = vmatpush2.bf16.msra.mxu0 0
    %2815 = vmatprep.subr.bf16.mxu0 0
    %2816 = vmatpush2.bf16.msra.mxu0 0
    %2817 = vmatprep.subr.bf16.mxu0 0
    %2818 = vmatpush2.bf16.msra.mxu0 0
    %2819 = vmatprep.subr.bf16.mxu0 0
    %2820 = vmatpush2.bf16.msra.mxu0 0
    %2821 = vmatprep.subr.bf16.mxu0 0
    %2822 = vmatpush2.bf16.msra.mxu0 0
    %2823 = vmatprep.subr.bf16.mxu0 0
    %2824 = vmatpush2.bf16.msra.mxu0 0
    %2825 = vmatprep.subr.bf16.mxu0 0
    %2826 = vmatpush2.bf16.msra.mxu0 0
    %2827 = vmatprep.subr.bf16.mxu0 0
    %2828 = vmatpush2.bf16.msra.mxu0 0
    %2829 = vmatprep.mubr.bf16.mxu0 0
    %2830 = vmatmul.mubr.bf16.gmra.mxu0 %v1830
    %v2831 = vpop.f32.mrf.mxu0
    %v2832 = vadd.f32 0.0, %v2831
    %v2833 = vpop.f32.mrf.mxu0
    %v2834 = vpop.f32.mrf.mxu0
    %v2835 = vadd.f32 0.0, %v2834
    %v2836 = vpop.f32.mrf.mxu0
    %2837 = vmatprep.mubr.bf16.mxu0 0
    %2838 = vmatmul.mubr.bf16.gmra.mxu0 %v1833
    %v2839 = vpop.f32.mrf.mxu0
    %v2840 = vadd.f32 0.0, %v2839
    %v2841 = vpop.f32.mrf.mxu0
    %v2842 = vpop.f32.mrf.mxu0
    %v2843 = vadd.f32 0.0, %v2842
    %v2844 = vpop.f32.mrf.mxu0
    %2845 = vmatprep.mubr.bf16.mxu0 0
    %2846 = vmatmul.mubr.bf16.gmra.mxu0 %v1836
    %v2847 = vpop.f32.mrf.mxu0
    %v2848 = vadd.f32 0.0, %v2847
    %v2849 = vpop.f32.mrf.mxu0
    %v2850 = vpop.f32.mrf.mxu0
    %v2851 = vadd.f32 0.0, %v2850
    %v2852 = vpop.f32.mrf.mxu0
    %2853 = vmatprep.mubr.bf16.mxu0 0
    %2854 = vmatmul.mubr.bf16.gmra.mxu0 %v1839
    %v2855 = vpop.f32.mrf.mxu0
    %v2856 = vadd.f32 0.0, %v2855
    %v2857 = vpop.f32.mrf.mxu0
    %v2858 = vpop.f32.mrf.mxu0
    %v2859 = vadd.f32 0.0, %v2858
    %v2860 = vpop.f32.mrf.mxu0
    %2861 = vmatprep.mubr.bf16.mxu0 0
    %2862 = vmatmul.mubr.bf16.gmra.mxu0 %v1842
    %v2863 = vpop.f32.mrf.mxu0
    %v2864 = vadd.f32 0.0, %v2863
    %v2865 = vpop.f32.mrf.mxu0
    %v2866 = vpop.f32.mrf.mxu0
    %v2867 = vadd.f32 0.0, %v2866
    %v2868 = vpop.f32.mrf.mxu0
    %2869 = vmatprep.mubr.bf16.mxu0 0
    %2870 = vmatmul.mubr.bf16.gmra.mxu0 %v1845
    %v2871 = vpop.f32.mrf.mxu0
    %v2872 = vadd.f32 0.0, %v2871
    %v2873 = vpop.f32.mrf.mxu0
    %v2874 = vpop.f32.mrf.mxu0
    %v2875 = vadd.f32 0.0, %v2874
    %v2876 = vpop.f32.mrf.mxu0
    %2877 = vmatprep.mubr.bf16.mxu0 0
    %2878 = vmatmul.mubr.bf16.gmra.mxu0 %v2792
    %v2879 = vpop.f32.mrf.mxu0
    %v2880 = vadd.f32 0.0, %v2879
    %v2881 = vpop.f32.mrf.mxu0
    %v2882 = vpop.f32.mrf.mxu0
    %v2883 = vadd.f32 0.0, %v2882
    %v2884 = vpop.f32.mrf.mxu0
    %2885 = vmatprep.mubr.bf16.mxu0 0
    %2886 = vmatmul.mubr.bf16.gmra.mxu0 %v2795
    %v2887 = vpop.f32.mrf.mxu0
    %v2888 = vadd.f32 0.0, %v2887
    %v2889 = vpop.f32.mrf.mxu0
    %v2890 = vpop.f32.mrf.mxu0
    %v2891 = vadd.f32 0.0, %v2890
    %v2892 = vpop.f32.mrf.mxu0
    %2893 = vdwg.mxu0
    %v2894 = vadd.f32 %v2759, %v2832
    %v2895 = vadd.f32 %v2760, %v2835
    %v2896 = vadd.f32 %v2761, %v2840
    %v2897 = vadd.f32 %v2762, %v2843
    %v2898 = vadd.f32 %v2763, %v2848
    %v2899 = vadd.f32 %v2764, %v2851
    %v2900 = vadd.f32 %v2765, %v2856
    %v2901 = vadd.f32 %v2766, %v2859
    %v2902 = vadd.f32 %v2767, %v2864
    %v2903 = vadd.f32 %v2768, %v2867
    %v2904 = vadd.f32 %v2769, %v2872
    %v2905 = vadd.f32 %v2770, %v2875
    %v2906 = vadd.f32 %v2771, %v2880
    %v2907 = vadd.f32 %v2772, %v2883
    %v2908 = vadd.f32 %v2773, %v2888
    %v2909 = vadd.f32 %v2774, %v2891
    %v2910 = vsel %vm783, %v2894, 0.0
    %v2911 = vsel %vm783, %v2895, 0.0
    %v2912 = vadd.f32 %v2910, %v2911
    %v2913 = vsel %vm783, %v2896, 0.0
    %v2914 = vadd.f32 %v2912, %v2913
    %v2915 = vsel %vm783, %v2897, 0.0
    %v2916 = vadd.f32 %v2914, %v2915
    %v2917 = vsel %vm783, %v2898, 0.0
    %v2918 = vadd.f32 %v2916, %v2917
    %v2919 = vsel %vm783, %v2899, 0.0
    %v2920 = vadd.f32 %v2918, %v2919
    %v2921 = vsel %vm783, %v2900, 0.0
    %v2922 = vadd.f32 %v2920, %v2921
    %v2923 = vsel %vm783, %v2901, 0.0
    %v2924 = vadd.f32 %v2922, %v2923
    %v2925 = vsel %vm783, %v2902, 0.0
    %v2926 = vadd.f32 %v2924, %v2925
    %v2927 = vsel %vm783, %v2903, 0.0
    %v2928 = vadd.f32 %v2926, %v2927
    %v2929 = vsel %vm783, %v2904, 0.0
    %v2930 = vadd.f32 %v2928, %v2929
    %v2931 = vsel %vm783, %v2905, 0.0
    %v2932 = vadd.f32 %v2930, %v2931
    %v2933 = vsel %vm783, %v2906, 0.0
    %v2934 = vadd.f32 %v2932, %v2933
    %v2935 = vsel %vm783, %v2907, 0.0
    %v2936 = vadd.f32 %v2934, %v2935
    %v2937 = vsel %vm783, %v2908, 0.0
    %v2938 = vadd.f32 %v2936, %v2937
    %v2939 = vsel %vm783, %v2909, 0.0
    %v2940 = vadd.f32 %v2938, %v2939
    %v2941 = vrot.slane %v2940, 4
    %v2942 = vadd.f32 %v2940, %v2941
    %v2943 = vrot.slane %v2942, 2
    %v2944 = vadd.f32 %v2942, %v2943
    %v2945 = vrot.slane %v2944, 1
    %v2946 = vadd.f32 %v2944, %v2945
    %v2947 = vrcp.pop 128.0
    %v2948 = vmul.f32 %v2946, %v2947
    %v2949 = vsub.f32 %v2894, %v2948
    %v2950 = vsub.f32 %v2895, %v2948
    %v2951 = vsub.f32 %v2896, %v2948
    %v2952 = vsub.f32 %v2897, %v2948
    %v2953 = vsub.f32 %v2898, %v2948
    %v2954 = vsub.f32 %v2899, %v2948
    %v2955 = vsub.f32 %v2900, %v2948
    %v2956 = vsub.f32 %v2901, %v2948
    %v2957 = vsub.f32 %v2902, %v2948
    %v2958 = vsub.f32 %v2903, %v2948
    %v2959 = vsub.f32 %v2904, %v2948
    %v2960 = vsub.f32 %v2905, %v2948
    %v2961 = vsub.f32 %v2906, %v2948
    %v2962 = vsub.f32 %v2907, %v2948
    %v2963 = vsub.f32 %v2908, %v2948
    %v2964 = vsub.f32 %v2909, %v2948
    %v2965 = vmul.f32 %v2949, %v2949
    %v2966 = vmul.f32 %v2950, %v2950
    %v2967 = vmul.f32 %v2951, %v2951
    %v2968 = vmul.f32 %v2952, %v2952
    %v2969 = vmul.f32 %v2953, %v2953
    %v2970 = vmul.f32 %v2954, %v2954
    %v2971 = vmul.f32 %v2955, %v2955
    %v2972 = vmul.f32 %v2956, %v2956
    %v2973 = vmul.f32 %v2957, %v2957
    %v2974 = vmul.f32 %v2958, %v2958
    %v2975 = vmul.f32 %v2959, %v2959
    %v2976 = vmul.f32 %v2960, %v2960
    %v2977 = vmul.f32 %v2961, %v2961
    %v2978 = vmul.f32 %v2962, %v2962
    %v2979 = vmul.f32 %v2963, %v2963
    %v2980 = vmul.f32 %v2964, %v2964
    %v2981 = vsel %vm783, %v2965, 0.0
    %v2982 = vsel %vm783, %v2966, 0.0
    %v2983 = vadd.f32 %v2981, %v2982
    %v2984 = vsel %vm783, %v2967, 0.0
    %v2985 = vadd.f32 %v2983, %v2984
    %v2986 = vsel %vm783, %v2968, 0.0
    %v2987 = vadd.f32 %v2985, %v2986
    %v2988 = vsel %vm783, %v2969, 0.0
    %v2989 = vadd.f32 %v2987, %v2988
    %v2990 = vsel %vm783, %v2970, 0.0
    %v2991 = vadd.f32 %v2989, %v2990
    %v2992 = vsel %vm783, %v2971, 0.0
    %v2993 = vadd.f32 %v2991, %v2992
    %v2994 = vsel %vm783, %v2972, 0.0
    %v2995 = vadd.f32 %v2993, %v2994
    %v2996 = vsel %vm783, %v2973, 0.0
    %v2997 = vadd.f32 %v2995, %v2996
    %v2998 = vsel %vm783, %v2974, 0.0
    %v2999 = vadd.f32 %v2997, %v2998
    %v3000 = vsel %vm783, %v2975, 0.0
    %v3001 = vadd.f32 %v2999, %v3000
    %v3002 = vsel %vm783, %v2976, 0.0
    %v3003 = vadd.f32 %v3001, %v3002
    %v3004 = vsel %vm783, %v2977, 0.0
    %v3005 = vadd.f32 %v3003, %v3004
    %v3006 = vsel %vm783, %v2978, 0.0
    %v3007 = vadd.f32 %v3005, %v3006
    %v3008 = vsel %vm783, %v2979, 0.0
    %v3009 = vadd.f32 %v3007, %v3008
    %v3010 = vsel %vm783, %v2980, 0.0
    %v3011 = vadd.f32 %v3009, %v3010
    %v3012 = vrot.slane %v3011, 4
    %v3013 = vadd.f32 %v3011, %v3012
    %v3014 = vrot.slane %v3013, 2
    %v3015 = vadd.f32 %v3013, %v3014
    %v3016 = vrot.slane %v3015, 1
    %v3017 = vadd.f32 %v3015, %v3016
    %v3018 = vmul.f32 %v3017, %v2947
    %v3019 = vld [vmem:[%s5] sm:$0x1]
    %v3020 = vadd.f32 %v3018, 1e-05
    %v3021 = vrsqrt.pop %v3020
    %v3022 = vmul.f32 %v3019, %v3021
    %v3024 = vlaneseq
    %v3025 = vshrl.u32 %v3024, 7
    %v3026 = vsub.s32 0, %v3025
    %v3027 = vrot.slane %v3022, %v3026
    %v3029 = vmul.f32 %v2949, %v3027
    %v3030 = vmul.f32 %v2950, %v3027
    %v3031 = vmul.f32 %v2951, %v3027
    %v3032 = vmul.f32 %v2952, %v3027
    %v3033 = vmul.f32 %v2953, %v3027
    %v3034 = vmul.f32 %v2954, %v3027
    %v3035 = vmul.f32 %v2955, %v3027
    %v3036 = vmul.f32 %v2956, %v3027
    %v3037 = vmul.f32 %v2957, %v3027
    %v3038 = vmul.f32 %v2958, %v3027
    %v3039 = vmul.f32 %v2959, %v3027
    %v3040 = vmul.f32 %v2960, %v3027
    %v3041 = vmul.f32 %v2961, %v3027
    %v3042 = vmul.f32 %v2962, %v3027
    %v3043 = vmul.f32 %v2963, %v3027
    %v3044 = vmul.f32 %v2964, %v3027
    %v3045 = vld [vmem:[%s6] sm:$0x1]
    %v3047 = vlaneseq
    %v3048 = vshrl.u32 %v3047, 7
    %v3049 = vsub.s32 0, %v3048
    %v3050 = vrot.slane %v3045, %v3049
    %v3052 = vadd.f32 %v3029, %v3050
    %v3053 = vadd.f32 %v3030, %v3050
    %v3054 = vadd.f32 %v3031, %v3050
    %v3055 = vadd.f32 %v3032, %v3050
    %v3056 = vadd.f32 %v3033, %v3050
    %v3057 = vadd.f32 %v3034, %v3050
    %v3058 = vadd.f32 %v3035, %v3050
    %v3059 = vadd.f32 %v3036, %v3050
    %v3060 = vadd.f32 %v3037, %v3050
    %v3061 = vadd.f32 %v3038, %v3050
    %v3062 = vadd.f32 %v3039, %v3050
    %v3063 = vadd.f32 %v3040, %v3050
    %v3064 = vadd.f32 %v3041, %v3050
    %v3065 = vadd.f32 %v3042, %v3050
    %v3066 = vadd.f32 %v3043, %v3050
    %v3067 = vadd.f32 %v3044, %v3050
    %v3068 = vmax.f32 %v3052, 0.0
    %v3069 = vmax.f32 %v3053, 0.0
    %v3070 = vmax.f32 %v3054, 0.0
    %v3071 = vmax.f32 %v3055, 0.0
    %v3072 = vmax.f32 %v3056, 0.0
    %v3073 = vmax.f32 %v3057, 0.0
    %v3074 = vmax.f32 %v3058, 0.0
    %v3075 = vmax.f32 %v3059, 0.0
    %v3076 = vmax.f32 %v3060, 0.0
    %v3077 = vmax.f32 %v3061, 0.0
    %v3078 = vmax.f32 %v3062, 0.0
    %v3079 = vmax.f32 %v3063, 0.0
    %v3080 = vmax.f32 %v3064, 0.0
    %v3081 = vmax.f32 %v3065, 0.0
    %v3082 = vmax.f32 %v3066, 0.0
    %v3083 = vmax.f32 %v3067, 0.0
    %v3084 = vpack.c.bf16 %v3069, %v3068
    %v3085 = vpack.c.bf16 %v3071, %v3070
    %v3086 = vpack.c.bf16 %v3073, %v3072
    %v3087 = vpack.c.bf16 %v3075, %v3074
    %v3088 = vpack.c.bf16 %v3077, %v3076
    %v3089 = vpack.c.bf16 %v3079, %v3078
    %v3090 = vpack.c.bf16 %v3081, %v3080
    %v3091 = vpack.c.bf16 %v3083, %v3082
    %v3092 = vld [vmem:[%s7] sm:$0xf]
    %v3093 = vld [vmem:[%s7 + $0x4] sm:$0xf]
    %v3094 = vld [vmem:[%s7 + $0x8] sm:$0xf]
    %v3095 = vld [vmem:[%s7 + $0xc] sm:$0xf]
    %v3100 = vunpack.c.l.b16 %v3092
    %v3101 = vunpack.c.l.b16 %v3093
    %v3102 = vunpack.c.l.b16 %v3094
    %v3103 = vunpack.c.l.b16 %v3095
    %v3104 = vpack.c.b16 %v3101, %v3100
    %v3105 = vpack.c.b16 %v3103, %v3102
    %v3109 = vsel %vm783, %v3084, 0
    %v3112 = vsel %vm783, %v3085, 0
    %v3115 = vsel %vm783, %v3086, 0
    %v3118 = vsel %vm783, %v3087, 0
    %v3121 = vsel %vm783, %v3088, 0
    %v3124 = vsel %vm783, %v3089, 0
    %v3127 = vsel %vm783, %v3090, 0
    %v3130 = vsel %vm783, %v3091, 0
    %3132 = vmatprep.subr.bf16.mxu0 0
    %3133 = vmatpush1.bf16.msra.mxu0 0
    %3134 = vmatprep.subr.bf16.mxu0 0
    %3135 = vmatpush1.bf16.msra.mxu0 0
    %3136 = vmatprep.subr.bf16.mxu0 0
    %3137 = vmatpush1.bf16.msra.mxu0 0
    %3138 = vmatprep.subr.bf16.mxu0 0
    %3139 = vmatpush1.bf16.msra.mxu0 0
    %3140 = vmatprep.subr.bf16.mxu0 0
    %3141 = vmatpush1.bf16.msra.mxu0 0
    %3142 = vmatprep.subr.bf16.mxu0 0
    %3143 = vmatpush1.bf16.msra.mxu0 0
    %3144 = vmatprep.subr.bf16.mxu0 0
    %3145 = vmatpush1.bf16.msra.mxu0 %v3105
    %3146 = vmatprep.subr.bf16.mxu0 0
    %3147 = vmatpush1.bf16.msra.mxu0 %v3104
    %3148 = vmatprep.subr.bf16.mxu0 0
    %3149 = vmatpush2.bf16.msra.mxu0 0
    %3150 = vmatprep.subr.bf16.mxu0 0
    %3151 = vmatpush2.bf16.msra.mxu0 0
    %3152 = vmatprep.subr.bf16.mxu0 0
    %3153 = vmatpush2.bf16.msra.mxu0 0
    %3154 = vmatprep.subr.bf16.mxu0 0
    %3155 = vmatpush2.bf16.msra.mxu0 0
    %3156 = vmatprep.subr.bf16.mxu0 0
    %3157 = vmatpush2.bf16.msra.mxu0 0
    %3158 = vmatprep.subr.bf16.mxu0 0
    %3159 = vmatpush2.bf16.msra.mxu0 0
    %3160 = vmatprep.subr.bf16.mxu0 0
    %3161 = vmatpush2.bf16.msra.mxu0 0
    %3162 = vmatprep.subr.bf16.mxu0 0
    %3163 = vmatpush2.bf16.msra.mxu0 0
    %3164 = vmatprep.mubr.bf16.mxu0 0
    %3165 = vmatmul.mubr.bf16.gmra.mxu0 %v3109
    %v3166 = vpop.f32.mrf.mxu0
    %v3167 = vadd.f32 0.0, %v3166
    %v3168 = vpop.f32.mrf.mxu0
    %v3169 = vpop.f32.mrf.mxu0
    %v3170 = vadd.f32 0.0, %v3169
    %v3171 = vpop.f32.mrf.mxu0
    %3172 = vmatprep.mubr.bf16.mxu0 0
    %3173 = vmatmul.mubr.bf16.gmra.mxu0 %v3112
    %v3174 = vpop.f32.mrf.mxu0
    %v3175 = vadd.f32 0.0, %v3174
    %v3176 = vpop.f32.mrf.mxu0
    %v3177 = vpop.f32.mrf.mxu0
    %v3178 = vadd.f32 0.0, %v3177
    %v3179 = vpop.f32.mrf.mxu0
    %3180 = vmatprep.mubr.bf16.mxu0 0
    %3181 = vmatmul.mubr.bf16.gmra.mxu0 %v3115
    %v3182 = vpop.f32.mrf.mxu0
    %v3183 = vadd.f32 0.0, %v3182
    %v3184 = vpop.f32.mrf.mxu0
    %v3185 = vpop.f32.mrf.mxu0
    %v3186 = vadd.f32 0.0, %v3185
    %v3187 = vpop.f32.mrf.mxu0
    %3188 = vmatprep.mubr.bf16.mxu0 0
    %3189 = vmatmul.mubr.bf16.gmra.mxu0 %v3118
    %v3190 = vpop.f32.mrf.mxu0
    %v3191 = vadd.f32 0.0, %v3190
    %v3192 = vpop.f32.mrf.mxu0
    %v3193 = vpop.f32.mrf.mxu0
    %v3194 = vadd.f32 0.0, %v3193
    %v3195 = vpop.f32.mrf.mxu0
    %3196 = vmatprep.mubr.bf16.mxu0 0
    %3197 = vmatmul.mubr.bf16.gmra.mxu0 %v3121
    %v3198 = vpop.f32.mrf.mxu0
    %v3199 = vadd.f32 0.0, %v3198
    %v3200 = vpop.f32.mrf.mxu0
    %v3201 = vpop.f32.mrf.mxu0
    %v3202 = vadd.f32 0.0, %v3201
    %v3203 = vpop.f32.mrf.mxu0
    %3204 = vmatprep.mubr.bf16.mxu0 0
    %3205 = vmatmul.mubr.bf16.gmra.mxu0 %v3124
    %v3206 = vpop.f32.mrf.mxu0
    %v3207 = vadd.f32 0.0, %v3206
    %v3208 = vpop.f32.mrf.mxu0
    %v3209 = vpop.f32.mrf.mxu0
    %v3210 = vadd.f32 0.0, %v3209
    %v3211 = vpop.f32.mrf.mxu0
    %3212 = vmatprep.mubr.bf16.mxu0 0
    %3213 = vmatmul.mubr.bf16.gmra.mxu0 %v3127
    %v3214 = vpop.f32.mrf.mxu0
    %v3215 = vadd.f32 0.0, %v3214
    %v3216 = vpop.f32.mrf.mxu0
    %v3217 = vpop.f32.mrf.mxu0
    %v3218 = vadd.f32 0.0, %v3217
    %v3219 = vpop.f32.mrf.mxu0
    %3220 = vmatprep.mubr.bf16.mxu0 0
    %3221 = vmatmul.mubr.bf16.gmra.mxu0 %v3130
    %v3222 = vpop.f32.mrf.mxu0
    %v3223 = vadd.f32 0.0, %v3222
    %v3224 = vpop.f32.mrf.mxu0
    %v3225 = vpop.f32.mrf.mxu0
    %v3226 = vadd.f32 0.0, %v3225
    %v3227 = vpop.f32.mrf.mxu0
    %3228 = vdwg.mxu0
    %v3229 = vadd.f32 %v3167, %v3170
    %v3230 = vadd.f32 %v3229, %v3175
    %v3231 = vadd.f32 %v3230, %v3178
    %v3232 = vadd.f32 %v3231, %v3183
    %v3233 = vadd.f32 %v3232, %v3186
    %v3234 = vadd.f32 %v3233, %v3191
    %v3235 = vadd.f32 %v3234, %v3194
    %v3236 = vadd.f32 %v3235, %v3199
    %v3237 = vadd.f32 %v3236, %v3202
    %v3238 = vadd.f32 %v3237, %v3207
    %v3239 = vadd.f32 %v3238, %v3210
    %v3240 = vadd.f32 %v3239, %v3215
    %v3241 = vadd.f32 %v3240, %v3218
    %v3242 = vadd.f32 %v3241, %v3223
    %v3243 = vadd.f32 %v3242, %v3226
    %v3244 = vrot.slane %v3243, 4
    %v3245 = vadd.f32 %v3243, %v3244
    %v3246 = vrot.slane %v3245, 2
    %v3247 = vadd.f32 %v3245, %v3246
    %v3248 = vrot.slane %v3247, 1
    %v3249 = vadd.f32 %v3247, %v3248
    %v3250 = vmul.f32 %v3249, %v2947
    %v3251 = vsub.f32 %v3167, %v3250
    %v3252 = vsub.f32 %v3170, %v3250
    %v3253 = vsub.f32 %v3175, %v3250
    %v3254 = vsub.f32 %v3178, %v3250
    %v3255 = vsub.f32 %v3183, %v3250
    %v3256 = vsub.f32 %v3186, %v3250
    %v3257 = vsub.f32 %v3191, %v3250
    %v3258 = vsub.f32 %v3194, %v3250
    %v3259 = vsub.f32 %v3199, %v3250
    %v3260 = vsub.f32 %v3202, %v3250
    %v3261 = vsub.f32 %v3207, %v3250
    %v3262 = vsub.f32 %v3210, %v3250
    %v3263 = vsub.f32 %v3215, %v3250
    %v3264 = vsub.f32 %v3218, %v3250
    %v3265 = vsub.f32 %v3223, %v3250
    %v3266 = vsub.f32 %v3226, %v3250
    %v3267 = vmul.f32 %v3251, %v3251
    %v3268 = vmul.f32 %v3252, %v3252
    %v3269 = vmul.f32 %v3253, %v3253
    %v3270 = vmul.f32 %v3254, %v3254
    %v3271 = vmul.f32 %v3255, %v3255
    %v3272 = vmul.f32 %v3256, %v3256
    %v3273 = vmul.f32 %v3257, %v3257
    %v3274 = vmul.f32 %v3258, %v3258
    %v3275 = vmul.f32 %v3259, %v3259
    %v3276 = vmul.f32 %v3260, %v3260
    %v3277 = vmul.f32 %v3261, %v3261
    %v3278 = vmul.f32 %v3262, %v3262
    %v3279 = vmul.f32 %v3263, %v3263
    %v3280 = vmul.f32 %v3264, %v3264
    %v3281 = vmul.f32 %v3265, %v3265
    %v3282 = vmul.f32 %v3266, %v3266
    %v3283 = vadd.f32 %v3267, %v3268
    %v3284 = vadd.f32 %v3283, %v3269
    %v3285 = vadd.f32 %v3284, %v3270
    %v3286 = vadd.f32 %v3285, %v3271
    %v3287 = vadd.f32 %v3286, %v3272
    %v3288 = vadd.f32 %v3287, %v3273
    %v3289 = vadd.f32 %v3288, %v3274
    %v3290 = vadd.f32 %v3289, %v3275
    %v3291 = vadd.f32 %v3290, %v3276
    %v3292 = vadd.f32 %v3291, %v3277
    %v3293 = vadd.f32 %v3292, %v3278
    %v3294 = vadd.f32 %v3293, %v3279
    %v3295 = vadd.f32 %v3294, %v3280
    %v3296 = vadd.f32 %v3295, %v3281
    %v3297 = vadd.f32 %v3296, %v3282
    %v3298 = vrot.slane %v3297, 4
    %v3299 = vadd.f32 %v3297, %v3298
    %v3300 = vrot.slane %v3299, 2
    %v3301 = vadd.f32 %v3299, %v3300
    %v3302 = vrot.slane %v3301, 1
    %v3303 = vadd.f32 %v3301, %v3302
    %v3304 = vmul.f32 %v3303, %v2947
    %v3305 = vld [vmem:[%s8] sm:$0x1]
    %v3306 = vadd.f32 %v3304, 1e-05
    %v3307 = vrsqrt.pop %v3306
    %v3308 = vmul.f32 %v3305, %v3307
    %v3310 = vlaneseq
    %v3311 = vshrl.u32 %v3310, 7
    %v3312 = vsub.s32 0, %v3311
    %v3313 = vrot.slane %v3308, %v3312
    %v3315 = vmul.f32 %v3251, %v3313
    %v3316 = vmul.f32 %v3252, %v3313
    %v3317 = vmul.f32 %v3253, %v3313
    %v3318 = vmul.f32 %v3254, %v3313
    %v3319 = vmul.f32 %v3255, %v3313
    %v3320 = vmul.f32 %v3256, %v3313
    %v3321 = vmul.f32 %v3257, %v3313
    %v3322 = vmul.f32 %v3258, %v3313
    %v3323 = vmul.f32 %v3259, %v3313
    %v3324 = vmul.f32 %v3260, %v3313
    %v3325 = vmul.f32 %v3261, %v3313
    %v3326 = vmul.f32 %v3262, %v3313
    %v3327 = vmul.f32 %v3263, %v3313
    %v3328 = vmul.f32 %v3264, %v3313
    %v3329 = vmul.f32 %v3265, %v3313
    %v3330 = vmul.f32 %v3266, %v3313
    %v3331 = vld [vmem:[%s9] sm:$0x1]
    %v3333 = vlaneseq
    %v3334 = vshrl.u32 %v3333, 7
    %v3335 = vsub.s32 0, %v3334
    %v3336 = vrot.slane %v3331, %v3335
    %v3338 = vadd.f32 %v3315, %v3336
    %v3339 = vadd.f32 %v3316, %v3336
    %v3340 = vadd.f32 %v3317, %v3336
    %v3341 = vadd.f32 %v3318, %v3336
    %v3342 = vadd.f32 %v3319, %v3336
    %v3343 = vadd.f32 %v3320, %v3336
    %v3344 = vadd.f32 %v3321, %v3336
    %v3345 = vadd.f32 %v3322, %v3336
    %v3346 = vadd.f32 %v3323, %v3336
    %v3347 = vadd.f32 %v3324, %v3336
    %v3348 = vadd.f32 %v3325, %v3336
    %v3349 = vadd.f32 %v3326, %v3336
    %v3350 = vadd.f32 %v3327, %v3336
    %v3351 = vadd.f32 %v3328, %v3336
    %v3352 = vadd.f32 %v3329, %v3336
    %v3353 = vadd.f32 %v3330, %v3336
    %v3354 = vld [vmem:[%s10] sm:$0xf]
    %v3355 = vld [vmem:[%s10 + $0x4] sm:$0xf]
    %v3356 = vld [vmem:[%s10 + $0x8] sm:$0xf]
    %v3357 = vld [vmem:[%s10 + $0xc] sm:$0xf]
    %v3358 = vld [vmem:[%s10 + $0x10] sm:$0xf]
    %v3359 = vld [vmem:[%s10 + $0x14] sm:$0xf]
    %v3360 = vld [vmem:[%s10 + $0x18] sm:$0xf]
    %v3361 = vld [vmem:[%s10 + $0x1c] sm:$0xf]
    %v3362 = vpack.c.b16 %v279, %v277
    %v3363 = vpack.c.b16 %v283, %v281
    %v3364 = vpack.c.b16 %v295, %v293
    %v3365 = vpack.c.b16 %v299, %v297
    %v3366 = vpack.c.b16 %v311, %v309
    %v3367 = vpack.c.b16 %v315, %v313
    %v3368 = vpack.c.b16 %v327, %v325
    %v3369 = vpack.c.b16 %v331, %v329
    %v3378 = vunpack.c.l.b16 %v3354
    %v3379 = vunpack.c.l.b16 %v3355
    %v3380 = vunpack.c.l.b16 %v3356
    %v3381 = vunpack.c.l.b16 %v3357
    %v3382 = vunpack.c.l.b16 %v3358
    %v3383 = vunpack.c.l.b16 %v3359
    %v3384 = vunpack.c.l.b16 %v3360
    %v3385 = vunpack.c.l.b16 %v3361
    %v3386 = vpack.c.b16 %v3379, %v3378
    %v3387 = vpack.c.b16 %v3381, %v3380
    %v3388 = vpack.c.b16 %v3383, %v3382
    %v3389 = vpack.c.b16 %v3385, %v3384
    %v3395 = vsel %vm397, %v3362, 0
    %v3398 = vsel %vm397, %v3363, 0
    %v3401 = vsel %vm397, %v3364, 0
    %v3404 = vsel %vm397, %v3365, 0
    %v3407 = vsel %vm397, %v3366, 0
    %v3410 = vsel %vm397, %v3367, 0
    %v3413 = vsel %vm397, %v3368, 0
    %v3416 = vsel %vm397, %v3369, 0
    %3418 = vmatprep.subr.bf16.mxu0 0
    %3419 = vmatpush1.bf16.msra.mxu0 0
    %3420 = vmatprep.subr.bf16.mxu0 0
    %3421 = vmatpush1.bf16.msra.mxu0 0
    %3422 = vmatprep.subr.bf16.mxu0 0
    %3423 = vmatpush1.bf16.msra.mxu0 0
    %3424 = vmatprep.subr.bf16.mxu0 0
    %3425 = vmatpush1.bf16.msra.mxu0 0
    %3426 = vmatprep.subr.bf16.mxu0 0
    %3427 = vmatpush1.bf16.msra.mxu0 %v3389
    %3428 = vmatprep.subr.bf16.mxu0 0
    %3429 = vmatpush1.bf16.msra.mxu0 %v3388
    %3430 = vmatprep.subr.bf16.mxu0 0
    %3431 = vmatpush1.bf16.msra.mxu0 %v3387
    %3432 = vmatprep.subr.bf16.mxu0 0
    %3433 = vmatpush1.bf16.msra.mxu0 %v3386
    %3434 = vmatprep.subr.bf16.mxu0 0
    %3435 = vmatpush2.bf16.msra.mxu0 0
    %3436 = vmatprep.subr.bf16.mxu0 0
    %3437 = vmatpush2.bf16.msra.mxu0 0
    %3438 = vmatprep.subr.bf16.mxu0 0
    %3439 = vmatpush2.bf16.msra.mxu0 0
    %3440 = vmatprep.subr.bf16.mxu0 0
    %3441 = vmatpush2.bf16.msra.mxu0 0
    %3442 = vmatprep.subr.bf16.mxu0 0
    %3443 = vmatpush2.bf16.msra.mxu0 0
    %3444 = vmatprep.subr.bf16.mxu0 0
    %3445 = vmatpush2.bf16.msra.mxu0 0
    %3446 = vmatprep.subr.bf16.mxu0 0
    %3447 = vmatpush2.bf16.msra.mxu0 0
    %3448 = vmatprep.subr.bf16.mxu0 0
    %3449 = vmatpush2.bf16.msra.mxu0 0
    %3450 = vmatprep.mubr.bf16.mxu0 0
    %3451 = vmatmul.mubr.bf16.gmra.mxu0 %v3395
    %v3452 = vpop.f32.mrf.mxu0
    %v3453 = vadd.f32 0.0, %v3452
    %v3454 = vpop.f32.mrf.mxu0
    %v3455 = vpop.f32.mrf.mxu0
    %v3456 = vadd.f32 0.0, %v3455
    %v3457 = vpop.f32.mrf.mxu0
    %3458 = vmatprep.mubr.bf16.mxu0 0
    %3459 = vmatmul.mubr.bf16.gmra.mxu0 %v3398
    %v3460 = vpop.f32.mrf.mxu0
    %v3461 = vadd.f32 0.0, %v3460
    %v3462 = vpop.f32.mrf.mxu0
    %v3463 = vpop.f32.mrf.mxu0
    %v3464 = vadd.f32 0.0, %v3463
    %v3465 = vpop.f32.mrf.mxu0
    %3466 = vmatprep.mubr.bf16.mxu0 0
    %3467 = vmatmul.mubr.bf16.gmra.mxu0 %v3401
    %v3468 = vpop.f32.mrf.mxu0
    %v3469 = vadd.f32 0.0, %v3468
    %v3470 = vpop.f32.mrf.mxu0
    %v3471 = vpop.f32.mrf.mxu0
    %v3472 = vadd.f32 0.0, %v3471
    %v3473 = vpop.f32.mrf.mxu0
    %3474 = vmatprep.mubr.bf16.mxu0 0
    %3475 = vmatmul.mubr.bf16.gmra.mxu0 %v3404
    %v3476 = vpop.f32.mrf.mxu0
    %v3477 = vadd.f32 0.0, %v3476
    %v3478 = vpop.f32.mrf.mxu0
    %v3479 = vpop.f32.mrf.mxu0
    %v3480 = vadd.f32 0.0, %v3479
    %v3481 = vpop.f32.mrf.mxu0
    %3482 = vmatprep.mubr.bf16.mxu0 0
    %3483 = vmatmul.mubr.bf16.gmra.mxu0 %v3407
    %v3484 = vpop.f32.mrf.mxu0
    %v3485 = vadd.f32 0.0, %v3484
    %v3486 = vpop.f32.mrf.mxu0
    %v3487 = vpop.f32.mrf.mxu0
    %v3488 = vadd.f32 0.0, %v3487
    %v3489 = vpop.f32.mrf.mxu0
    %3490 = vmatprep.mubr.bf16.mxu0 0
    %3491 = vmatmul.mubr.bf16.gmra.mxu0 %v3410
    %v3492 = vpop.f32.mrf.mxu0
    %v3493 = vadd.f32 0.0, %v3492
    %v3494 = vpop.f32.mrf.mxu0
    %v3495 = vpop.f32.mrf.mxu0
    %v3496 = vadd.f32 0.0, %v3495
    %v3497 = vpop.f32.mrf.mxu0
    %3498 = vmatprep.mubr.bf16.mxu0 0
    %3499 = vmatmul.mubr.bf16.gmra.mxu0 %v3413
    %v3500 = vpop.f32.mrf.mxu0
    %v3501 = vadd.f32 0.0, %v3500
    %v3502 = vpop.f32.mrf.mxu0
    %v3503 = vpop.f32.mrf.mxu0
    %v3504 = vadd.f32 0.0, %v3503
    %v3505 = vpop.f32.mrf.mxu0
    %3506 = vmatprep.mubr.bf16.mxu0 0
    %3507 = vmatmul.mubr.bf16.gmra.mxu0 %v3416
    %v3508 = vpop.f32.mrf.mxu0
    %v3509 = vadd.f32 0.0, %v3508
    %v3510 = vpop.f32.mrf.mxu0
    %v3511 = vpop.f32.mrf.mxu0
    %v3512 = vadd.f32 0.0, %v3511
    %v3513 = vpop.f32.mrf.mxu0
    %3514 = vdwg.mxu0
    %v3515 = vadd.f32 %v3453, %v3456
    %v3516 = vadd.f32 %v3515, %v3461
    %v3517 = vadd.f32 %v3516, %v3464
    %v3518 = vadd.f32 %v3517, %v3469
    %v3519 = vadd.f32 %v3518, %v3472
    %v3520 = vadd.f32 %v3519, %v3477
    %v3521 = vadd.f32 %v3520, %v3480
    %v3522 = vadd.f32 %v3521, %v3485
    %v3523 = vadd.f32 %v3522, %v3488
    %v3524 = vadd.f32 %v3523, %v3493
    %v3525 = vadd.f32 %v3524, %v3496
    %v3526 = vadd.f32 %v3525, %v3501
    %v3527 = vadd.f32 %v3526, %v3504
    %v3528 = vadd.f32 %v3527, %v3509
    %v3529 = vadd.f32 %v3528, %v3512
    %v3530 = vrot.slane %v3529, 4
    %v3531 = vadd.f32 %v3529, %v3530
    %v3532 = vrot.slane %v3531, 2
    %v3533 = vadd.f32 %v3531, %v3532
    %v3534 = vrot.slane %v3533, 1
    %v3535 = vadd.f32 %v3533, %v3534
    %v3536 = vmul.f32 %v3535, %v2947
    %v3537 = vsub.f32 %v3453, %v3536
    %v3538 = vsub.f32 %v3456, %v3536
    %v3539 = vsub.f32 %v3461, %v3536
    %v3540 = vsub.f32 %v3464, %v3536
    %v3541 = vsub.f32 %v3469, %v3536
    %v3542 = vsub.f32 %v3472, %v3536
    %v3543 = vsub.f32 %v3477, %v3536
    %v3544 = vsub.f32 %v3480, %v3536
    %v3545 = vsub.f32 %v3485, %v3536
    %v3546 = vsub.f32 %v3488, %v3536
    %v3547 = vsub.f32 %v3493, %v3536
    %v3548 = vsub.f32 %v3496, %v3536
    %v3549 = vsub.f32 %v3501, %v3536
    %v3550 = vsub.f32 %v3504, %v3536
    %v3551 = vsub.f32 %v3509, %v3536
    %v3552 = vsub.f32 %v3512, %v3536
    %v3553 = vmul.f32 %v3537, %v3537
    %v3554 = vmul.f32 %v3538, %v3538
    %v3555 = vmul.f32 %v3539, %v3539
    %v3556 = vmul.f32 %v3540, %v3540
    %v3557 = vmul.f32 %v3541, %v3541
    %v3558 = vmul.f32 %v3542, %v3542
    %v3559 = vmul.f32 %v3543, %v3543
    %v3560 = vmul.f32 %v3544, %v3544
    %v3561 = vmul.f32 %v3545, %v3545
    %v3562 = vmul.f32 %v3546, %v3546
    %v3563 = vmul.f32 %v3547, %v3547
    %v3564 = vmul.f32 %v3548, %v3548
    %v3565 = vmul.f32 %v3549, %v3549
    %v3566 = vmul.f32 %v3550, %v3550
    %v3567 = vmul.f32 %v3551, %v3551
    %v3568 = vmul.f32 %v3552, %v3552
    %v3569 = vadd.f32 %v3553, %v3554
    %v3570 = vadd.f32 %v3569, %v3555
    %v3571 = vadd.f32 %v3570, %v3556
    %v3572 = vadd.f32 %v3571, %v3557
    %v3573 = vadd.f32 %v3572, %v3558
    %v3574 = vadd.f32 %v3573, %v3559
    %v3575 = vadd.f32 %v3574, %v3560
    %v3576 = vadd.f32 %v3575, %v3561
    %v3577 = vadd.f32 %v3576, %v3562
    %v3578 = vadd.f32 %v3577, %v3563
    %v3579 = vadd.f32 %v3578, %v3564
    %v3580 = vadd.f32 %v3579, %v3565
    %v3581 = vadd.f32 %v3580, %v3566
    %v3582 = vadd.f32 %v3581, %v3567
    %v3583 = vadd.f32 %v3582, %v3568
    %v3584 = vrot.slane %v3583, 4
    %v3585 = vadd.f32 %v3583, %v3584
    %v3586 = vrot.slane %v3585, 2
    %v3587 = vadd.f32 %v3585, %v3586
    %v3588 = vrot.slane %v3587, 1
    %v3589 = vadd.f32 %v3587, %v3588
    %v3590 = vmul.f32 %v3589, %v2947
    %v3591 = vld [vmem:[%s11] sm:$0x1]
    %v3592 = vadd.f32 %v3590, 1e-05
    %v3593 = vrsqrt.pop %v3592
    %v3594 = vmul.f32 %v3591, %v3593
    %v3596 = vlaneseq
    %v3597 = vshrl.u32 %v3596, 7
    %v3598 = vsub.s32 0, %v3597
    %v3599 = vrot.slane %v3594, %v3598
    %v3601 = vmul.f32 %v3537, %v3599
    %v3602 = vmul.f32 %v3538, %v3599
    %v3603 = vmul.f32 %v3539, %v3599
    %v3604 = vmul.f32 %v3540, %v3599
    %v3605 = vmul.f32 %v3541, %v3599
    %v3606 = vmul.f32 %v3542, %v3599
    %v3607 = vmul.f32 %v3543, %v3599
    %v3608 = vmul.f32 %v3544, %v3599
    %v3609 = vmul.f32 %v3545, %v3599
    %v3610 = vmul.f32 %v3546, %v3599
    %v3611 = vmul.f32 %v3547, %v3599
    %v3612 = vmul.f32 %v3548, %v3599
    %v3613 = vmul.f32 %v3549, %v3599
    %v3614 = vmul.f32 %v3550, %v3599
    %v3615 = vmul.f32 %v3551, %v3599
    %v3616 = vmul.f32 %v3552, %v3599
    %v3617 = vld [vmem:[%s12] sm:$0x1]
    %v3619 = vlaneseq
    %v3620 = vshrl.u32 %v3619, 7
    %v3621 = vsub.s32 0, %v3620
    %v3622 = vrot.slane %v3617, %v3621
    %v3624 = vadd.f32 %v3601, %v3622
    %v3625 = vadd.f32 %v3602, %v3622
    %v3626 = vadd.f32 %v3603, %v3622
    %v3627 = vadd.f32 %v3604, %v3622
    %v3628 = vadd.f32 %v3605, %v3622
    %v3629 = vadd.f32 %v3606, %v3622
    %v3630 = vadd.f32 %v3607, %v3622
    %v3631 = vadd.f32 %v3608, %v3622
    %v3632 = vadd.f32 %v3609, %v3622
    %v3633 = vadd.f32 %v3610, %v3622
    %v3634 = vadd.f32 %v3611, %v3622
    %v3635 = vadd.f32 %v3612, %v3622
    %v3636 = vadd.f32 %v3613, %v3622
    %v3637 = vadd.f32 %v3614, %v3622
    %v3638 = vadd.f32 %v3615, %v3622
    %v3639 = vadd.f32 %v3616, %v3622
    %v3640 = vadd.f32 %v3338, %v3624
    %v3641 = vadd.f32 %v3339, %v3625
    %v3642 = vadd.f32 %v3340, %v3626
    %v3643 = vadd.f32 %v3341, %v3627
    %v3644 = vadd.f32 %v3342, %v3628
    %v3645 = vadd.f32 %v3343, %v3629
    %v3646 = vadd.f32 %v3344, %v3630
    %v3647 = vadd.f32 %v3345, %v3631
    %v3648 = vadd.f32 %v3346, %v3632
    %v3649 = vadd.f32 %v3347, %v3633
    %v3650 = vadd.f32 %v3348, %v3634
    %v3651 = vadd.f32 %v3349, %v3635
    %v3652 = vadd.f32 %v3350, %v3636
    %v3653 = vadd.f32 %v3351, %v3637
    %v3654 = vadd.f32 %v3352, %v3638
    %v3655 = vadd.f32 %v3353, %v3639
    %v3656 = vmax.f32 %v3640, 0.0
    %v3657 = vmax.f32 %v3641, 0.0
    %v3658 = vmax.f32 %v3642, 0.0
    %v3659 = vmax.f32 %v3643, 0.0
    %v3660 = vmax.f32 %v3644, 0.0
    %v3661 = vmax.f32 %v3645, 0.0
    %v3662 = vmax.f32 %v3646, 0.0
    %v3663 = vmax.f32 %v3647, 0.0
    %v3664 = vmax.f32 %v3648, 0.0
    %v3665 = vmax.f32 %v3649, 0.0
    %v3666 = vmax.f32 %v3650, 0.0
    %v3667 = vmax.f32 %v3651, 0.0
    %v3668 = vmax.f32 %v3652, 0.0
    %v3669 = vmax.f32 %v3653, 0.0
    %v3670 = vmax.f32 %v3654, 0.0
    %v3671 = vmax.f32 %v3655, 0.0
    %3672 = vst [vmem:[#allocation8] sm:$0xff] %v3640
    %3673 = vst [vmem:[#allocation8 + $0x8] sm:$0xff] %v3641
    %3674 = vst [vmem:[#allocation8 + $0x10] sm:$0xff] %v3642
    %3675 = vst [vmem:[#allocation8 + $0x18] sm:$0xff] %v3643
    %3676 = vst [vmem:[#allocation8 + $0x20] sm:$0xff] %v3644
    %3677 = vst [vmem:[#allocation8 + $0x28] sm:$0xff] %v3645
    %3678 = vst [vmem:[#allocation8 + $0x30] sm:$0xff] %v3646
    %3679 = vst [vmem:[#allocation8 + $0x38] sm:$0xff] %v3647
    %3680 = vst [vmem:[#allocation8 + $0x40] sm:$0xff] %v3648
    %3681 = vst [vmem:[#allocation8 + $0x48] sm:$0xff] %v3649
    %3682 = vst [vmem:[#allocation8 + $0x50] sm:$0xff] %v3650
    %3683 = vst [vmem:[#allocation8 + $0x58] sm:$0xff] %v3651
    %3684 = vst [vmem:[#allocation8 + $0x60] sm:$0xff] %v3652
    %3685 = vst [vmem:[#allocation8 + $0x68] sm:$0xff] %v3653
    %3686 = vst [vmem:[#allocation8 + $0x70] sm:$0xff] %v3654
    %3687 = vst [vmem:[#allocation8 + $0x78] sm:$0xff] %v3655
    %3688 = vst [vmem:[#allocation7] sm:$0xff] %v3656
    %3689 = vst [vmem:[#allocation7 + $0x8] sm:$0xff] %v3657
    %3690 = vst [vmem:[#allocation7 + $0x10] sm:$0xff] %v3658
    %3691 = vst [vmem:[#allocation7 + $0x18] sm:$0xff] %v3659
    %3692 = vst [vmem:[#allocation7 + $0x20] sm:$0xff] %v3660
    %3693 = vst [vmem:[#allocation7 + $0x28] sm:$0xff] %v3661
    %3694 = vst [vmem:[#allocation7 + $0x30] sm:$0xff] %v3662
    %3695 = vst [vmem:[#allocation7 + $0x38] sm:$0xff] %v3663
    %3696 = vst [vmem:[#allocation7 + $0x40] sm:$0xff] %v3664
    %3697 = vst [vmem:[#allocation7 + $0x48] sm:$0xff] %v3665
    %3698 = vst [vmem:[#allocation7 + $0x50] sm:$0xff] %v3666
    %3699 = vst [vmem:[#allocation7 + $0x58] sm:$0xff] %v3667
    %3700 = vst [vmem:[#allocation7 + $0x60] sm:$0xff] %v3668
    %3701 = vst [vmem:[#allocation7 + $0x68] sm:$0xff] %v3669
    %3702 = vst [vmem:[#allocation7 + $0x70] sm:$0xff] %v3670
    %3703 = vst [vmem:[#allocation7 + $0x78] sm:$0xff] %v3671
    // Predicated region
    $region62: #{tpu_custom_call.1} parent=1 // pred_check
      _
    $region63: #{tpu_custom_call.1} parent=1 // pred_check_branch
      %3705 = sbr.rel (0) target = $region65
    $region64: #{tpu_custom_call.1} parent=1 // pred_region
      %s3707 = ssub.s32 2048, 2048
      %3708 = vsyncadd [#allocation4], %s3707
      %s3709 = sshll.u32 [#allocation7], 4
      %s3710 = int_to_ptr.vmem [resolvable:$true] %s3709
      %3715 = dma.vmem_to_hbm [thread:$0]  %s3710, 2048, %s13, [#allocation4], 128, 128, 8
    $region65: #{tpu_custom_call.1} parent=1 // pred_fallthru
      _
    // Predicated region
    $region66: #{tpu_custom_call.1} parent=1 // pred_check
      _
    $region67: #{tpu_custom_call.1} parent=1 // pred_check_branch
      %3717 = sbr.rel (0) target = $region69
    $region68: #{tpu_custom_call.1} parent=1 // pred_region
      %s3719 = ssub.s32 2048, 2048
      %3720 = vsyncadd [#allocation9], %s3719
      %s3721 = sshll.u32 [#allocation8], 4
      %s3722 = int_to_ptr.vmem [resolvable:$true] %s3721
      %3727 = dma.vmem_to_hbm [thread:$0]  %s3722, 2048, %s14, [#allocation9], 128, 128, 8
    $region69: #{tpu_custom_call.1} parent=1 // pred_fallthru
      _
    // Predicated region
    $region70: #{tpu_custom_call.1} parent=1 // pred_check
      _
    $region71: #{tpu_custom_call.1} parent=1 // pred_check_branch
      %3729 = sbr.rel (0) target = $region73
    $region72: #{tpu_custom_call.1} parent=1 // pred_region
      %3730 = dma.done [#allocation4], 2048
    $region73: #{tpu_custom_call.1} parent=1 // pred_fallthru
      _
    // Predicated region
    $region74: #{tpu_custom_call.1} parent=1 // pred_check
      _
    $region75: #{tpu_custom_call.1} parent=1 // pred_check_branch
      %3732 = sbr.rel (0) target = $region77
    $region76: #{tpu_custom_call.1} parent=1 // pred_region
      %3733 = dma.done [#allocation9], 2048
    $region77: #{tpu_custom_call.1} parent=1 // pred_fallthru
      _
    %3734 = vsyncpa [#allocation3], 1
    %3735 = vsyncpa [#allocation6], 1
    %3736 = vsyncpa [#allocation4], 1
    %3737 = vsyncpa [#allocation9], 1

</llo_original>
